<compile_context>
chip_gen: v6e
topology: v6e:2x2x1
jax: 0.10.0
libtpu: 0.0.40
codegen_flags: <defaults>
</compile_context>

<pallas_src>
import functools

import jax
import jax.numpy as jnp
from jax.experimental import pallas as pl
from jax.experimental.pallas import tpu as pltpu


# ----------------------------- Pallas kernel ------------------------------ #
def _mlora_kernel(K, th, Wo, C_in, C_out, num_E,
                  x_ref, q_ref, wconv_ref, bias_ref, g1_ref, g2_ref,
                  bn1s_ref, bn1b_ref, bn2s_ref, bn2b_ref, out_ref):
    rows = th * Wo
    C_fused = (1 + num_E) * C_out
    t = pl.program_id(1)
    h0 = t * th                     # top padded-input row of this output-row tile

    # Fused conv: base + all experts share the same input rows, so a single lane-dense
    # matmul per kernel tap fills the whole (rows, (1+num_E)*C_out) slab.
    acc = jnp.zeros((rows, C_fused), jnp.float32)
    for kh in range(K):
        for kw in range(K):
            xs = x_ref[0, pl.ds(h0 + kh, th), kw:kw + Wo, :]        # (th, Wo, C_in) bf16
            acc += jnp.dot(xs.reshape(rows, C_in), wconv_ref[kh * K + kw],
                           preferred_element_type=jnp.float32)
    acc += bias_ref[...]            # fused bias row: [bias | 2*bias | ... | 2*bias]

    # Batched gate MLP on the query rows (all experts in two matmuls).
    q = q_ref[0].reshape(rows, C_out)                                # bf16
    h = jnp.dot(q, g1_ref[...], preferred_element_type=jnp.float32)
    h = jnp.maximum(h * bn1s_ref[...] + bn1b_ref[...], 0.0)
    h = jnp.dot(h.astype(g2_ref.dtype), g2_ref[...],
                preferred_element_type=jnp.float32)
    gate = jax.nn.sigmoid(h * bn2s_ref[...] + bn2b_ref[...])         # (rows, num_E*C_out)

    out = acc[:, :C_out]
    for i in range(num_E):
        out = out + gate[:, i * C_out:(i + 1) * C_out] \
                  * acc[:, (i + 1) * C_out:(i + 2) * C_out]
    out_ref[0] = out.reshape(th, Wo, C_out).astype(out_ref.dtype)


# ------------------------------- glue (JAX) -------------------------------- #
def mlora_conv2d_forward(x, query, params, *, K, pad, scaling, th=8,
                         compute_dtype=jnp.bfloat16):
    """x, query: NCHW float32.  Returns NCHW float32."""
    N, C_in, H, W = x.shape
    C_out = params["w_base"].shape[0]
    num_E = params["lora_A"].shape[0]
    Ho = H + 2 * pad - K + 1
    Wo = W + 2 * pad - K + 1
    Hp, Wp = H + 2 * pad, W + 2 * pad
    C_fused = (1 + num_E) * C_out
    EC = num_E * C_out
    assert query.shape == (N, C_out, Ho, Wo), query.shape
    assert Wo % 8 == 0, "kernel assumes the conv output width is a multiple of 8"
    if Ho % th != 0:
        th = Ho                      # fall back to one row tile per image
    T = Ho // th

    # activations: NCHW -> NHWC (channels on the lane axis), zero-pad spatially, bf16
    xp = jnp.pad(x.transpose(0, 2, 3, 1),
                 ((0, 0), (pad, pad), (pad, pad), (0, 0))).astype(compute_dtype)
    q = query.transpose(0, 2, 3, 1).astype(compute_dtype)             # (N, Ho, Wo, C_out)

    # fused conv weights: columns = [base | 2*scaling*expert_0 | ... ], one matrix per tap
    w_lora = jnp.einsum("eij,ejk->eik", params["lora_B"], params["lora_A"])
    w_lora = w_lora.reshape(num_E, C_out, C_in, K, K) * (2.0 * scaling)   # "2*" folded
    w_all = jnp.concatenate([params["w_base"][None], w_lora], axis=0)     # (1+E,O,I,K,K)
    wconv = (w_all.transpose(3, 4, 2, 0, 1)                               # (K,K,I,1+E,O)
             .reshape(K * K, C_in, C_fused).astype(compute_dtype))
    bias_f = jnp.concatenate(
        [params["bias"], jnp.tile(2.0 * params["bias"], num_E)]
    ).reshape(1, C_fused).astype(jnp.float32)

    # batched gate weights (second 1x1 conv as a block-diagonal matrix)
    W1 = params["gate_w1"][:, :, :, 0, 0]                              # (E, out, in)
    W2 = params["gate_w2"][:, :, :, 0, 0]
    g1 = W1.transpose(2, 0, 1).reshape(C_out, EC).astype(compute_dtype)
    g2 = jnp.zeros((EC, EC), jnp.float32)
    for i in range(num_E):
        g2 = g2.at[i * C_out:(i + 1) * C_out, i * C_out:(i + 1) * C_out].set(W2[i].T)
    g2 = g2.astype(compute_dtype)

    eps = 1e-5
    def fold_bn(gamma, beta, mean, var):
        s = gamma / jnp.sqrt(var + eps)
        b = beta - mean * s
        return (s.reshape(1, EC).astype(jnp.float32),
                b.reshape(1, EC).astype(jnp.float32))
    bn1s, bn1b = fold_bn(params["bn1_gamma"], params["bn1_beta"],
                         params["bn1_mean"], params["bn1_var"])
    bn2s, bn2b = fold_bn(params["bn2_gamma"], params["bn2_beta"],
                         params["bn2_mean"], params["bn2_var"])

    kernel = functools.partial(_mlora_kernel, K, th, Wo, C_in, C_out, num_E)

    def const_spec(a):               # grid-invariant operand: DMA'd once, stays resident
        return pl.BlockSpec(a.shape, lambda n, t, nd=a.ndim: (0,) * nd)

    in_specs = [
        # full padded image; index_map ignores t -> resident across row tiles of image n
        pl.BlockSpec((1, Hp, Wp, C_in), lambda n, t: (n, 0, 0, 0)),
        pl.BlockSpec((1, th, Wo, C_out), lambda n, t: (n, t, 0, 0)),
        const_spec(wconv), const_spec(bias_f), const_spec(g1), const_spec(g2),
        const_spec(bn1s), const_spec(bn1b), const_spec(bn2s), const_spec(bn2b),
    ]
    out_specs = pl.BlockSpec((1, th, Wo, C_out), lambda n, t: (n, t, 0, 0))

    bpe = jnp.dtype(compute_dtype).itemsize
    tile_bytes = Hp * Wp * C_in * bpe + th * Wo * C_out * bpe + th * Wo * C_out * 4
    const_bytes = (wconv.size + g1.size + g2.size) * bpe + (bias_f.size + 4 * EC) * 4
    vmem_limit = int(min(32 * 2 ** 20,                 # v7x: 64 MiB physical, 32 scoped
                         max(16 * 2 ** 20, 6 * tile_bytes + 4 * const_bytes)))

    out = pl.pallas_call(
        kernel,
        out_shape=jax.ShapeDtypeStruct((N, Ho, Wo, C_out), jnp.float32),
        grid=(N, T),
        in_specs=in_specs,
        out_specs=out_specs,
        compiler_params=pltpu.CompilerParams(
            dimension_semantics=("parallel", "parallel"),
            vmem_limit_bytes=vmem_limit),
    )(xp, q, wconv, bias_f, g1, g2, bn1s, bn1b, bn2s, bn2b)

    return out.transpose(0, 3, 1, 2)                    # NHWC -> NCHW


# --------------------------- pure-JAX reference ---------------------------- #
def _conv2d_nchw(x, w, b, pad):
    out = jax.lax.conv_general_dilated(
        x, w, window_strides=(1, 1), padding=((pad, pad), (pad, pad)),
        dimension_numbers=("NCHW", "OIHW", "NCHW"))
    return out + b[None, :, None, None]


def mlora_reference(x, query, params, *, K, pad, scaling):
    eps = 1e-5
    C_out, C_in = params["w_base"].shape[:2]
    num_E = params["lora_A"].shape[0]

    def bn(h, gamma, beta, mean, var):
        h = (h - mean[None, :, None, None]) / jnp.sqrt(var[None, :, None, None] + eps)
        return h * gamma[None, :, None, None] + beta[None, :, None, None]

    res = _conv2d_nchw(x, params["w_base"], params["bias"], pad)
    for i in range(num_E):
        w_l = (params["lora_B"][i] @ params["lora_A"][i]).reshape(
            C_out, C_in, K, K) * scaling
        expert = _conv2d_nchw(x, w_l, params["bias"], pad)
        h = jnp.einsum("nchw,oc->nohw", query, params["gate_w1"][i, :, :, 0, 0])
        h = bn(h, params["bn1_gamma"][i], params["bn1_beta"][i],
               params["bn1_mean"][i], params["bn1_var"][i])
        h = jnp.maximum(h, 0.0)
        h = jnp.einsum("nchw,oc->nohw", h, params["gate_w2"][i, :, :, 0, 0])
        h = bn(h, params["bn2_gamma"][i], params["bn2_beta"][i],
               params["bn2_mean"][i], params["bn2_var"][i])
        gate = jax.nn.sigmoid(h)
        res = res + 2.0 * gate * expert
    return res


# ---------------------------------- main ----------------------------------- #
if __name__ == "__main__":
    key = jax.random.PRNGKey(0)
    N, C_in, H, W = 2, 16, 16, 16
    C_out, K, pad = 32, 3, 1
    r, lora_alpha, num_E = 4, 8, 3
    scaling = lora_alpha / r

    keys = jax.random.split(key, 16)
    x = jax.random.normal(keys[0], (N, C_in, H, W), jnp.float32)
    query = jax.random.normal(keys[1], (N, C_out, H, W), jnp.float32)

    # Deterministic synthetic parameters (shapes from the module's __init__).
    # NOTE: the PyTorch init zeros lora_B; random values are used here so the
    # expert path is actually exercised.
    params = dict(
        w_base=0.1 * jax.random.normal(keys[2], (C_out, C_in, K, K), jnp.float32),
        bias=0.1 * jax.random.normal(keys[3], (C_out,), jnp.float32),
        lora_A=0.1 * jax.random.normal(keys[4], (num_E, K * r, C_in * K), jnp.float32),
        lora_B=0.1 * jax.random.normal(keys[5], (num_E, C_out * K, K * r), jnp.float32),
        gate_w1=0.1 * jax.random.normal(keys[6], (num_E, C_out, C_out, 1, 1), jnp.float32),
        gate_w2=0.1 * jax.random.normal(keys[7], (num_E, C_out, C_out, 1, 1), jnp.float32),
        bn1_gamma=1.0 + 0.1 * jax.random.normal(keys[8], (num_E, C_out), jnp.float32),
        bn1_beta=0.1 * jax.random.normal(keys[9], (num_E, C_out), jnp.float32),
        bn1_mean=0.1 * jax.random.normal(keys[10], (num_E, C_out), jnp.float32),
        bn1_var=0.5 + jax.random.uniform(keys[11], (num_E, C_out), jnp.float32),
        bn2_gamma=1.0 + 0.1 * jax.random.normal(keys[12], (num_E, C_out), jnp.float32),
        bn2_beta=0.1 * jax.random.normal(keys[13], (num_E, C_out), jnp.float32),
        bn2_mean=0.1 * jax.random.normal(keys[14], (num_E, C_out), jnp.float32),
        bn2_var=0.5 + jax.random.uniform(keys[15], (num_E, C_out), jnp.float32),
    )

    out = mlora_conv2d_forward(x, query, params, K=K, pad=pad, scaling=scaling)
    out = jax.block_until_ready(out)

    ref = mlora_reference(x, query, params, K=K, pad=pad, scaling=scaling)
    assert out.shape == (N, C_out, H, W), out.shape
    max_err = float(jnp.max(jnp.abs(out - ref)))
    scale = float(jnp.max(jnp.abs(ref)))
    # bf16 inputs/weights with f32 accumulation vs. an all-f32 reference.
    assert max_err <= 2e-2 * scale + 2e-2, (max_err, scale)

    print("KERNEL_OK")
</pallas_src>

<mosaic_0001>
module attributes {stable_mosaic.version = 11 : i64} {
  func.func @_mlora_kernel(%arg0: i32, %arg1: i32, %arg2: memref<1x18x18x16xbf16, #tpu.memory_space<vmem>>, %arg3: memref<1x8x16x32xbf16, #tpu.memory_space<vmem>>, %arg4: memref<9x16x128xbf16, #tpu.memory_space<vmem>>, %arg5: memref<1x128xf32, #tpu.memory_space<vmem>>, %arg6: memref<32x96xbf16, #tpu.memory_space<vmem>>, %arg7: memref<96x96xbf16, #tpu.memory_space<vmem>>, %arg8: memref<1x96xf32, #tpu.memory_space<vmem>>, %arg9: memref<1x96xf32, #tpu.memory_space<vmem>>, %arg10: memref<1x96xf32, #tpu.memory_space<vmem>>, %arg11: memref<1x96xf32, #tpu.memory_space<vmem>>, %arg12: memref<1x8x16x32xf32, #tpu.memory_space<vmem>>) attributes {dimension_semantics = [#tpu.dimension_semantics<parallel>, #tpu.dimension_semantics<parallel>], iteration_bounds = array<i64: 2, 2>, scalar_prefetch = 0 : i64, scratch_operands = 0 : i64, tpu.core_type = #tpu.core_type<tc>, window_params = [{transform_indices = @transform_0, window_bounds = array<i64: 1, 18, 18, 16>}, {transform_indices = @transform_1, window_bounds = array<i64: 1, 8, 16, 32>}, {pipeline_mode = #tpu.pipeline_mode<synchronous>, transform_indices = @transform_2, window_bounds = array<i64: 9, 16, 128>}, {pipeline_mode = #tpu.pipeline_mode<synchronous>, transform_indices = @transform_3, window_bounds = array<i64: 1, 128>}, {pipeline_mode = #tpu.pipeline_mode<synchronous>, transform_indices = @transform_4, window_bounds = array<i64: 32, 96>}, {pipeline_mode = #tpu.pipeline_mode<synchronous>, transform_indices = @transform_5, window_bounds = array<i64: 96, 96>}, {pipeline_mode = #tpu.pipeline_mode<synchronous>, transform_indices = @transform_6, window_bounds = array<i64: 1, 96>}, {pipeline_mode = #tpu.pipeline_mode<synchronous>, transform_indices = @transform_7, window_bounds = array<i64: 1, 96>}, {pipeline_mode = #tpu.pipeline_mode<synchronous>, transform_indices = @transform_8, window_bounds = array<i64: 1, 96>}, {pipeline_mode = #tpu.pipeline_mode<synchronous>, transform_indices = @transform_9, window_bounds = array<i64: 1, 96>}, {transform_indices = @transform_10, window_bounds = array<i64: 1, 8, 16, 32>}]} {
    %c8_i32 = arith.constant 8 : i32
    %0 = arith.muli %arg1, %c8_i32 : i32
    %cst = arith.constant 0.000000e+00 : f32
    %1 = vector.broadcast %cst : f32 to vector<128x128xf32>
    %c0_i32 = arith.constant 0 : i32
    %2 = arith.addi %0, %c0_i32 : i32
    %c0 = arith.constant 0 : index
    %3 = arith.index_cast %2 : i32 to index
    %c0_0 = arith.constant 0 : index
    %c0_1 = arith.constant 0 : index
    %4 = vector.load %arg2[%c0, %3, %c0_0, %c0_1] : memref<1x18x18x16xbf16, #tpu.memory_space<vmem>>, vector<1x8x16x16xbf16>
    %5 = vector.shape_cast %4 : vector<1x8x16x16xbf16> to vector<8x16x16xbf16>
    %6 = vector.shape_cast %5 : vector<8x16x16xbf16> to vector<128x16xbf16>
    %c0_2 = arith.constant 0 : index
    %c0_3 = arith.constant 0 : index
    %c0_4 = arith.constant 0 : index
    %7 = vector.load %arg4[%c0_2, %c0_3, %c0_4] : memref<9x16x128xbf16, #tpu.memory_space<vmem>>, vector<1x16x128xbf16>
    %8 = vector.shape_cast %7 : vector<1x16x128xbf16> to vector<16x128xbf16>
    %cst_5 = arith.constant dense<0.000000e+00> : vector<128x128xf32>
    %9 = tpu.matmul %6, %8, %cst_5 {dimension_numbers = #tpu.dot_dimension_numbers<[1], [0], [0], [1], [0, 0, 1, 1], [], []>} : vector<128x16xbf16>, vector<16x128xbf16>, vector<128x128xf32> -> vector<128x128xf32>
    %10 = arith.addf %1, %9 : vector<128x128xf32>
    %c0_i32_6 = arith.constant 0 : i32
    %11 = arith.addi %0, %c0_i32_6 : i32
    %c0_7 = arith.constant 0 : index
    %12 = arith.index_cast %11 : i32 to index
    %c1 = arith.constant 1 : index
    %c0_8 = arith.constant 0 : index
    %13 = vector.load %arg2[%c0_7, %12, %c1, %c0_8] : memref<1x18x18x16xbf16, #tpu.memory_space<vmem>>, vector<1x8x16x16xbf16>
    %14 = vector.shape_cast %13 : vector<1x8x16x16xbf16> to vector<8x16x16xbf16>
    %15 = vector.shape_cast %14 : vector<8x16x16xbf16> to vector<128x16xbf16>
    %c1_9 = arith.constant 1 : index
    %c0_10 = arith.constant 0 : index
    %c0_11 = arith.constant 0 : index
    %16 = vector.load %arg4[%c1_9, %c0_10, %c0_11] : memref<9x16x128xbf16, #tpu.memory_space<vmem>>, vector<1x16x128xbf16>
    %17 = vector.shape_cast %16 : vector<1x16x128xbf16> to vector<16x128xbf16>
    %cst_12 = arith.constant dense<0.000000e+00> : vector<128x128xf32>
    %18 = tpu.matmul %15, %17, %cst_12 {dimension_numbers = #tpu.dot_dimension_numbers<[1], [0], [0], [1], [0, 0, 1, 1], [], []>} : vector<128x16xbf16>, vector<16x128xbf16>, vector<128x128xf32> -> vector<128x128xf32>
    %19 = arith.addf %10, %18 : vector<128x128xf32>
    %c0_i32_13 = arith.constant 0 : i32
    %20 = arith.addi %0, %c0_i32_13 : i32
    %c0_14 = arith.constant 0 : index
    %21 = arith.index_cast %20 : i32 to index
    %c2 = arith.constant 2 : index
    %c0_15 = arith.constant 0 : index
    %22 = vector.load %arg2[%c0_14, %21, %c2, %c0_15] : memref<1x18x18x16xbf16, #tpu.memory_space<vmem>>, vector<1x8x16x16xbf16>
    %23 = vector.shape_cast %22 : vector<1x8x16x16xbf16> to vector<8x16x16xbf16>
    %24 = vector.shape_cast %23 : vector<8x16x16xbf16> to vector<128x16xbf16>
    %c2_16 = arith.constant 2 : index
    %c0_17 = arith.constant 0 : index
    %c0_18 = arith.constant 0 : index
    %25 = vector.load %arg4[%c2_16, %c0_17, %c0_18] : memref<9x16x128xbf16, #tpu.memory_space<vmem>>, vector<1x16x128xbf16>
    %26 = vector.shape_cast %25 : vector<1x16x128xbf16> to vector<16x128xbf16>
    %cst_19 = arith.constant dense<0.000000e+00> : vector<128x128xf32>
    %27 = tpu.matmul %24, %26, %cst_19 {dimension_numbers = #tpu.dot_dimension_numbers<[1], [0], [0], [1], [0, 0, 1, 1], [], []>} : vector<128x16xbf16>, vector<16x128xbf16>, vector<128x128xf32> -> vector<128x128xf32>
    %28 = arith.addf %19, %27 : vector<128x128xf32>
    %c1_i32 = arith.constant 1 : i32
    %29 = arith.addi %0, %c1_i32 : i32
    %c0_20 = arith.constant 0 : index
    %30 = arith.index_cast %29 : i32 to index
    %c0_21 = arith.constant 0 : index
    %c0_22 = arith.constant 0 : index
    %31 = vector.load %arg2[%c0_20, %30, %c0_21, %c0_22] : memref<1x18x18x16xbf16, #tpu.memory_space<vmem>>, vector<1x8x16x16xbf16>
    %32 = vector.shape_cast %31 : vector<1x8x16x16xbf16> to vector<8x16x16xbf16>
    %33 = vector.shape_cast %32 : vector<8x16x16xbf16> to vector<128x16xbf16>
    %c3 = arith.constant 3 : index
    %c0_23 = arith.constant 0 : index
    %c0_24 = arith.constant 0 : index
    %34 = vector.load %arg4[%c3, %c0_23, %c0_24] : memref<9x16x128xbf16, #tpu.memory_space<vmem>>, vector<1x16x128xbf16>
    %35 = vector.shape_cast %34 : vector<1x16x128xbf16> to vector<16x128xbf16>
    %cst_25 = arith.constant dense<0.000000e+00> : vector<128x128xf32>
    %36 = tpu.matmul %33, %35, %cst_25 {dimension_numbers = #tpu.dot_dimension_numbers<[1], [0], [0], [1], [0, 0, 1, 1], [], []>} : vector<128x16xbf16>, vector<16x128xbf16>, vector<128x128xf32> -> vector<128x128xf32>
    %37 = arith.addf %28, %36 : vector<128x128xf32>
    %c1_i32_26 = arith.constant 1 : i32
    %38 = arith.addi %0, %c1_i32_26 : i32
    %c0_27 = arith.constant 0 : index
    %39 = arith.index_cast %38 : i32 to index
    %c1_28 = arith.constant 1 : index
    %c0_29 = arith.constant 0 : index
    %40 = vector.load %arg2[%c0_27, %39, %c1_28, %c0_29] : memref<1x18x18x16xbf16, #tpu.memory_space<vmem>>, vector<1x8x16x16xbf16>
    %41 = vector.shape_cast %40 : vector<1x8x16x16xbf16> to vector<8x16x16xbf16>
    %42 = vector.shape_cast %41 : vector<8x16x16xbf16> to vector<128x16xbf16>
    %c4 = arith.constant 4 : index
    %c0_30 = arith.constant 0 : index
    %c0_31 = arith.constant 0 : index
    %43 = vector.load %arg4[%c4, %c0_30, %c0_31] : memref<9x16x128xbf16, #tpu.memory_space<vmem>>, vector<1x16x128xbf16>
    %44 = vector.shape_cast %43 : vector<1x16x128xbf16> to vector<16x128xbf16>
    %cst_32 = arith.constant dense<0.000000e+00> : vector<128x128xf32>
    %45 = tpu.matmul %42, %44, %cst_32 {dimension_numbers = #tpu.dot_dimension_numbers<[1], [0], [0], [1], [0, 0, 1, 1], [], []>} : vector<128x16xbf16>, vector<16x128xbf16>, vector<128x128xf32> -> vector<128x128xf32>
    %46 = arith.addf %37, %45 : vector<128x128xf32>
    %c1_i32_33 = arith.constant 1 : i32
    %47 = arith.addi %0, %c1_i32_33 : i32
    %c0_34 = arith.constant 0 : index
    %48 = arith.index_cast %47 : i32 to index
    %c2_35 = arith.constant 2 : index
    %c0_36 = arith.constant 0 : index
    %49 = vector.load %arg2[%c0_34, %48, %c2_35, %c0_36] : memref<1x18x18x16xbf16, #tpu.memory_space<vmem>>, vector<1x8x16x16xbf16>
    %50 = vector.shape_cast %49 : vector<1x8x16x16xbf16> to vector<8x16x16xbf16>
    %51 = vector.shape_cast %50 : vector<8x16x16xbf16> to vector<128x16xbf16>
    %c5 = arith.constant 5 : index
    %c0_37 = arith.constant 0 : index
    %c0_38 = arith.constant 0 : index
    %52 = vector.load %arg4[%c5, %c0_37, %c0_38] : memref<9x16x128xbf16, #tpu.memory_space<vmem>>, vector<1x16x128xbf16>
    %53 = vector.shape_cast %52 : vector<1x16x128xbf16> to vector<16x128xbf16>
    %cst_39 = arith.constant dense<0.000000e+00> : vector<128x128xf32>
    %54 = tpu.matmul %51, %53, %cst_39 {dimension_numbers = #tpu.dot_dimension_numbers<[1], [0], [0], [1], [0, 0, 1, 1], [], []>} : vector<128x16xbf16>, vector<16x128xbf16>, vector<128x128xf32> -> vector<128x128xf32>
    %55 = arith.addf %46, %54 : vector<128x128xf32>
    %c2_i32 = arith.constant 2 : i32
    %56 = arith.addi %0, %c2_i32 : i32
    %c0_40 = arith.constant 0 : index
    %57 = arith.index_cast %56 : i32 to index
    %c0_41 = arith.constant 0 : index
    %c0_42 = arith.constant 0 : index
    %58 = vector.load %arg2[%c0_40, %57, %c0_41, %c0_42] : memref<1x18x18x16xbf16, #tpu.memory_space<vmem>>, vector<1x8x16x16xbf16>
    %59 = vector.shape_cast %58 : vector<1x8x16x16xbf16> to vector<8x16x16xbf16>
    %60 = vector.shape_cast %59 : vector<8x16x16xbf16> to vector<128x16xbf16>
    %c6 = arith.constant 6 : index
    %c0_43 = arith.constant 0 : index
    %c0_44 = arith.constant 0 : index
    %61 = vector.load %arg4[%c6, %c0_43, %c0_44] : memref<9x16x128xbf16, #tpu.memory_space<vmem>>, vector<1x16x128xbf16>
    %62 = vector.shape_cast %61 : vector<1x16x128xbf16> to vector<16x128xbf16>
    %cst_45 = arith.constant dense<0.000000e+00> : vector<128x128xf32>
    %63 = tpu.matmul %60, %62, %cst_45 {dimension_numbers = #tpu.dot_dimension_numbers<[1], [0], [0], [1], [0, 0, 1, 1], [], []>} : vector<128x16xbf16>, vector<16x128xbf16>, vector<128x128xf32> -> vector<128x128xf32>
    %64 = arith.addf %55, %63 : vector<128x128xf32>
    %c2_i32_46 = arith.constant 2 : i32
    %65 = arith.addi %0, %c2_i32_46 : i32
    %c0_47 = arith.constant 0 : index
    %66 = arith.index_cast %65 : i32 to index
    %c1_48 = arith.constant 1 : index
    %c0_49 = arith.constant 0 : index
    %67 = vector.load %arg2[%c0_47, %66, %c1_48, %c0_49] : memref<1x18x18x16xbf16, #tpu.memory_space<vmem>>, vector<1x8x16x16xbf16>
    %68 = vector.shape_cast %67 : vector<1x8x16x16xbf16> to vector<8x16x16xbf16>
    %69 = vector.shape_cast %68 : vector<8x16x16xbf16> to vector<128x16xbf16>
    %c7 = arith.constant 7 : index
    %c0_50 = arith.constant 0 : index
    %c0_51 = arith.constant 0 : index
    %70 = vector.load %arg4[%c7, %c0_50, %c0_51] : memref<9x16x128xbf16, #tpu.memory_space<vmem>>, vector<1x16x128xbf16>
    %71 = vector.shape_cast %70 : vector<1x16x128xbf16> to vector<16x128xbf16>
    %cst_52 = arith.constant dense<0.000000e+00> : vector<128x128xf32>
    %72 = tpu.matmul %69, %71, %cst_52 {dimension_numbers = #tpu.dot_dimension_numbers<[1], [0], [0], [1], [0, 0, 1, 1], [], []>} : vector<128x16xbf16>, vector<16x128xbf16>, vector<128x128xf32> -> vector<128x128xf32>
    %73 = arith.addf %64, %72 : vector<128x128xf32>
    %c2_i32_53 = arith.constant 2 : i32
    %74 = arith.addi %0, %c2_i32_53 : i32
    %c0_54 = arith.constant 0 : index
    %75 = arith.index_cast %74 : i32 to index
    %c2_55 = arith.constant 2 : index
    %c0_56 = arith.constant 0 : index
    %76 = vector.load %arg2[%c0_54, %75, %c2_55, %c0_56] : memref<1x18x18x16xbf16, #tpu.memory_space<vmem>>, vector<1x8x16x16xbf16>
    %77 = vector.shape_cast %76 : vector<1x8x16x16xbf16> to vector<8x16x16xbf16>
    %78 = vector.shape_cast %77 : vector<8x16x16xbf16> to vector<128x16xbf16>
    %c8 = arith.constant 8 : index
    %c0_57 = arith.constant 0 : index
    %c0_58 = arith.constant 0 : index
    %79 = vector.load %arg4[%c8, %c0_57, %c0_58] : memref<9x16x128xbf16, #tpu.memory_space<vmem>>, vector<1x16x128xbf16>
    %80 = vector.shape_cast %79 : vector<1x16x128xbf16> to vector<16x128xbf16>
    %cst_59 = arith.constant dense<0.000000e+00> : vector<128x128xf32>
    %81 = tpu.matmul %78, %80, %cst_59 {dimension_numbers = #tpu.dot_dimension_numbers<[1], [0], [0], [1], [0, 0, 1, 1], [], []>} : vector<128x16xbf16>, vector<16x128xbf16>, vector<128x128xf32> -> vector<128x128xf32>
    %82 = arith.addf %73, %81 : vector<128x128xf32>
    %c0_60 = arith.constant 0 : index
    %c0_61 = arith.constant 0 : index
    %83 = vector.load %arg5[%c0_60, %c0_61] : memref<1x128xf32, #tpu.memory_space<vmem>>, vector<1x128xf32>
    %84 = vector.broadcast %83 : vector<1x128xf32> to vector<128x128xf32>
    %85 = arith.addf %82, %84 : vector<128x128xf32>
    %c0_62 = arith.constant 0 : index
    %c0_63 = arith.constant 0 : index
    %c0_64 = arith.constant 0 : index
    %c0_65 = arith.constant 0 : index
    %86 = vector.load %arg3[%c0_62, %c0_63, %c0_64, %c0_65] : memref<1x8x16x32xbf16, #tpu.memory_space<vmem>>, vector<1x8x16x32xbf16>
    %87 = vector.shape_cast %86 : vector<1x8x16x32xbf16> to vector<8x16x32xbf16>
    %88 = vector.shape_cast %87 : vector<8x16x32xbf16> to vector<128x32xbf16>
    %c0_66 = arith.constant 0 : index
    %c0_67 = arith.constant 0 : index
    %89 = vector.load %arg6[%c0_66, %c0_67] : memref<32x96xbf16, #tpu.memory_space<vmem>>, vector<32x96xbf16>
    %cst_68 = arith.constant dense<0.000000e+00> : vector<128x96xf32>
    %90 = tpu.matmul %88, %89, %cst_68 {dimension_numbers = #tpu.dot_dimension_numbers<[1], [0], [0], [1], [0, 0, 1, 1], [], []>} : vector<128x32xbf16>, vector<32x96xbf16>, vector<128x96xf32> -> vector<128x96xf32>
    %c0_69 = arith.constant 0 : index
    %c0_70 = arith.constant 0 : index
    %91 = vector.load %arg8[%c0_69, %c0_70] : memref<1x96xf32, #tpu.memory_space<vmem>>, vector<1x96xf32>
    %92 = vector.broadcast %91 : vector<1x96xf32> to vector<128x96xf32>
    %93 = arith.mulf %90, %92 : vector<128x96xf32>
    %c0_71 = arith.constant 0 : index
    %c0_72 = arith.constant 0 : index
    %94 = vector.load %arg9[%c0_71, %c0_72] : memref<1x96xf32, #tpu.memory_space<vmem>>, vector<1x96xf32>
    %95 = vector.broadcast %94 : vector<1x96xf32> to vector<128x96xf32>
    %96 = arith.addf %93, %95 : vector<128x96xf32>
    %cst_73 = arith.constant 0.000000e+00 : f32
    %97 = vector.broadcast %cst_73 : f32 to vector<128x96xf32>
    %98 = arith.maximumf %96, %97 : vector<128x96xf32>
    %99 = arith.truncf %98 : vector<128x96xf32> to vector<128x96xbf16>
    %c0_74 = arith.constant 0 : index
    %c0_75 = arith.constant 0 : index
    %100 = vector.load %arg7[%c0_74, %c0_75] : memref<96x96xbf16, #tpu.memory_space<vmem>>, vector<96x96xbf16>
    %cst_76 = arith.constant dense<0.000000e+00> : vector<128x96xf32>
    %101 = tpu.matmul %99, %100, %cst_76 {dimension_numbers = #tpu.dot_dimension_numbers<[1], [0], [0], [1], [0, 0, 1, 1], [], []>} : vector<128x96xbf16>, vector<96x96xbf16>, vector<128x96xf32> -> vector<128x96xf32>
    %c0_77 = arith.constant 0 : index
    %c0_78 = arith.constant 0 : index
    %102 = vector.load %arg10[%c0_77, %c0_78] : memref<1x96xf32, #tpu.memory_space<vmem>>, vector<1x96xf32>
    %103 = vector.broadcast %102 : vector<1x96xf32> to vector<128x96xf32>
    %104 = arith.mulf %101, %103 : vector<128x96xf32>
    %c0_79 = arith.constant 0 : index
    %c0_80 = arith.constant 0 : index
    %105 = vector.load %arg11[%c0_79, %c0_80] : memref<1x96xf32, #tpu.memory_space<vmem>>, vector<1x96xf32>
    %106 = vector.broadcast %105 : vector<1x96xf32> to vector<128x96xf32>
    %107 = arith.addf %104, %106 : vector<128x96xf32>
    %108 = arith.negf %107 : vector<128x96xf32>
    %109 = math.exp %108 : vector<128x96xf32>
    %cst_81 = arith.constant 1.000000e+00 : f32
    %110 = vector.broadcast %cst_81 : f32 to vector<128x96xf32>
    %111 = arith.addf %110, %109 : vector<128x96xf32>
    %112 = arith.divf %110, %111 : vector<128x96xf32>
    %113 = vector.extract_strided_slice %85 {offsets = [0, 0], sizes = [128, 32], strides = [1, 1]} : vector<128x128xf32> to vector<128x32xf32>
    %114 = vector.extract_strided_slice %112 {offsets = [0, 0], sizes = [128, 32], strides = [1, 1]} : vector<128x96xf32> to vector<128x32xf32>
    %115 = vector.extract_strided_slice %85 {offsets = [0, 32], sizes = [128, 32], strides = [1, 1]} : vector<128x128xf32> to vector<128x32xf32>
    %116 = arith.mulf %114, %115 : vector<128x32xf32>
    %117 = arith.addf %113, %116 : vector<128x32xf32>
    %118 = vector.extract_strided_slice %112 {offsets = [0, 32], sizes = [128, 32], strides = [1, 1]} : vector<128x96xf32> to vector<128x32xf32>
    %119 = vector.extract_strided_slice %85 {offsets = [0, 64], sizes = [128, 32], strides = [1, 1]} : vector<128x128xf32> to vector<128x32xf32>
    %120 = arith.mulf %118, %119 : vector<128x32xf32>
    %121 = arith.addf %117, %120 : vector<128x32xf32>
    %122 = vector.extract_strided_slice %112 {offsets = [0, 64], sizes = [128, 32], strides = [1, 1]} : vector<128x96xf32> to vector<128x32xf32>
    %123 = vector.extract_strided_slice %85 {offsets = [0, 96], sizes = [128, 32], strides = [1, 1]} : vector<128x128xf32> to vector<128x32xf32>
    %124 = arith.mulf %122, %123 : vector<128x32xf32>
    %125 = arith.addf %121, %124 : vector<128x32xf32>
    %126 = vector.shape_cast %125 : vector<128x32xf32> to vector<8x16x32xf32>
    %c0_82 = arith.constant 0 : index
    %c0_83 = arith.constant 0 : index
    %c0_84 = arith.constant 0 : index
    %c0_85 = arith.constant 0 : index
    %127 = vector.load %arg12[%c0_82, %c0_83, %c0_84, %c0_85] : memref<1x8x16x32xf32, #tpu.memory_space<vmem>>, vector<1x8x16x32xf32>
    %128 = vector.shape_cast %127 : vector<1x8x16x32xf32> to vector<8x16x32xf32>
    %129 = vector.shape_cast %126 : vector<8x16x32xf32> to vector<1x8x16x32xf32>
    tpu.vector_store %arg12[%c0_82, %c0_83, %c0_84, %c0_85], %129 {strides = array<i32>} : memref<1x8x16x32xf32, #tpu.memory_space<vmem>>, vector<1x8x16x32xf32>,
    return
  }
  func.func @transform_0(%arg0: i32, %arg1: i32) -> (i32, i32, i32, i32) {
    %c0_i32 = arith.constant 0 : i32
    %c0_i32_0 = arith.constant 0 : i32
    %c0_i32_1 = arith.constant 0 : i32
    %c0_i32_2 = arith.constant 0 : i32
    return %arg0, %c0_i32, %c0_i32_0, %c0_i32_1 : i32, i32, i32, i32
  }
  func.func @transform_1(%arg0: i32, %arg1: i32) -> (i32, i32, i32, i32) {
    %c0_i32 = arith.constant 0 : i32
    %c0_i32_0 = arith.constant 0 : i32
    %c0_i32_1 = arith.constant 0 : i32
    return %arg0, %arg1, %c0_i32, %c0_i32_0 : i32, i32, i32, i32
  }
  func.func @transform_2(%arg0: i32, %arg1: i32) -> (i32, i32, i32) {
    %c0_i32 = arith.constant 0 : i32
    %c0_i32_0 = arith.constant 0 : i32
    %c0_i32_1 = arith.constant 0 : i32
    %c0_i32_2 = arith.constant 0 : i32
    return %c0_i32, %c0_i32_0, %c0_i32_1 : i32, i32, i32
  }
  func.func @transform_3(%arg0: i32, %arg1: i32) -> (i32, i32) {
    %c0_i32 = arith.constant 0 : i32
    %c0_i32_0 = arith.constant 0 : i32
    %c0_i32_1 = arith.constant 0 : i32
    return %c0_i32, %c0_i32_0 : i32, i32
  }
  func.func @transform_4(%arg0: i32, %arg1: i32) -> (i32, i32) {
    %c0_i32 = arith.constant 0 : i32
    %c0_i32_0 = arith.constant 0 : i32
    %c0_i32_1 = arith.constant 0 : i32
    return %c0_i32, %c0_i32_0 : i32, i32
  }
  func.func @transform_5(%arg0: i32, %arg1: i32) -> (i32, i32) {
    %c0_i32 = arith.constant 0 : i32
    %c0_i32_0 = arith.constant 0 : i32
    %c0_i32_1 = arith.constant 0 : i32
    return %c0_i32, %c0_i32_0 : i32, i32
  }
  func.func @transform_6(%arg0: i32, %arg1: i32) -> (i32, i32) {
    %c0_i32 = arith.constant 0 : i32
    %c0_i32_0 = arith.constant 0 : i32
    %c0_i32_1 = arith.constant 0 : i32
    return %c0_i32, %c0_i32_0 : i32, i32
  }
  func.func @transform_7(%arg0: i32, %arg1: i32) -> (i32, i32) {
    %c0_i32 = arith.constant 0 : i32
    %c0_i32_0 = arith.constant 0 : i32
    %c0_i32_1 = arith.constant 0 : i32
    return %c0_i32, %c0_i32_0 : i32, i32
  }
  func.func @transform_8(%arg0: i32, %arg1: i32) -> (i32, i32) {
    %c0_i32 = arith.constant 0 : i32
    %c0_i32_0 = arith.constant 0 : i32
    %c0_i32_1 = arith.constant 0 : i32
    return %c0_i32, %c0_i32_0 : i32, i32
  }
  func.func @transform_9(%arg0: i32, %arg1: i32) -> (i32, i32) {
    %c0_i32 = arith.constant 0 : i32
    %c0_i32_0 = arith.constant 0 : i32
    %c0_i32_1 = arith.constant 0 : i32
    return %c0_i32, %c0_i32_0 : i32, i32
  }
  func.func @transform_10(%arg0: i32, %arg1: i32) -> (i32, i32, i32, i32) {
    %c0_i32 = arith.constant 0 : i32
    %c0_i32_0 = arith.constant 0 : i32
    %c0_i32_1 = arith.constant 0 : i32
    return %arg0, %arg1, %c0_i32, %c0_i32_0 : i32, i32, i32, i32
  }
}

</mosaic_0001>

<llo_original>
// kernel: tpu_custom_call.1
$region0: #{tpu_custom_call.1}
  #allocation0 [shape = 'u32[]', space=smem, size = 0x4, offset = 0x4, fixed_abs, tag = 'smem constant byte address 0x4 - core index']
  #allocation1 [shape = 'u32[144,128]{1,0:T(1,128)}', space=vmem, size = 0x12000, scoped, tag = 'internal scratch']
  %s0 = inlined_call_operand.vmem [shape: bf16[2,18,18,16], index: 0, kind: input, shape index: {}]
  %s1 = inlined_call_operand.vmem [shape: bf16[2,16,16,32], index: 1, kind: input, shape index: {}]
  %s2 = inlined_call_operand.vmem [shape: bf16[9,16,128], index: 2, kind: input, shape index: {}]
  %s3 = inlined_call_operand.vmem [shape: f32[1,128], index: 3, kind: input, shape index: {}]
  %s4 = inlined_call_operand.vmem [shape: bf16[32,96], index: 4, kind: input, shape index: {}]
  %s5 = inlined_call_operand.vmem [shape: bf16[96,96], index: 5, kind: input, shape index: {}]
  %s6 = inlined_call_operand.vmem [shape: f32[1,96], index: 6, kind: input, shape index: {}]
  %s7 = inlined_call_operand.vmem [shape: f32[1,96], index: 7, kind: input, shape index: {}]
  %s8 = inlined_call_operand.vmem [shape: f32[1,96], index: 8, kind: input, shape index: {}]
  %s9 = inlined_call_operand.vmem [shape: f32[1,96], index: 9, kind: input, shape index: {}]
  %s10 = inlined_call_operand.hbm [shape: f32[2,16,16,32], index: 10, kind: output, shape index: {}]
  %s11 = sld [smem:[#allocation0]]
  $region73: #{tpu_custom_call.1} parent=0
    _
  %s13 = ssub.s32 1, %s11
  %s14 = scalar_select 0, %s13, %s11
  $region1: #{tpu_custom_call.1} parent=0
    #allocation2 [shape = 'u8[131072]{0}', space=vmem, size = 0x20000, scoped, tag = 'output window, operand 0']
    #allocation3 [shape = 's32[2]{0}', space=sflag, size = 0x8, scoped, tag = 'scoped memory for tpu_custom_call.1']
    %15 = vsyncpa [#allocation3], 0
    %s16 = scalar_lea.sflag [#allocation3], 1
    %17 = vsyncpa %s16, 0
    loop: start=0, step=1, limit=6
    $region2: #{tpu_custom_call.1} parent=1 // loop_pre_header
      _
    $region3: #{tpu_custom_call.1} parent=1 // loop_header
      %s19 = sphi 0, %s23
      %p20 = scmp.ge.s32.totalorder %s19, 6
      %s26 = sphi 0, %s38
      %s27 = sphi 0, %s34
      %s28 = sphi 0, %s26
      %s29 = sphi 0, %s27
      %s30 = sphi 0, %s28
      %s31 = sphi 0, %s29
      %s41 = sphi 0, %s43
      %s44 = sphi 0, %s41
      %s45 = sphi 0, %s44
      %s61 = sphi 0, %s45
      %s69 = sphi 0, %s71
      %s72 = sphi 0, %s69
      %s73 = sphi 0, %s72
      %s89 = sphi 0, %s73
      %s93 = sphi 0, %s93
      %s95 = sphi 0, %s93
      %s96 = sphi 0, %s95
      %s110 = sphi 0, %s96
      %s114 = sphi 0, %s114
      %s116 = sphi 0, %s114
      %s117 = sphi 0, %s116
      %s131 = sphi 0, %s117
      %s135 = sphi 0, %s135
      %s137 = sphi 0, %s135
      %s138 = sphi 0, %s137
      %s152 = sphi 0, %s138
      %s156 = sphi 0, %s156
      %s158 = sphi 0, %s156
      %s159 = sphi 0, %s158
      %s173 = sphi 0, %s159
      %s177 = sphi 0, %s177
      %s179 = sphi 0, %s177
      %s180 = sphi 0, %s179
      %s194 = sphi 0, %s180
      %s198 = sphi 0, %s198
      %s200 = sphi 0, %s198
      %s201 = sphi 0, %s200
      %s215 = sphi 0, %s201
      %s219 = sphi 0, %s219
      %s221 = sphi 0, %s219
      %s222 = sphi 0, %s221
      %s236 = sphi 0, %s222
      %s240 = sphi 0, %s240
      %s242 = sphi 0, %s240
      %s243 = sphi 0, %s242
      %s257 = sphi 0, %s243
      %s265 = sphi 0, %s267
      %s268 = sphi 0, %s265
      %s269 = sphi 0, %s268
      %s285 = sphi 0, %s269
    $region4: #{tpu_custom_call.1} parent=1 // loop_header_branch
      %22 = sbr.rel (%p20) target = $region8
    $region5: #{tpu_custom_call.1} parent=1 // loop_body
      %s24 = ssub.s32 %s19, 1
      %s25 = ssub.s32 %s19, 2
      %s32 = sadd.s32 1, %s27
      %p33 = scmp.ge.s32.totalorder %s32, 2
      %s34 = scalar_select %p33, 0, %s32
      %s35 = sadd.s32 1, %s26
      %s36 = scalar_select %p33, %s35, %s26
      %p37 = scmp.ge.s32.totalorder %s36, 2
      %s38 = scalar_select %p37, 0, %s36
      %s39 = ssub.s32 %s26, %s38
      %p40 = scmp.eq.s32.totalorder %s39, 0
      %s42 = sadd.s32 %s41, 1
      %s43 = scalar_select %p40, %s41, %s42
      %p46 = pneg %p40
      %p47 = scmp.eq.s32.totalorder %s19, 3
      %p48 = por %p46, %p47
      %p49 = scmp.ne.s32.totalorder %s41, %s44
      %p50 = scmp.eq.s32.totalorder %s19, 0
      %p51 = por %p49, %p50
      %p52 = scmp.ne.s32.totalorder %s41, %s44
      %p53 = scmp.eq.s32.totalorder %s24, 3
      %p54 = por %p52, %p53
      %p55 = scmp.ne.s32.totalorder %s44, %s45
      %p56 = scmp.eq.s32.totalorder %s24, 0
      %p57 = por %p55, %p56
      %p58 = scmp.ne.s32.totalorder %s44, %s45
      %p59 = scmp.eq.s32.totalorder %s25, 3
      %p60 = por %p58, %p59
      %p62 = scmp.ne.s32.totalorder %s45, %s61
      %p63 = scmp.eq.s32.totalorder %s25, 0
      %p64 = por %p62, %p63
      %s65 = ssub.s32 %s26, %s38
      %s66 = ssub.s32 %s27, %s34
      %s67 = sor.u32 %s65, %s66
      %p68 = scmp.eq.s32.totalorder %s67, 0
      %s70 = sadd.s32 %s69, 1
      %s71 = scalar_select %p68, %s69, %s70
      %p74 = pneg %p68
      %p75 = scmp.eq.s32.totalorder %s19, 3
      %p76 = por %p74, %p75
      %p77 = scmp.ne.s32.totalorder %s69, %s72
      %p78 = scmp.eq.s32.totalorder %s19, 0
      %p79 = por %p77, %p78
      %p80 = scmp.ne.s32.totalorder %s69, %s72
      %p81 = scmp.eq.s32.totalorder %s24, 3
      %p82 = por %p80, %p81
      %p83 = scmp.ne.s32.totalorder %s72, %s73
      %p84 = scmp.eq.s32.totalorder %s24, 0
      %p85 = por %p83, %p84
      %p86 = scmp.ne.s32.totalorder %s72, %s73
      %p87 = scmp.eq.s32.totalorder %s25, 3
      %p88 = por %p86, %p87
      %p90 = scmp.ne.s32.totalorder %s73, %s89
      %p91 = scmp.eq.s32.totalorder %s25, 0
      %p92 = por %p90, %p91
      %s94 = sadd.s32 %s93, 1
      %p97 = scmp.eq.s32.totalorder %s19, 3
      %p98 = scmp.ne.s32.totalorder %s93, %s95
      %p99 = scmp.eq.s32.totalorder %s19, 0
      %p100 = por %p98, %p99
      %p101 = scmp.ne.s32.totalorder %s93, %s95
      %p102 = scmp.eq.s32.totalorder %s24, 3
      %p103 = por %p101, %p102
      %p104 = scmp.ne.s32.totalorder %s95, %s96
      %p105 = scmp.eq.s32.totalorder %s24, 0
      %p106 = por %p104, %p105
      %p107 = scmp.ne.s32.totalorder %s95, %s96
      %p108 = scmp.eq.s32.totalorder %s25, 3
      %p109 = por %p107, %p108
      %p111 = scmp.ne.s32.totalorder %s96, %s110
      %p112 = scmp.eq.s32.totalorder %s25, 0
      %p113 = por %p111, %p112
      %s115 = sadd.s32 %s114, 1
      %p118 = scmp.eq.s32.totalorder %s19, 3
      %p119 = scmp.ne.s32.totalorder %s114, %s116
      %p120 = scmp.eq.s32.totalorder %s19, 0
      %p121 = por %p119, %p120
      %p122 = scmp.ne.s32.totalorder %s114, %s116
      %p123 = scmp.eq.s32.totalorder %s24, 3
      %p124 = por %p122, %p123
      %p125 = scmp.ne.s32.totalorder %s116, %s117
      %p126 = scmp.eq.s32.totalorder %s24, 0
      %p127 = por %p125, %p126
      %p128 = scmp.ne.s32.totalorder %s116, %s117
      %p129 = scmp.eq.s32.totalorder %s25, 3
      %p130 = por %p128, %p129
      %p132 = scmp.ne.s32.totalorder %s117, %s131
      %p133 = scmp.eq.s32.totalorder %s25, 0
      %p134 = por %p132, %p133
      %s136 = sadd.s32 %s135, 1
      %p139 = scmp.eq.s32.totalorder %s19, 3
      %p140 = scmp.ne.s32.totalorder %s135, %s137
      %p141 = scmp.eq.s32.totalorder %s19, 0
      %p142 = por %p140, %p141
      %p143 = scmp.ne.s32.totalorder %s135, %s137
      %p144 = scmp.eq.s32.totalorder %s24, 3
      %p145 = por %p143, %p144
      %p146 = scmp.ne.s32.totalorder %s137, %s138
      %p147 = scmp.eq.s32.totalorder %s24, 0
      %p148 = por %p146, %p147
      %p149 = scmp.ne.s32.totalorder %s137, %s138
      %p150 = scmp.eq.s32.totalorder %s25, 3
      %p151 = por %p149, %p150
      %p153 = scmp.ne.s32.totalorder %s138, %s152
      %p154 = scmp.eq.s32.totalorder %s25, 0
      %p155 = por %p153, %p154
      %s157 = sadd.s32 %s156, 1
      %p160 = scmp.eq.s32.totalorder %s19, 3
      %p161 = scmp.ne.s32.totalorder %s156, %s158
      %p162 = scmp.eq.s32.totalorder %s19, 0
      %p163 = por %p161, %p162
      %p164 = scmp.ne.s32.totalorder %s156, %s158
      %p165 = scmp.eq.s32.totalorder %s24, 3
      %p166 = por %p164, %p165
      %p167 = scmp.ne.s32.totalorder %s158, %s159
      %p168 = scmp.eq.s32.totalorder %s24, 0
      %p169 = por %p167, %p168
      %p170 = scmp.ne.s32.totalorder %s158, %s159
      %p171 = scmp.eq.s32.totalorder %s25, 3
      %p172 = por %p170, %p171
      %p174 = scmp.ne.s32.totalorder %s159, %s173
      %p175 = scmp.eq.s32.totalorder %s25, 0
      %p176 = por %p174, %p175
      %s178 = sadd.s32 %s177, 1
      %p181 = scmp.eq.s32.totalorder %s19, 3
      %p182 = scmp.ne.s32.totalorder %s177, %s179
      %p183 = scmp.eq.s32.totalorder %s19, 0
      %p184 = por %p182, %p183
      %p185 = scmp.ne.s32.totalorder %s177, %s179
      %p186 = scmp.eq.s32.totalorder %s24, 3
      %p187 = por %p185, %p186
      %p188 = scmp.ne.s32.totalorder %s179, %s180
      %p189 = scmp.eq.s32.totalorder %s24, 0
      %p190 = por %p188, %p189
      %p191 = scmp.ne.s32.totalorder %s179, %s180
      %p192 = scmp.eq.s32.totalorder %s25, 3
      %p193 = por %p191, %p192
      %p195 = scmp.ne.s32.totalorder %s180, %s194
      %p196 = scmp.eq.s32.totalorder %s25, 0
      %p197 = por %p195, %p196
      %s199 = sadd.s32 %s198, 1
      %p202 = scmp.eq.s32.totalorder %s19, 3
      %p203 = scmp.ne.s32.totalorder %s198, %s200
      %p204 = scmp.eq.s32.totalorder %s19, 0
      %p205 = por %p203, %p204
      %p206 = scmp.ne.s32.totalorder %s198, %s200
      %p207 = scmp.eq.s32.totalorder %s24, 3
      %p208 = por %p206, %p207
      %p209 = scmp.ne.s32.totalorder %s200, %s201
      %p210 = scmp.eq.s32.totalorder %s24, 0
      %p211 = por %p209, %p210
      %p212 = scmp.ne.s32.totalorder %s200, %s201
      %p213 = scmp.eq.s32.totalorder %s25, 3
      %p214 = por %p212, %p213
      %p216 = scmp.ne.s32.totalorder %s201, %s215
      %p217 = scmp.eq.s32.totalorder %s25, 0
      %p218 = por %p216, %p217
      %s220 = sadd.s32 %s219, 1
      %p223 = scmp.eq.s32.totalorder %s19, 3
      %p224 = scmp.ne.s32.totalorder %s219, %s221
      %p225 = scmp.eq.s32.totalorder %s19, 0
      %p226 = por %p224, %p225
      %p227 = scmp.ne.s32.totalorder %s219, %s221
      %p228 = scmp.eq.s32.totalorder %s24, 3
      %p229 = por %p227, %p228
      %p230 = scmp.ne.s32.totalorder %s221, %s222
      %p231 = scmp.eq.s32.totalorder %s24, 0
      %p232 = por %p230, %p231
      %p233 = scmp.ne.s32.totalorder %s221, %s222
      %p234 = scmp.eq.s32.totalorder %s25, 3
      %p235 = por %p233, %p234
      %p237 = scmp.ne.s32.totalorder %s222, %s236
      %p238 = scmp.eq.s32.totalorder %s25, 0
      %p239 = por %p237, %p238
      %s241 = sadd.s32 %s240, 1
      %p244 = scmp.eq.s32.totalorder %s19, 3
      %p245 = scmp.ne.s32.totalorder %s240, %s242
      %p246 = scmp.eq.s32.totalorder %s19, 0
      %p247 = por %p245, %p246
      %p248 = scmp.ne.s32.totalorder %s240, %s242
      %p249 = scmp.eq.s32.totalorder %s24, 3
      %p250 = por %p248, %p249
      %p251 = scmp.ne.s32.totalorder %s242, %s243
      %p252 = scmp.eq.s32.totalorder %s24, 0
      %p253 = por %p251, %p252
      %p254 = scmp.ne.s32.totalorder %s242, %s243
      %p255 = scmp.eq.s32.totalorder %s25, 3
      %p256 = por %p254, %p255
      %p258 = scmp.ne.s32.totalorder %s243, %s257
      %p259 = scmp.eq.s32.totalorder %s25, 0
      %p260 = por %p258, %p259
      %s261 = ssub.s32 %s26, %s38
      %s262 = ssub.s32 %s27, %s34
      %s263 = sor.u32 %s261, %s262
      %p264 = scmp.eq.s32.totalorder %s263, 0
      %s266 = sadd.s32 %s265, 1
      %s267 = scalar_select %p264, %s265, %s266
      %p270 = pneg %p264
      %p271 = scmp.eq.s32.totalorder %s19, 3
      %p272 = por %p270, %p271
      %p273 = scmp.ne.s32.totalorder %s265, %s268
      %p274 = scmp.eq.s32.totalorder %s19, 0
      %p275 = por %p273, %p274
      %p276 = scmp.ne.s32.totalorder %s265, %s268
      %p277 = scmp.eq.s32.totalorder %s24, 3
      %p278 = por %p276, %p277
      %p279 = scmp.ne.s32.totalorder %s268, %s269
      %p280 = scmp.eq.s32.totalorder %s24, 0
      %p281 = por %p279, %p280
      %p282 = scmp.ne.s32.totalorder %s268, %s269
      %p283 = scmp.eq.s32.totalorder %s25, 3
      %p284 = por %p282, %p283
      %p286 = scmp.ne.s32.totalorder %s269, %s285
      %p287 = scmp.eq.s32.totalorder %s25, 0
      %p288 = por %p286, %p287
      %p289 = scmp.le.s32.totalorder 1, %s19
      %p290 = scmp.lt.s32.totalorder %s19, 5
      %p291 = pnand %p289, %p290
      %p292 = pneg %p291
      // Predicated region
      $region9: #{tpu_custom_call.1} parent=5 // pred_check
        _
      $region10: #{tpu_custom_call.1} parent=5 // pred_check_branch
        %294 = sbr.rel (%p291) target = $region12
      $region11: #{tpu_custom_call.1} parent=5 // pred_region
        %s295 = ssub.s32 %s19, 1
        // Predicated region
        $region13: #{tpu_custom_call.1} parent=11 // pred_check
          %p296 = pneg %p106
        $region14: #{tpu_custom_call.1} parent=11 // pred_check_branch
          %298 = sbr.rel (%p296) target = $region16
        $region15: #{tpu_custom_call.1} parent=11 // pred_region
          _
        $region16: #{tpu_custom_call.1} parent=11 // pred_fallthru
          _
        // Predicated region
        $region17: #{tpu_custom_call.1} parent=11 // pred_check
          %p299 = pneg %p127
        $region18: #{tpu_custom_call.1} parent=11 // pred_check_branch
          %301 = sbr.rel (%p299) target = $region20
        $region19: #{tpu_custom_call.1} parent=11 // pred_region
          _
        $region20: #{tpu_custom_call.1} parent=11 // pred_fallthru
          _
        // Predicated region
        $region21: #{tpu_custom_call.1} parent=11 // pred_check
          %p302 = pneg %p148
        $region22: #{tpu_custom_call.1} parent=11 // pred_check_branch
          %304 = sbr.rel (%p302) target = $region24
        $region23: #{tpu_custom_call.1} parent=11 // pred_region
          _
        $region24: #{tpu_custom_call.1} parent=11 // pred_fallthru
          _
        // Predicated region
        $region25: #{tpu_custom_call.1} parent=11 // pred_check
          %p305 = pneg %p169
        $region26: #{tpu_custom_call.1} parent=11 // pred_check_branch
          %307 = sbr.rel (%p305) target = $region28
        $region27: #{tpu_custom_call.1} parent=11 // pred_region
          _
        $region28: #{tpu_custom_call.1} parent=11 // pred_fallthru
          _
        // Predicated region
        $region29: #{tpu_custom_call.1} parent=11 // pred_check
          %p308 = pneg %p190
        $region30: #{tpu_custom_call.1} parent=11 // pred_check_branch
          %310 = sbr.rel (%p308) target = $region32
        $region31: #{tpu_custom_call.1} parent=11 // pred_region
          _
        $region32: #{tpu_custom_call.1} parent=11 // pred_fallthru
          _
        // Predicated region
        $region33: #{tpu_custom_call.1} parent=11 // pred_check
          %p311 = pneg %p211
        $region34: #{tpu_custom_call.1} parent=11 // pred_check_branch
          %313 = sbr.rel (%p311) target = $region36
        $region35: #{tpu_custom_call.1} parent=11 // pred_region
          _
        $region36: #{tpu_custom_call.1} parent=11 // pred_fallthru
          _
        // Predicated region
        $region37: #{tpu_custom_call.1} parent=11 // pred_check
          %p314 = pneg %p232
        $region38: #{tpu_custom_call.1} parent=11 // pred_check_branch
          %316 = sbr.rel (%p314) target = $region40
        $region39: #{tpu_custom_call.1} parent=11 // pred_region
          _
        $region40: #{tpu_custom_call.1} parent=11 // pred_fallthru
          _
        // Predicated region
        $region41: #{tpu_custom_call.1} parent=11 // pred_check
          %p317 = pneg %p253
        $region42: #{tpu_custom_call.1} parent=11 // pred_check_branch
          %319 = sbr.rel (%p317) target = $region44
        $region43: #{tpu_custom_call.1} parent=11 // pred_region
          _
        $region44: #{tpu_custom_call.1} parent=11 // pred_fallthru
          _
      $region12: #{tpu_custom_call.1} parent=5 // pred_fallthru
        _
      %p320 = scmp.lt.s32.totalorder %s19, 4
      // Predicated region
      $region45: #{tpu_custom_call.1} parent=5 // pred_check
        %p321 = pneg %p320
      $region46: #{tpu_custom_call.1} parent=5 // pred_check_branch
        %323 = sbr.rel (%p321) target = $region48
      $region47: #{tpu_custom_call.1} parent=5 // pred_region
        // Predicated region
        $region49: #{tpu_custom_call.1} parent=47 // pred_check
          %p324 = pneg %p51
        $region50: #{tpu_custom_call.1} parent=47 // pred_check_branch
          %326 = sbr.rel (%p324) target = $region52
        $region51: #{tpu_custom_call.1} parent=47 // pred_region
          %p327 = scmp.lt.s32.totalorder %s26, 1
          %s328 = scalar_select %p327, %s26, 1
          %s329 = smul.addr %s328, 54
          %s330 = smul.addr %s329, 4
          %s331 = scalar_lea.vmem %s0, %s330
        $region52: #{tpu_custom_call.1} parent=47 // pred_fallthru
          _
        // Predicated region
        $region53: #{tpu_custom_call.1} parent=47 // pred_check
          %p332 = pneg %p79
        $region54: #{tpu_custom_call.1} parent=47 // pred_check_branch
          %334 = sbr.rel (%p332) target = $region56
        $region55: #{tpu_custom_call.1} parent=47 // pred_region
          %s335 = smul.u32 8, %s27
          %p336 = scmp.lt.s32.totalorder %s26, 1
          %s337 = scalar_select %p336, %s26, 1
          %p338 = scmp.lt.s32.totalorder %s335, 15
          %s339 = scalar_select %p338, %s335, 15
          %s340 = smul.addr %s339, 2
          %s341 = smul.addr %s337, 32
          %s342 = sadd.s32 %s340, %s341
          %s343 = smul.addr %s342, 4
          %s344 = scalar_lea.vmem %s1, %s343
          %s345 = smul.u32 8, %s27
        $region56: #{tpu_custom_call.1} parent=47 // pred_fallthru
          _
      $region48: #{tpu_custom_call.1} parent=5 // pred_fallthru
        _
      %p346 = scmp.le.s32.totalorder 1, %s19
      %p347 = scmp.lt.s32.totalorder %s19, 5
      %p348 = pnand %p346, %p347
      %p349 = pneg %p348
      // Predicated region
      $region57: #{tpu_custom_call.1} parent=5 // pred_check
        _
      $region58: #{tpu_custom_call.1} parent=5 // pred_check_branch
        %351 = sbr.rel (%p348) target = $region60
      $region59: #{tpu_custom_call.1} parent=5 // pred_region
        %s352 = ssub.s32 %s19, 1
        %p353 = scmp.lt.s32.totalorder %s28, 1
        %s354 = scalar_select %p353, %s28, 1
        %s355 = smul.addr %s354, 54
        %s356 = smul.addr %s355, 4
        %s357 = scalar_lea.vmem %s0, %s356
        %p358 = pneg %p57
        %p359 = pneg %p54
        %s360 = smul.u32 8, %s29
        %p361 = scmp.lt.s32.totalorder %s28, 1
        %s362 = scalar_select %p361, %s28, 1
        %p363 = scmp.lt.s32.totalorder %s360, 15
        %s364 = scalar_select %p363, %s360, 15
        %s365 = smul.addr %s364, 2
        %s366 = smul.addr %s362, 32
        %s367 = sadd.s32 %s365, %s366
        %s368 = smul.addr %s367, 4
        %s369 = scalar_lea.vmem %s1, %s368
        %p370 = pneg %p85
        %p371 = pneg %p82
        %p372 = pneg %p106
        %p373 = pneg %p103
        %p374 = pneg %p127
        %p375 = pneg %p124
        %p376 = pneg %p148
        %p377 = pneg %p145
        %p378 = pneg %p169
        %p379 = pneg %p166
        %p380 = pneg %p190
        %p381 = pneg %p187
        %p382 = pneg %p211
        %p383 = pneg %p208
        %p384 = pneg %p232
        %p385 = pneg %p229
        %p386 = pneg %p253
        %p387 = pneg %p250
        %p388 = pneg %p281
        %p389 = pneg %p278
        %s390 = sand.u32 %s268, 1
        %s391 = scalar_lea.sflag [#allocation3], %s390
        %s392 = sand.u32 %s268, 1
        %s393 = smul.addr %s392, 128
        %s394 = scalar_lea.vmem [#allocation2], %s393
        %p395 = scmp.lt.s32.totalorder %s28, 1
        %s396 = scalar_select %p395, %s28, 1
        %s397 = smul.addr %s396, 54
        %s398 = smul.addr %s397, 4
        %s399 = scalar_lea.vmem %s0, %s398
        %s400 = smul.u32 8, %s29
        %p401 = scmp.lt.s32.totalorder %s28, 1
        %s402 = scalar_select %p401, %s28, 1
        %p403 = scmp.lt.s32.totalorder %s400, 15
        %s404 = scalar_select %p403, %s400, 15
        %s405 = smul.addr %s404, 2
        %s406 = smul.addr %s402, 32
        %s407 = sadd.s32 %s405, %s406
        %s408 = smul.addr %s407, 4
        %s409 = scalar_lea.vmem %s1, %s408
        %s410 = smul.u32 8, %s29
        %s411 = smul.u32 8, %s29
        %s413 = smul.u32 %s29, 8
        %s414 = smul.u32 %s413, 3
        %s415 = smul.addr %s414, 4
        %s416 = scalar_lea.vmem %s399, %s415
        %v417 = vld [vmem:[%s416] sm:$0xf]
        %v418 = vld [vmem:[%s416 + $0x4] sm:$0xf]
        %v419 = vld [vmem:[%s416 + $0xc] sm:$0xf]
        %v420 = vld [vmem:[%s416 + $0x10] sm:$0xf]
        %v421 = vld [vmem:[%s416 + $0x18] sm:$0xf]
        %v422 = vld [vmem:[%s416 + $0x1c] sm:$0xf]
        %v423 = vld [vmem:[%s416 + $0x24] sm:$0xf]
        %v424 = vld [vmem:[%s416 + $0x28] sm:$0xf]
        %v425 = vld [vmem:[%s416 + $0x30] sm:$0xf]
        %v426 = vld [vmem:[%s416 + $0x34] sm:$0xf]
        %v427 = vld [vmem:[%s416 + $0x3c] sm:$0xf]
        %v428 = vld [vmem:[%s416 + $0x40] sm:$0xf]
        %v429 = vld [vmem:[%s416 + $0x48] sm:$0xf]
        %v430 = vld [vmem:[%s416 + $0x4c] sm:$0xf]
        %v431 = vld [vmem:[%s416 + $0x54] sm:$0xf]
        %v432 = vld [vmem:[%s416 + $0x58] sm:$0xf]
        %v433 = vld [vmem:[%s2] sm:$0xf]
        %v434 = vld [vmem:[%s2 + $0x4] sm:$0xf]
        %v435 = vld [vmem:[%s416 + $0x8] sm:$0x1]
        %v436 = vld [vmem:[%s416 + $0x14] sm:$0x1]
        %v437 = vld [vmem:[%s416 + $0x20] sm:$0x1]
        %v438 = vld [vmem:[%s416 + $0x2c] sm:$0x1]
        %v439 = vld [vmem:[%s416 + $0x38] sm:$0x1]
        %v440 = vld [vmem:[%s416 + $0x44] sm:$0x1]
        %v441 = vld [vmem:[%s416 + $0x50] sm:$0x1]
        %v442 = vld [vmem:[%s416 + $0x5c] sm:$0x1]
        %vm443 = vsmask.f32 3328
        %vm444 = vsmask.f32 7440
        %vm445 = vmor %vm443, %vm444
        %v447 = vshrl.u32 %v417, 16
        %v449 = vrot.slane %v447, 4
        %v450 = vshll.u32 %v417, 16
        %v452 = vrot.slane %v450, 5
        %v453 = vor.u32 %v449, %v452
        %v454 = vrot.slane %v453, 4
        %v456 = vshll.u32 %v418, 16
        %v458 = vrot.slane %v456, 5
        %v459 = vsel %vm445, %v454, %v458
        %v460 = vshrl.u32 %v418, 16
        %v462 = vrot.slane %v460, 4
        %v463 = vor.u32 %v462, %v458
        %v464 = vrot.slane %v463, 4
        %v466 = vshll.u32 %v435, 16
        %v468 = vrot.slane %v466, 5
        %v469 = vsel %vm445, %v464, %v468
        %v471 = vshrl.u32 %v419, 16
        %v473 = vrot.slane %v471, 4
        %v474 = vshll.u32 %v419, 16
        %v476 = vrot.slane %v474, 5
        %v477 = vor.u32 %v473, %v476
        %v478 = vrot.slane %v477, 4
        %v480 = vshll.u32 %v420, 16
        %v482 = vrot.slane %v480, 5
        %v483 = vsel %vm445, %v478, %v482
        %v484 = vshrl.u32 %v420, 16
        %v486 = vrot.slane %v484, 4
        %v487 = vor.u32 %v486, %v482
        %v488 = vrot.slane %v487, 4
        %v490 = vshll.u32 %v436, 16
        %v492 = vrot.slane %v490, 5
        %v493 = vsel %vm445, %v488, %v492
        %v495 = vshrl.u32 %v421, 16
        %v497 = vrot.slane %v495, 4
        %v498 = vshll.u32 %v421, 16
        %v500 = vrot.slane %v498, 5
        %v501 = vor.u32 %v497, %v500
        %v502 = vrot.slane %v501, 4
        %v504 = vshll.u32 %v422, 16
        %v506 = vrot.slane %v504, 5
        %v507 = vsel %vm445, %v502, %v506
        %v508 = vshrl.u32 %v422, 16
        %v510 = vrot.slane %v508, 4
        %v511 = vor.u32 %v510, %v506
        %v512 = vrot.slane %v511, 4
        %v514 = vshll.u32 %v437, 16
        %v516 = vrot.slane %v514, 5
        %v517 = vsel %vm445, %v512, %v516
        %v519 = vshrl.u32 %v423, 16
        %v521 = vrot.slane %v519, 4
        %v522 = vshll.u32 %v423, 16
        %v524 = vrot.slane %v522, 5
        %v525 = vor.u32 %v521, %v524
        %v526 = vrot.slane %v525, 4
        %v528 = vshll.u32 %v424, 16
        %v530 = vrot.slane %v528, 5
        %v531 = vsel %vm445, %v526, %v530
        %v532 = vshrl.u32 %v424, 16
        %v534 = vrot.slane %v532, 4
        %v535 = vor.u32 %v534, %v530
        %v536 = vrot.slane %v535, 4
        %v538 = vshll.u32 %v438, 16
        %v540 = vrot.slane %v538, 5
        %v541 = vsel %vm445, %v536, %v540
        %v543 = vshrl.u32 %v425, 16
        %v545 = vrot.slane %v543, 4
        %v546 = vshll.u32 %v425, 16
        %v548 = vrot.slane %v546, 5
        %v549 = vor.u32 %v545, %v548
        %v550 = vrot.slane %v549, 4
        %v552 = vshll.u32 %v426, 16
        %v554 = vrot.slane %v552, 5
        %v555 = vsel %vm445, %v550, %v554
        %v556 = vshrl.u32 %v426, 16
        %v558 = vrot.slane %v556, 4
        %v559 = vor.u32 %v558, %v554
        %v560 = vrot.slane %v559, 4
        %v562 = vshll.u32 %v439, 16
        %v564 = vrot.slane %v562, 5
        %v565 = vsel %vm445, %v560, %v564
        %v567 = vshrl.u32 %v427, 16
        %v569 = vrot.slane %v567, 4
        %v570 = vshll.u32 %v427, 16
        %v572 = vrot.slane %v570, 5
        %v573 = vor.u32 %v569, %v572
        %v574 = vrot.slane %v573, 4
        %v576 = vshll.u32 %v428, 16
        %v578 = vrot.slane %v576, 5
        %v579 = vsel %vm445, %v574, %v578
        %v580 = vshrl.u32 %v428, 16
        %v582 = vrot.slane %v580, 4
        %v583 = vor.u32 %v582, %v578
        %v584 = vrot.slane %v583, 4
        %v586 = vshll.u32 %v440, 16
        %v588 = vrot.slane %v586, 5
        %v589 = vsel %vm445, %v584, %v588
        %v591 = vshrl.u32 %v429, 16
        %v593 = vrot.slane %v591, 4
        %v594 = vshll.u32 %v429, 16
        %v596 = vrot.slane %v594, 5
        %v597 = vor.u32 %v593, %v596
        %v598 = vrot.slane %v597, 4
        %v600 = vshll.u32 %v430, 16
        %v602 = vrot.slane %v600, 5
        %v603 = vsel %vm445, %v598, %v602
        %v604 = vshrl.u32 %v430, 16
        %v606 = vrot.slane %v604, 4
        %v607 = vor.u32 %v606, %v602
        %v608 = vrot.slane %v607, 4
        %v610 = vshll.u32 %v441, 16
        %v612 = vrot.slane %v610, 5
        %v613 = vsel %vm445, %v608, %v612
        %v615 = vshrl.u32 %v431, 16
        %v617 = vrot.slane %v615, 4
        %v618 = vshll.u32 %v431, 16
        %v620 = vrot.slane %v618, 5
        %v621 = vor.u32 %v617, %v620
        %v622 = vrot.slane %v621, 4
        %v624 = vshll.u32 %v432, 16
        %v626 = vrot.slane %v624, 5
        %v627 = vsel %vm445, %v622, %v626
        %v628 = vshrl.u32 %v432, 16
        %v630 = vrot.slane %v628, 4
        %v631 = vor.u32 %v630, %v626
        %v632 = vrot.slane %v631, 4
        %v634 = vshll.u32 %v442, 16
        %v636 = vrot.slane %v634, 5
        %v637 = vsel %vm445, %v632, %v636
        %s638 = scalar_lea.vmem %s2, 8
        %v639 = vld [vmem:[%s638] sm:$0xf]
        %v640 = vld [vmem:[%s638 + $0x4] sm:$0xf]
        %v641 = vunpack.c.l.b16 %v459
        %v642 = vunpack.c.l.b16 %v469
        %v643 = vunpack.c.l.b16 %v483
        %v644 = vunpack.c.l.b16 %v493
        %v645 = vunpack.c.l.b16 %v507
        %v646 = vunpack.c.l.b16 %v517
        %v647 = vunpack.c.l.b16 %v531
        %v648 = vunpack.c.l.b16 %v541
        %v649 = vunpack.c.l.b16 %v555
        %v650 = vunpack.c.l.b16 %v565
        %v651 = vunpack.c.l.b16 %v579
        %v652 = vunpack.c.l.b16 %v589
        %v653 = vunpack.c.l.b16 %v603
        %v654 = vunpack.c.l.b16 %v613
        %v655 = vunpack.c.l.b16 %v627
        %v656 = vunpack.c.l.b16 %v637
        %v657 = vpack.c.b16 %v642, %v641
        %v658 = vpack.c.b16 %v644, %v643
        %v659 = vpack.c.b16 %v646, %v645
        %v660 = vpack.c.b16 %v648, %v647
        %v661 = vpack.c.b16 %v650, %v649
        %v662 = vpack.c.b16 %v652, %v651
        %v663 = vpack.c.b16 %v654, %v653
        %v664 = vpack.c.b16 %v656, %v655
        %v667 = vunpack.c.l.b16 %v639
        %v668 = vunpack.c.l.b16 %v640
        %v669 = vpack.c.b16 %v668, %v667
        %vm671 = vcmask 130048
        %v673 = vsel %vm671, %v657, 0
        %v676 = vsel %vm671, %v658, 0
        %v679 = vsel %vm671, %v659, 0
        %v682 = vsel %vm671, %v660, 0
        %v685 = vsel %vm671, %v661, 0
        %v688 = vsel %vm671, %v662, 0
        %v691 = vsel %vm671, %v663, 0
        %v694 = vsel %vm671, %v664, 0
        %696 = vmatprep.subr.bf16.mxu0 0
        %697 = vmatpush1.bf16.msra.mxu0 0
        %698 = vmatprep.subr.bf16.mxu0 0
        %699 = vmatpush1.bf16.msra.mxu0 0
        %700 = vmatprep.subr.bf16.mxu0 0
        %701 = vmatpush1.bf16.msra.mxu0 0
        %702 = vmatprep.subr.bf16.mxu0 0
        %703 = vmatpush1.bf16.msra.mxu0 0
        %704 = vmatprep.subr.bf16.mxu0 0
        %705 = vmatpush1.bf16.msra.mxu0 0
        %706 = vmatprep.subr.bf16.mxu0 0
        %707 = vmatpush1.bf16.msra.mxu0 0
        %708 = vmatprep.subr.bf16.mxu0 0
        %709 = vmatpush1.bf16.msra.mxu0 0
        %710 = vmatprep.subr.bf16.mxu0 0
        %711 = vmatpush1.bf16.msra.mxu0 %v669
        %712 = vmatprep.subr.bf16.mxu0 0
        %713 = vmatpush2.bf16.msra.mxu0 0
        %714 = vmatprep.subr.bf16.mxu0 0
        %715 = vmatpush2.bf16.msra.mxu0 0
        %716 = vmatprep.subr.bf16.mxu0 0
        %717 = vmatpush2.bf16.msra.mxu0 0
        %718 = vmatprep.subr.bf16.mxu0 0
        %719 = vmatpush2.bf16.msra.mxu0 0
        %720 = vmatprep.subr.bf16.mxu0 0
        %721 = vmatpush2.bf16.msra.mxu0 0
        %722 = vmatprep.subr.bf16.mxu0 0
        %723 = vmatpush2.bf16.msra.mxu0 0
        %724 = vmatprep.subr.bf16.mxu0 0
        %725 = vmatpush2.bf16.msra.mxu0 0
        %726 = vmatprep.subr.bf16.mxu0 0
        %727 = vmatpush2.bf16.msra.mxu0 0
        %728 = vmatprep.mubr.bf16.mxu0 0
        %729 = vmatmul.mubr.bf16.gmra.mxu0 %v673
        %v730 = vpop.f32.mrf.mxu0
        %v731 = vadd.f32 0.0, %v730
        %v732 = vpop.f32.mrf.mxu0
        %v733 = vpop.f32.mrf.mxu0
        %v734 = vadd.f32 0.0, %v733
        %v735 = vpop.f32.mrf.mxu0
        %736 = vmatprep.mubr.bf16.mxu0 0
        %737 = vmatmul.mubr.bf16.gmra.mxu0 %v676
        %v738 = vpop.f32.mrf.mxu0
        %v739 = vadd.f32 0.0, %v738
        %v740 = vpop.f32.mrf.mxu0
        %v741 = vpop.f32.mrf.mxu0
        %v742 = vadd.f32 0.0, %v741
        %v743 = vpop.f32.mrf.mxu0
        %744 = vmatprep.mubr.bf16.mxu0 0
        %745 = vmatmul.mubr.bf16.gmra.mxu0 %v679
        %v746 = vpop.f32.mrf.mxu0
        %v747 = vadd.f32 0.0, %v746
        %v748 = vpop.f32.mrf.mxu0
        %v749 = vpop.f32.mrf.mxu0
        %v750 = vadd.f32 0.0, %v749
        %v751 = vpop.f32.mrf.mxu0
        %752 = vmatprep.mubr.bf16.mxu0 0
        %753 = vmatmul.mubr.bf16.gmra.mxu0 %v682
        %v754 = vpop.f32.mrf.mxu0
        %v755 = vadd.f32 0.0, %v754
        %v756 = vpop.f32.mrf.mxu0
        %v757 = vpop.f32.mrf.mxu0
        %v758 = vadd.f32 0.0, %v757
        %v759 = vpop.f32.mrf.mxu0
        %760 = vmatprep.mubr.bf16.mxu0 0
        %761 = vmatmul.mubr.bf16.gmra.mxu0 %v685
        %v762 = vpop.f32.mrf.mxu0
        %v763 = vadd.f32 0.0, %v762
        %v764 = vpop.f32.mrf.mxu0
        %v765 = vpop.f32.mrf.mxu0
        %v766 = vadd.f32 0.0, %v765
        %v767 = vpop.f32.mrf.mxu0
        %768 = vmatprep.mubr.bf16.mxu0 0
        %769 = vmatmul.mubr.bf16.gmra.mxu0 %v688
        %v770 = vpop.f32.mrf.mxu0
        %v771 = vadd.f32 0.0, %v770
        %v772 = vpop.f32.mrf.mxu0
        %v773 = vpop.f32.mrf.mxu0
        %v774 = vadd.f32 0.0, %v773
        %v775 = vpop.f32.mrf.mxu0
        %776 = vmatprep.mubr.bf16.mxu0 0
        %777 = vmatmul.mubr.bf16.gmra.mxu0 %v691
        %v778 = vpop.f32.mrf.mxu0
        %v779 = vadd.f32 0.0, %v778
        %v780 = vpop.f32.mrf.mxu0
        %v781 = vpop.f32.mrf.mxu0
        %v782 = vadd.f32 0.0, %v781
        %v783 = vpop.f32.mrf.mxu0
        %784 = vmatprep.mubr.bf16.mxu0 0
        %785 = vmatmul.mubr.bf16.gmra.mxu0 %v694
        %v786 = vpop.f32.mrf.mxu0
        %v787 = vadd.f32 0.0, %v786
        %v788 = vpop.f32.mrf.mxu0
        %v789 = vpop.f32.mrf.mxu0
        %v790 = vadd.f32 0.0, %v789
        %v791 = vpop.f32.mrf.mxu0
        %792 = vdwg.mxu0
        %v809 = vunpack.c.l.b16 %v417
        %v810 = vunpack.c.l.b16 %v418
        %v811 = vunpack.c.l.b16 %v419
        %v812 = vunpack.c.l.b16 %v420
        %v813 = vunpack.c.l.b16 %v421
        %v814 = vunpack.c.l.b16 %v422
        %v815 = vunpack.c.l.b16 %v423
        %v816 = vunpack.c.l.b16 %v424
        %v817 = vunpack.c.l.b16 %v425
        %v818 = vunpack.c.l.b16 %v426
        %v819 = vunpack.c.l.b16 %v427
        %v820 = vunpack.c.l.b16 %v428
        %v821 = vunpack.c.l.b16 %v429
        %v822 = vunpack.c.l.b16 %v430
        %v823 = vunpack.c.l.b16 %v431
        %v824 = vunpack.c.l.b16 %v432
        %v825 = vpack.c.b16 %v810, %v809
        %v826 = vpack.c.b16 %v812, %v811
        %v827 = vpack.c.b16 %v814, %v813
        %v828 = vpack.c.b16 %v816, %v815
        %v829 = vpack.c.b16 %v818, %v817
        %v830 = vpack.c.b16 %v820, %v819
        %v831 = vpack.c.b16 %v822, %v821
        %v832 = vpack.c.b16 %v824, %v823
        %v835 = vunpack.c.l.b16 %v433
        %v836 = vunpack.c.l.b16 %v434
        %v837 = vpack.c.b16 %v836, %v835
        %v840 = vsel %vm671, %v825, 0
        %v843 = vsel %vm671, %v826, 0
        %v846 = vsel %vm671, %v827, 0
        %v849 = vsel %vm671, %v828, 0
        %v852 = vsel %vm671, %v829, 0
        %v855 = vsel %vm671, %v830, 0
        %v858 = vsel %vm671, %v831, 0
        %v861 = vsel %vm671, %v832, 0
        %863 = vmatprep.subr.bf16.mxu0 0
        %864 = vmatpush1.bf16.msra.mxu0 0
        %865 = vmatprep.subr.bf16.mxu0 0
        %866 = vmatpush1.bf16.msra.mxu0 0
        %867 = vmatprep.subr.bf16.mxu0 0
        %868 = vmatpush1.bf16.msra.mxu0 0
        %869 = vmatprep.subr.bf16.mxu0 0
        %870 = vmatpush1.bf16.msra.mxu0 0
        %871 = vmatprep.subr.bf16.mxu0 0
        %872 = vmatpush1.bf16.msra.mxu0 0
        %873 = vmatprep.subr.bf16.mxu0 0
        %874 = vmatpush1.bf16.msra.mxu0 0
        %875 = vmatprep.subr.bf16.mxu0 0
        %876 = vmatpush1.bf16.msra.mxu0 0
        %877 = vmatprep.subr.bf16.mxu0 0
        %878 = vmatpush1.bf16.msra.mxu0 %v837
        %879 = vmatprep.subr.bf16.mxu0 0
        %880 = vmatpush2.bf16.msra.mxu0 0
        %881 = vmatprep.subr.bf16.mxu0 0
        %882 = vmatpush2.bf16.msra.mxu0 0
        %883 = vmatprep.subr.bf16.mxu0 0
        %884 = vmatpush2.bf16.msra.mxu0 0
        %885 = vmatprep.subr.bf16.mxu0 0
        %886 = vmatpush2.bf16.msra.mxu0 0
        %887 = vmatprep.subr.bf16.mxu0 0
        %888 = vmatpush2.bf16.msra.mxu0 0
        %889 = vmatprep.subr.bf16.mxu0 0
        %890 = vmatpush2.bf16.msra.mxu0 0
        %891 = vmatprep.subr.bf16.mxu0 0
        %892 = vmatpush2.bf16.msra.mxu0 0
        %893 = vmatprep.subr.bf16.mxu0 0
        %894 = vmatpush2.bf16.msra.mxu0 0
        %895 = vmatprep.mubr.bf16.mxu0 0
        %896 = vmatmul.mubr.bf16.gmra.mxu0 %v840
        %v897 = vpop.f32.mrf.mxu0
        %v898 = vadd.f32 %v731, %v897
        %v899 = vpop.f32.mrf.mxu0
        %v900 = vpop.f32.mrf.mxu0
        %v901 = vadd.f32 %v734, %v900
        %v902 = vpop.f32.mrf.mxu0
        %903 = vmatprep.mubr.bf16.mxu0 0
        %904 = vmatmul.mubr.bf16.gmra.mxu0 %v843
        %v905 = vpop.f32.mrf.mxu0
        %v906 = vadd.f32 %v739, %v905
        %v907 = vpop.f32.mrf.mxu0
        %v908 = vpop.f32.mrf.mxu0
        %v909 = vadd.f32 %v742, %v908
        %v910 = vpop.f32.mrf.mxu0
        %911 = vmatprep.mubr.bf16.mxu0 0
        %912 = vmatmul.mubr.bf16.gmra.mxu0 %v846
        %v913 = vpop.f32.mrf.mxu0
        %v914 = vadd.f32 %v747, %v913
        %v915 = vpop.f32.mrf.mxu0
        %v916 = vpop.f32.mrf.mxu0
        %v917 = vadd.f32 %v750, %v916
        %v918 = vpop.f32.mrf.mxu0
        %919 = vmatprep.mubr.bf16.mxu0 0
        %920 = vmatmul.mubr.bf16.gmra.mxu0 %v849
        %v921 = vpop.f32.mrf.mxu0
        %v922 = vadd.f32 %v755, %v921
        %v923 = vpop.f32.mrf.mxu0
        %v924 = vpop.f32.mrf.mxu0
        %v925 = vadd.f32 %v758, %v924
        %v926 = vpop.f32.mrf.mxu0
        %927 = vmatprep.mubr.bf16.mxu0 0
        %928 = vmatmul.mubr.bf16.gmra.mxu0 %v852
        %v929 = vpop.f32.mrf.mxu0
        %v930 = vadd.f32 %v763, %v929
        %v931 = vpop.f32.mrf.mxu0
        %v932 = vpop.f32.mrf.mxu0
        %v933 = vadd.f32 %v766, %v932
        %v934 = vpop.f32.mrf.mxu0
        %935 = vmatprep.mubr.bf16.mxu0 0
        %936 = vmatmul.mubr.bf16.gmra.mxu0 %v855
        %v937 = vpop.f32.mrf.mxu0
        %v938 = vadd.f32 %v771, %v937
        %v939 = vpop.f32.mrf.mxu0
        %v940 = vpop.f32.mrf.mxu0
        %v941 = vadd.f32 %v774, %v940
        %v942 = vpop.f32.mrf.mxu0
        %943 = vmatprep.mubr.bf16.mxu0 0
        %944 = vmatmul.mubr.bf16.gmra.mxu0 %v858
        %v945 = vpop.f32.mrf.mxu0
        %v946 = vadd.f32 %v779, %v945
        %v947 = vpop.f32.mrf.mxu0
        %v948 = vpop.f32.mrf.mxu0
        %v949 = vadd.f32 %v782, %v948
        %v950 = vpop.f32.mrf.mxu0
        %951 = vmatprep.mubr.bf16.mxu0 0
        %952 = vmatmul.mubr.bf16.gmra.mxu0 %v861
        %v953 = vpop.f32.mrf.mxu0
        %v954 = vadd.f32 %v787, %v953
        %v955 = vpop.f32.mrf.mxu0
        %v956 = vpop.f32.mrf.mxu0
        %v957 = vadd.f32 %v790, %v956
        %v958 = vpop.f32.mrf.mxu0
        %959 = vdwg.mxu0
        %v960 = vld [vmem:[%s416] sm:$0xe]
        %v961 = vld [vmem:[%s416 + $0xc] sm:$0xe]
        %v962 = vld [vmem:[%s416 + $0x18] sm:$0xe]
        %v963 = vld [vmem:[%s416 + $0x24] sm:$0xe]
        %v964 = vld [vmem:[%s416 + $0x30] sm:$0xe]
        %v965 = vld [vmem:[%s416 + $0x3c] sm:$0xe]
        %v966 = vld [vmem:[%s416 + $0x48] sm:$0xe]
        %v967 = vld [vmem:[%s416 + $0x54] sm:$0xe]
        %vm984 = vcmask 1042432
        %vm985 = vcmask 1046532
        %vm986 = vmor %vm984, %vm985
        %v987 = vrot.slane %v960, 5
        %v988 = vrot.slane %v987, 4
        %v989 = vrot.slane %v418, 5
        %v990 = vsel %vm986, %v988, %v989
        %v991 = vrot.slane %v989, 4
        %v992 = vrot.slane %v435, 5
        %v993 = vsel %vm986, %v991, %v992
        %v994 = vrot.slane %v961, 5
        %v995 = vrot.slane %v994, 4
        %v996 = vrot.slane %v420, 5
        %v997 = vsel %vm986, %v995, %v996
        %v998 = vrot.slane %v996, 4
        %v999 = vrot.slane %v436, 5
        %v1000 = vsel %vm986, %v998, %v999
        %v1001 = vrot.slane %v962, 5
        %v1002 = vrot.slane %v1001, 4
        %v1003 = vrot.slane %v422, 5
        %v1004 = vsel %vm986, %v1002, %v1003
        %v1005 = vrot.slane %v1003, 4
        %v1006 = vrot.slane %v437, 5
        %v1007 = vsel %vm986, %v1005, %v1006
        %v1008 = vrot.slane %v963, 5
        %v1009 = vrot.slane %v1008, 4
        %v1010 = vrot.slane %v424, 5
        %v1011 = vsel %vm986, %v1009, %v1010
        %v1012 = vrot.slane %v1010, 4
        %v1013 = vrot.slane %v438, 5
        %v1014 = vsel %vm986, %v1012, %v1013
        %v1015 = vrot.slane %v964, 5
        %v1016 = vrot.slane %v1015, 4
        %v1017 = vrot.slane %v426, 5
        %v1018 = vsel %vm986, %v1016, %v1017
        %v1019 = vrot.slane %v1017, 4
        %v1020 = vrot.slane %v439, 5
        %v1021 = vsel %vm986, %v1019, %v1020
        %v1022 = vrot.slane %v965, 5
        %v1023 = vrot.slane %v1022, 4
        %v1024 = vrot.slane %v428, 5
        %v1025 = vsel %vm986, %v1023, %v1024
        %v1026 = vrot.slane %v1024, 4
        %v1027 = vrot.slane %v440, 5
        %v1028 = vsel %vm986, %v1026, %v1027
        %v1029 = vrot.slane %v966, 5
        %v1030 = vrot.slane %v1029, 4
        %v1031 = vrot.slane %v430, 5
        %v1032 = vsel %vm986, %v1030, %v1031
        %v1033 = vrot.slane %v1031, 4
        %v1034 = vrot.slane %v441, 5
        %v1035 = vsel %vm986, %v1033, %v1034
        %v1036 = vrot.slane %v967, 5
        %v1037 = vrot.slane %v1036, 4
        %v1038 = vrot.slane %v432, 5
        %v1039 = vsel %vm986, %v1037, %v1038
        %v1040 = vrot.slane %v1038, 4
        %v1041 = vrot.slane %v442, 5
        %v1042 = vsel %vm986, %v1040, %v1041
        %s1043 = scalar_lea.vmem %s2, 16
        %v1044 = vld [vmem:[%s1043] sm:$0xf]
        %v1045 = vld [vmem:[%s1043 + $0x4] sm:$0xf]
        %v1046 = vunpack.c.l.b16 %v990
        %v1047 = vunpack.c.l.b16 %v993
        %v1048 = vunpack.c.l.b16 %v997
        %v1049 = vunpack.c.l.b16 %v1000
        %v1050 = vunpack.c.l.b16 %v1004
        %v1051 = vunpack.c.l.b16 %v1007
        %v1052 = vunpack.c.l.b16 %v1011
        %v1053 = vunpack.c.l.b16 %v1014
        %v1054 = vunpack.c.l.b16 %v1018
        %v1055 = vunpack.c.l.b16 %v1021
        %v1056 = vunpack.c.l.b16 %v1025
        %v1057 = vunpack.c.l.b16 %v1028
        %v1058 = vunpack.c.l.b16 %v1032
        %v1059 = vunpack.c.l.b16 %v1035
        %v1060 = vunpack.c.l.b16 %v1039
        %v1061 = vunpack.c.l.b16 %v1042
        %v1062 = vpack.c.b16 %v1047, %v1046
        %v1063 = vpack.c.b16 %v1049, %v1048
        %v1064 = vpack.c.b16 %v1051, %v1050
        %v1065 = vpack.c.b16 %v1053, %v1052
        %v1066 = vpack.c.b16 %v1055, %v1054
        %v1067 = vpack.c.b16 %v1057, %v1056
        %v1068 = vpack.c.b16 %v1059, %v1058
        %v1069 = vpack.c.b16 %v1061, %v1060
        %v1072 = vunpack.c.l.b16 %v1044
        %v1073 = vunpack.c.l.b16 %v1045
        %v1074 = vpack.c.b16 %v1073, %v1072
        %v1077 = vsel %vm671, %v1062, 0
        %v1080 = vsel %vm671, %v1063, 0
        %v1083 = vsel %vm671, %v1064, 0
        %v1086 = vsel %vm671, %v1065, 0
        %v1089 = vsel %vm671, %v1066, 0
        %v1092 = vsel %vm671, %v1067, 0
        %v1095 = vsel %vm671, %v1068, 0
        %v1098 = vsel %vm671, %v1069, 0
        %1100 = vmatprep.subr.bf16.mxu0 0
        %1101 = vmatpush1.bf16.msra.mxu0 0
        %1102 = vmatprep.subr.bf16.mxu0 0
        %1103 = vmatpush1.bf16.msra.mxu0 0
        %1104 = vmatprep.subr.bf16.mxu0 0
        %1105 = vmatpush1.bf16.msra.mxu0 0
        %1106 = vmatprep.subr.bf16.mxu0 0
        %1107 = vmatpush1.bf16.msra.mxu0 0
        %1108 = vmatprep.subr.bf16.mxu0 0
        %1109 = vmatpush1.bf16.msra.mxu0 0
        %1110 = vmatprep.subr.bf16.mxu0 0
        %1111 = vmatpush1.bf16.msra.mxu0 0
        %1112 = vmatprep.subr.bf16.mxu0 0
        %1113 = vmatpush1.bf16.msra.mxu0 0
        %1114 = vmatprep.subr.bf16.mxu0 0
        %1115 = vmatpush1.bf16.msra.mxu0 %v1074
        %1116 = vmatprep.subr.bf16.mxu0 0
        %1117 = vmatpush2.bf16.msra.mxu0 0
        %1118 = vmatprep.subr.bf16.mxu0 0
        %1119 = vmatpush2.bf16.msra.mxu0 0
        %1120 = vmatprep.subr.bf16.mxu0 0
        %1121 = vmatpush2.bf16.msra.mxu0 0
        %1122 = vmatprep.subr.bf16.mxu0 0
        %1123 = vmatpush2.bf16.msra.mxu0 0
        %1124 = vmatprep.subr.bf16.mxu0 0
        %1125 = vmatpush2.bf16.msra.mxu0 0
        %1126 = vmatprep.subr.bf16.mxu0 0
        %1127 = vmatpush2.bf16.msra.mxu0 0
        %1128 = vmatprep.subr.bf16.mxu0 0
        %1129 = vmatpush2.bf16.msra.mxu0 0
        %1130 = vmatprep.subr.bf16.mxu0 0
        %1131 = vmatpush2.bf16.msra.mxu0 0
        %1132 = vmatprep.mubr.bf16.mxu0 0
        %1133 = vmatmul.mubr.bf16.gmra.mxu0 %v1077
        %v1134 = vpop.f32.mrf.mxu0
        %v1135 = vadd.f32 0.0, %v1134
        %v1136 = vpop.f32.mrf.mxu0
        %v1137 = vpop.f32.mrf.mxu0
        %v1138 = vadd.f32 0.0, %v1137
        %v1139 = vpop.f32.mrf.mxu0
        %1140 = vmatprep.mubr.bf16.mxu0 0
        %1141 = vmatmul.mubr.bf16.gmra.mxu0 %v1080
        %v1142 = vpop.f32.mrf.mxu0
        %v1143 = vadd.f32 0.0, %v1142
        %v1144 = vpop.f32.mrf.mxu0
        %v1145 = vpop.f32.mrf.mxu0
        %v1146 = vadd.f32 0.0, %v1145
        %v1147 = vpop.f32.mrf.mxu0
        %1148 = vmatprep.mubr.bf16.mxu0 0
        %1149 = vmatmul.mubr.bf16.gmra.mxu0 %v1083
        %v1150 = vpop.f32.mrf.mxu0
        %v1151 = vadd.f32 0.0, %v1150
        %v1152 = vpop.f32.mrf.mxu0
        %v1153 = vpop.f32.mrf.mxu0
        %v1154 = vadd.f32 0.0, %v1153
        %v1155 = vpop.f32.mrf.mxu0
        %1156 = vmatprep.mubr.bf16.mxu0 0
        %1157 = vmatmul.mubr.bf16.gmra.mxu0 %v1086
        %v1158 = vpop.f32.mrf.mxu0
        %v1159 = vadd.f32 0.0, %v1158
        %v1160 = vpop.f32.mrf.mxu0
        %v1161 = vpop.f32.mrf.mxu0
        %v1162 = vadd.f32 0.0, %v1161
        %v1163 = vpop.f32.mrf.mxu0
        %1164 = vmatprep.mubr.bf16.mxu0 0
        %1165 = vmatmul.mubr.bf16.gmra.mxu0 %v1089
        %v1166 = vpop.f32.mrf.mxu0
        %v1167 = vadd.f32 0.0, %v1166
        %v1168 = vpop.f32.mrf.mxu0
        %v1169 = vpop.f32.mrf.mxu0
        %v1170 = vadd.f32 0.0, %v1169
        %v1171 = vpop.f32.mrf.mxu0
        %1172 = vmatprep.mubr.bf16.mxu0 0
        %1173 = vmatmul.mubr.bf16.gmra.mxu0 %v1092
        %v1174 = vpop.f32.mrf.mxu0
        %v1175 = vadd.f32 0.0, %v1174
        %v1176 = vpop.f32.mrf.mxu0
        %v1177 = vpop.f32.mrf.mxu0
        %v1178 = vadd.f32 0.0, %v1177
        %v1179 = vpop.f32.mrf.mxu0
        %1180 = vmatprep.mubr.bf16.mxu0 0
        %1181 = vmatmul.mubr.bf16.gmra.mxu0 %v1095
        %v1182 = vpop.f32.mrf.mxu0
        %v1183 = vadd.f32 0.0, %v1182
        %v1184 = vpop.f32.mrf.mxu0
        %v1185 = vpop.f32.mrf.mxu0
        %v1186 = vadd.f32 0.0, %v1185
        %v1187 = vpop.f32.mrf.mxu0
        %1188 = vmatprep.mubr.bf16.mxu0 0
        %1189 = vmatmul.mubr.bf16.gmra.mxu0 %v1098
        %v1190 = vpop.f32.mrf.mxu0
        %v1191 = vadd.f32 0.0, %v1190
        %v1192 = vpop.f32.mrf.mxu0
        %v1193 = vpop.f32.mrf.mxu0
        %v1194 = vadd.f32 0.0, %v1193
        %v1195 = vpop.f32.mrf.mxu0
        %1196 = vdwg.mxu0
        %v1197 = vadd.f32 %v898, %v1135
        %v1198 = vadd.f32 %v901, %v1138
        %v1199 = vadd.f32 %v906, %v1143
        %v1200 = vadd.f32 %v909, %v1146
        %v1201 = vadd.f32 %v914, %v1151
        %v1202 = vadd.f32 %v917, %v1154
        %v1203 = vadd.f32 %v922, %v1159
        %v1204 = vadd.f32 %v925, %v1162
        %v1205 = vadd.f32 %v930, %v1167
        %v1206 = vadd.f32 %v933, %v1170
        %v1207 = vadd.f32 %v938, %v1175
        %v1208 = vadd.f32 %v941, %v1178
        %v1209 = vadd.f32 %v946, %v1183
        %v1210 = vadd.f32 %v949, %v1186
        %v1211 = vadd.f32 %v954, %v1191
        %v1212 = vadd.f32 %v957, %v1194
        %s1213 = sadd.s32 %s413, 1
        %s1214 = smul.u32 %s1213, 3
        %s1215 = smul.addr %s1214, 4
        %s1216 = scalar_lea.vmem %s399, %s1215
        %v1217 = vld [vmem:[%s1216] sm:$0xf]
        %v1218 = vld [vmem:[%s1216 + $0x4] sm:$0xf]
        %v1219 = vld [vmem:[%s1216 + $0xc] sm:$0xf]
        %v1220 = vld [vmem:[%s1216 + $0x10] sm:$0xf]
        %v1221 = vld [vmem:[%s1216 + $0x18] sm:$0xf]
        %v1222 = vld [vmem:[%s1216 + $0x1c] sm:$0xf]
        %v1223 = vld [vmem:[%s1216 + $0x24] sm:$0xf]
        %v1224 = vld [vmem:[%s1216 + $0x28] sm:$0xf]
        %v1225 = vld [vmem:[%s1216 + $0x30] sm:$0xf]
        %v1226 = vld [vmem:[%s1216 + $0x34] sm:$0xf]
        %v1227 = vld [vmem:[%s1216 + $0x3c] sm:$0xf]
        %v1228 = vld [vmem:[%s1216 + $0x40] sm:$0xf]
        %v1229 = vld [vmem:[%s1216 + $0x48] sm:$0xf]
        %v1230 = vld [vmem:[%s1216 + $0x4c] sm:$0xf]
        %v1231 = vld [vmem:[%s1216 + $0x54] sm:$0xf]
        %v1232 = vld [vmem:[%s1216 + $0x58] sm:$0xf]
        %s1233 = scalar_lea.vmem %s2, 24
        %v1234 = vld [vmem:[%s1233] sm:$0xf]
        %v1235 = vld [vmem:[%s1233 + $0x4] sm:$0xf]
        %v1252 = vunpack.c.l.b16 %v1217
        %v1253 = vunpack.c.l.b16 %v1218
        %v1254 = vunpack.c.l.b16 %v1219
        %v1255 = vunpack.c.l.b16 %v1220
        %v1256 = vunpack.c.l.b16 %v1221
        %v1257 = vunpack.c.l.b16 %v1222
        %v1258 = vunpack.c.l.b16 %v1223
        %v1259 = vunpack.c.l.b16 %v1224
        %v1260 = vunpack.c.l.b16 %v1225
        %v1261 = vunpack.c.l.b16 %v1226
        %v1262 = vunpack.c.l.b16 %v1227
        %v1263 = vunpack.c.l.b16 %v1228
        %v1264 = vunpack.c.l.b16 %v1229
        %v1265 = vunpack.c.l.b16 %v1230
        %v1266 = vunpack.c.l.b16 %v1231
        %v1267 = vunpack.c.l.b16 %v1232
        %v1268 = vpack.c.b16 %v1253, %v1252
        %v1269 = vpack.c.b16 %v1255, %v1254
        %v1270 = vpack.c.b16 %v1257, %v1256
        %v1271 = vpack.c.b16 %v1259, %v1258
        %v1272 = vpack.c.b16 %v1261, %v1260
        %v1273 = vpack.c.b16 %v1263, %v1262
        %v1274 = vpack.c.b16 %v1265, %v1264
        %v1275 = vpack.c.b16 %v1267, %v1266
        %v1278 = vunpack.c.l.b16 %v1234
        %v1279 = vunpack.c.l.b16 %v1235
        %v1280 = vpack.c.b16 %v1279, %v1278
        %v1283 = vsel %vm671, %v1268, 0
        %v1286 = vsel %vm671, %v1269, 0
        %v1289 = vsel %vm671, %v1270, 0
        %v1292 = vsel %vm671, %v1271, 0
        %v1295 = vsel %vm671, %v1272, 0
        %v1298 = vsel %vm671, %v1273, 0
        %v1301 = vsel %vm671, %v1274, 0
        %v1304 = vsel %vm671, %v1275, 0
        %1306 = vmatprep.subr.bf16.mxu0 0
        %1307 = vmatpush1.bf16.msra.mxu0 0
        %1308 = vmatprep.subr.bf16.mxu0 0
        %1309 = vmatpush1.bf16.msra.mxu0 0
        %1310 = vmatprep.subr.bf16.mxu0 0
        %1311 = vmatpush1.bf16.msra.mxu0 0
        %1312 = vmatprep.subr.bf16.mxu0 0
        %1313 = vmatpush1.bf16.msra.mxu0 0
        %1314 = vmatprep.subr.bf16.mxu0 0
        %1315 = vmatpush1.bf16.msra.mxu0 0
        %1316 = vmatprep.subr.bf16.mxu0 0
        %1317 = vmatpush1.bf16.msra.mxu0 0
        %1318 = vmatprep.subr.bf16.mxu0 0
        %1319 = vmatpush1.bf16.msra.mxu0 0
        %1320 = vmatprep.subr.bf16.mxu0 0
        %1321 = vmatpush1.bf16.msra.mxu0 %v1280
        %1322 = vmatprep.subr.bf16.mxu0 0
        %1323 = vmatpush2.bf16.msra.mxu0 0
        %1324 = vmatprep.subr.bf16.mxu0 0
        %1325 = vmatpush2.bf16.msra.mxu0 0
        %1326 = vmatprep.subr.bf16.mxu0 0
        %1327 = vmatpush2.bf16.msra.mxu0 0
        %1328 = vmatprep.subr.bf16.mxu0 0
        %1329 = vmatpush2.bf16.msra.mxu0 0
        %1330 = vmatprep.subr.bf16.mxu0 0
        %1331 = vmatpush2.bf16.msra.mxu0 0
        %1332 = vmatprep.subr.bf16.mxu0 0
        %1333 = vmatpush2.bf16.msra.mxu0 0
        %1334 = vmatprep.subr.bf16.mxu0 0
        %1335 = vmatpush2.bf16.msra.mxu0 0
        %1336 = vmatprep.subr.bf16.mxu0 0
        %1337 = vmatpush2.bf16.msra.mxu0 0
        %1338 = vmatprep.mubr.bf16.mxu0 0
        %1339 = vmatmul.mubr.bf16.gmra.mxu0 %v1283
        %v1340 = vpop.f32.mrf.mxu0
        %v1341 = vadd.f32 0.0, %v1340
        %v1342 = vpop.f32.mrf.mxu0
        %v1343 = vpop.f32.mrf.mxu0
        %v1344 = vadd.f32 0.0, %v1343
        %v1345 = vpop.f32.mrf.mxu0
        %1346 = vmatprep.mubr.bf16.mxu0 0
        %1347 = vmatmul.mubr.bf16.gmra.mxu0 %v1286
        %v1348 = vpop.f32.mrf.mxu0
        %v1349 = vadd.f32 0.0, %v1348
        %v1350 = vpop.f32.mrf.mxu0
        %v1351 = vpop.f32.mrf.mxu0
        %v1352 = vadd.f32 0.0, %v1351
        %v1353 = vpop.f32.mrf.mxu0
        %1354 = vmatprep.mubr.bf16.mxu0 0
        %1355 = vmatmul.mubr.bf16.gmra.mxu0 %v1289
        %v1356 = vpop.f32.mrf.mxu0
        %v1357 = vadd.f32 0.0, %v1356
        %v1358 = vpop.f32.mrf.mxu0
        %v1359 = vpop.f32.mrf.mxu0
        %v1360 = vadd.f32 0.0, %v1359
        %v1361 = vpop.f32.mrf.mxu0
        %1362 = vmatprep.mubr.bf16.mxu0 0
        %1363 = vmatmul.mubr.bf16.gmra.mxu0 %v1292
        %v1364 = vpop.f32.mrf.mxu0
        %v1365 = vadd.f32 0.0, %v1364
        %v1366 = vpop.f32.mrf.mxu0
        %v1367 = vpop.f32.mrf.mxu0
        %v1368 = vadd.f32 0.0, %v1367
        %v1369 = vpop.f32.mrf.mxu0
        %1370 = vmatprep.mubr.bf16.mxu0 0
        %1371 = vmatmul.mubr.bf16.gmra.mxu0 %v1295
        %v1372 = vpop.f32.mrf.mxu0
        %v1373 = vadd.f32 0.0, %v1372
        %v1374 = vpop.f32.mrf.mxu0
        %v1375 = vpop.f32.mrf.mxu0
        %v1376 = vadd.f32 0.0, %v1375
        %v1377 = vpop.f32.mrf.mxu0
        %1378 = vmatprep.mubr.bf16.mxu0 0
        %1379 = vmatmul.mubr.bf16.gmra.mxu0 %v1298
        %v1380 = vpop.f32.mrf.mxu0
        %v1381 = vadd.f32 0.0, %v1380
        %v1382 = vpop.f32.mrf.mxu0
        %v1383 = vpop.f32.mrf.mxu0
        %v1384 = vadd.f32 0.0, %v1383
        %v1385 = vpop.f32.mrf.mxu0
        %1386 = vmatprep.mubr.bf16.mxu0 0
        %1387 = vmatmul.mubr.bf16.gmra.mxu0 %v1301
        %v1388 = vpop.f32.mrf.mxu0
        %v1389 = vadd.f32 0.0, %v1388
        %v1390 = vpop.f32.mrf.mxu0
        %v1391 = vpop.f32.mrf.mxu0
        %v1392 = vadd.f32 0.0, %v1391
        %v1393 = vpop.f32.mrf.mxu0
        %1394 = vmatprep.mubr.bf16.mxu0 0
        %1395 = vmatmul.mubr.bf16.gmra.mxu0 %v1304
        %v1396 = vpop.f32.mrf.mxu0
        %v1397 = vadd.f32 0.0, %v1396
        %v1398 = vpop.f32.mrf.mxu0
        %v1399 = vpop.f32.mrf.mxu0
        %v1400 = vadd.f32 0.0, %v1399
        %v1401 = vpop.f32.mrf.mxu0
        %1402 = vdwg.mxu0
        %v1403 = vadd.f32 %v1197, %v1341
        %v1404 = vadd.f32 %v1198, %v1344
        %v1405 = vadd.f32 %v1199, %v1349
        %v1406 = vadd.f32 %v1200, %v1352
        %v1407 = vadd.f32 %v1201, %v1357
        %v1408 = vadd.f32 %v1202, %v1360
        %v1409 = vadd.f32 %v1203, %v1365
        %v1410 = vadd.f32 %v1204, %v1368
        %v1411 = vadd.f32 %v1205, %v1373
        %v1412 = vadd.f32 %v1206, %v1376
        %v1413 = vadd.f32 %v1207, %v1381
        %v1414 = vadd.f32 %v1208, %v1384
        %v1415 = vadd.f32 %v1209, %v1389
        %v1416 = vadd.f32 %v1210, %v1392
        %v1417 = vadd.f32 %v1211, %v1397
        %v1418 = vadd.f32 %v1212, %v1400
        %v1419 = vld [vmem:[%s1216] sm:$0xf]
        %v1420 = vld [vmem:[%s1216 + $0x4] sm:$0xf]
        %v1421 = vld [vmem:[%s1216 + $0x8] sm:$0x1]
        %v1422 = vld [vmem:[%s1216 + $0xc] sm:$0xf]
        %v1423 = vld [vmem:[%s1216 + $0x10] sm:$0xf]
        %v1424 = vld [vmem:[%s1216 + $0x14] sm:$0x1]
        %v1425 = vld [vmem:[%s1216 + $0x18] sm:$0xf]
        %v1426 = vld [vmem:[%s1216 + $0x1c] sm:$0xf]
        %v1427 = vld [vmem:[%s1216 + $0x20] sm:$0x1]
        %v1428 = vld [vmem:[%s1216 + $0x24] sm:$0xf]
        %v1429 = vld [vmem:[%s1216 + $0x28] sm:$0xf]
        %v1430 = vld [vmem:[%s1216 + $0x2c] sm:$0x1]
        %v1431 = vld [vmem:[%s1216 + $0x30] sm:$0xf]
        %v1432 = vld [vmem:[%s1216 + $0x34] sm:$0xf]
        %v1433 = vld [vmem:[%s1216 + $0x38] sm:$0x1]
        %v1434 = vld [vmem:[%s1216 + $0x3c] sm:$0xf]
        %v1435 = vld [vmem:[%s1216 + $0x40] sm:$0xf]
        %v1436 = vld [vmem:[%s1216 + $0x44] sm:$0x1]
        %v1437 = vld [vmem:[%s1216 + $0x48] sm:$0xf]
        %v1438 = vld [vmem:[%s1216 + $0x4c] sm:$0xf]
        %v1439 = vld [vmem:[%s1216 + $0x50] sm:$0x1]
        %v1440 = vld [vmem:[%s1216 + $0x54] sm:$0xf]
        %v1441 = vld [vmem:[%s1216 + $0x58] sm:$0xf]
        %v1442 = vld [vmem:[%s1216 + $0x5c] sm:$0x1]
        %v1444 = vshrl.u32 %v1419, 16
        %v1446 = vrot.slane %v1444, 4
        %v1447 = vshll.u32 %v1419, 16
        %v1449 = vrot.slane %v1447, 5
        %v1450 = vor.u32 %v1446, %v1449
        %v1451 = vrot.slane %v1450, 4
        %v1453 = vshll.u32 %v1420, 16
        %v1455 = vrot.slane %v1453, 5
        %v1456 = vsel %vm445, %v1451, %v1455
        %v1457 = vshrl.u32 %v1420, 16
        %v1459 = vrot.slane %v1457, 4
        %v1460 = vor.u32 %v1459, %v1455
        %v1461 = vrot.slane %v1460, 4
        %v1463 = vshll.u32 %v1421, 16
        %v1465 = vrot.slane %v1463, 5
        %v1466 = vsel %vm445, %v1461, %v1465
        %v1468 = vshrl.u32 %v1422, 16
        %v1470 = vrot.slane %v1468, 4
        %v1471 = vshll.u32 %v1422, 16
        %v1473 = vrot.slane %v1471, 5
        %v1474 = vor.u32 %v1470, %v1473
        %v1475 = vrot.slane %v1474, 4
        %v1477 = vshll.u32 %v1423, 16
        %v1479 = vrot.slane %v1477, 5
        %v1480 = vsel %vm445, %v1475, %v1479
        %v1481 = vshrl.u32 %v1423, 16
        %v1483 = vrot.slane %v1481, 4
        %v1484 = vor.u32 %v1483, %v1479
        %v1485 = vrot.slane %v1484, 4
        %v1487 = vshll.u32 %v1424, 16
        %v1489 = vrot.slane %v1487, 5
        %v1490 = vsel %vm445, %v1485, %v1489
        %v1492 = vshrl.u32 %v1425, 16
        %v1494 = vrot.slane %v1492, 4
        %v1495 = vshll.u32 %v1425, 16
        %v1497 = vrot.slane %v1495, 5
        %v1498 = vor.u32 %v1494, %v1497
        %v1499 = vrot.slane %v1498, 4
        %v1501 = vshll.u32 %v1426, 16
        %v1503 = vrot.slane %v1501, 5
        %v1504 = vsel %vm445, %v1499, %v1503
        %v1505 = vshrl.u32 %v1426, 16
        %v1507 = vrot.slane %v1505, 4
        %v1508 = vor.u32 %v1507, %v1503
        %v1509 = vrot.slane %v1508, 4
        %v1511 = vshll.u32 %v1427, 16
        %v1513 = vrot.slane %v1511, 5
        %v1514 = vsel %vm445, %v1509, %v1513
        %v1516 = vshrl.u32 %v1428, 16
        %v1518 = vrot.slane %v1516, 4
        %v1519 = vshll.u32 %v1428, 16
        %v1521 = vrot.slane %v1519, 5
        %v1522 = vor.u32 %v1518, %v1521
        %v1523 = vrot.slane %v1522, 4
        %v1525 = vshll.u32 %v1429, 16
        %v1527 = vrot.slane %v1525, 5
        %v1528 = vsel %vm445, %v1523, %v1527
        %v1529 = vshrl.u32 %v1429, 16
        %v1531 = vrot.slane %v1529, 4
        %v1532 = vor.u32 %v1531, %v1527
        %v1533 = vrot.slane %v1532, 4
        %v1535 = vshll.u32 %v1430, 16
        %v1537 = vrot.slane %v1535, 5
        %v1538 = vsel %vm445, %v1533, %v1537
        %v1540 = vshrl.u32 %v1431, 16
        %v1542 = vrot.slane %v1540, 4
        %v1543 = vshll.u32 %v1431, 16
        %v1545 = vrot.slane %v1543, 5
        %v1546 = vor.u32 %v1542, %v1545
        %v1547 = vrot.slane %v1546, 4
        %v1549 = vshll.u32 %v1432, 16
        %v1551 = vrot.slane %v1549, 5
        %v1552 = vsel %vm445, %v1547, %v1551
        %v1553 = vshrl.u32 %v1432, 16
        %v1555 = vrot.slane %v1553, 4
        %v1556 = vor.u32 %v1555, %v1551
        %v1557 = vrot.slane %v1556, 4
        %v1559 = vshll.u32 %v1433, 16
        %v1561 = vrot.slane %v1559, 5
        %v1562 = vsel %vm445, %v1557, %v1561
        %v1564 = vshrl.u32 %v1434, 16
        %v1566 = vrot.slane %v1564, 4
        %v1567 = vshll.u32 %v1434, 16
        %v1569 = vrot.slane %v1567, 5
        %v1570 = vor.u32 %v1566, %v1569
        %v1571 = vrot.slane %v1570, 4
        %v1573 = vshll.u32 %v1435, 16
        %v1575 = vrot.slane %v1573, 5
        %v1576 = vsel %vm445, %v1571, %v1575
        %v1577 = vshrl.u32 %v1435, 16
        %v1579 = vrot.slane %v1577, 4
        %v1580 = vor.u32 %v1579, %v1575
        %v1581 = vrot.slane %v1580, 4
        %v1583 = vshll.u32 %v1436, 16
        %v1585 = vrot.slane %v1583, 5
        %v1586 = vsel %vm445, %v1581, %v1585
        %v1588 = vshrl.u32 %v1437, 16
        %v1590 = vrot.slane %v1588, 4
        %v1591 = vshll.u32 %v1437, 16
        %v1593 = vrot.slane %v1591, 5
        %v1594 = vor.u32 %v1590, %v1593
        %v1595 = vrot.slane %v1594, 4
        %v1597 = vshll.u32 %v1438, 16
        %v1599 = vrot.slane %v1597, 5
        %v1600 = vsel %vm445, %v1595, %v1599
        %v1601 = vshrl.u32 %v1438, 16
        %v1603 = vrot.slane %v1601, 4
        %v1604 = vor.u32 %v1603, %v1599
        %v1605 = vrot.slane %v1604, 4
        %v1607 = vshll.u32 %v1439, 16
        %v1609 = vrot.slane %v1607, 5
        %v1610 = vsel %vm445, %v1605, %v1609
        %v1612 = vshrl.u32 %v1440, 16
        %v1614 = vrot.slane %v1612, 4
        %v1615 = vshll.u32 %v1440, 16
        %v1617 = vrot.slane %v1615, 5
        %v1618 = vor.u32 %v1614, %v1617
        %v1619 = vrot.slane %v1618, 4
        %v1621 = vshll.u32 %v1441, 16
        %v1623 = vrot.slane %v1621, 5
        %v1624 = vsel %vm445, %v1619, %v1623
        %v1625 = vshrl.u32 %v1441, 16
        %v1627 = vrot.slane %v1625, 4
        %v1628 = vor.u32 %v1627, %v1623
        %v1629 = vrot.slane %v1628, 4
        %v1631 = vshll.u32 %v1442, 16
        %v1633 = vrot.slane %v1631, 5
        %v1634 = vsel %vm445, %v1629, %v1633
        %s1635 = scalar_lea.vmem %s2, 32
        %v1636 = vld [vmem:[%s1635] sm:$0xf]
        %v1637 = vld [vmem:[%s1635 + $0x4] sm:$0xf]
        %v1638 = vunpack.c.l.b16 %v1456
        %v1639 = vunpack.c.l.b16 %v1466
        %v1640 = vunpack.c.l.b16 %v1480
        %v1641 = vunpack.c.l.b16 %v1490
        %v1642 = vunpack.c.l.b16 %v1504
        %v1643 = vunpack.c.l.b16 %v1514
        %v1644 = vunpack.c.l.b16 %v1528
        %v1645 = vunpack.c.l.b16 %v1538
        %v1646 = vunpack.c.l.b16 %v1552
        %v1647 = vunpack.c.l.b16 %v1562
        %v1648 = vunpack.c.l.b16 %v1576
        %v1649 = vunpack.c.l.b16 %v1586
        %v1650 = vunpack.c.l.b16 %v1600
        %v1651 = vunpack.c.l.b16 %v1610
        %v1652 = vunpack.c.l.b16 %v1624
        %v1653 = vunpack.c.l.b16 %v1634
        %v1654 = vpack.c.b16 %v1639, %v1638
        %v1655 = vpack.c.b16 %v1641, %v1640
        %v1656 = vpack.c.b16 %v1643, %v1642
        %v1657 = vpack.c.b16 %v1645, %v1644
        %v1658 = vpack.c.b16 %v1647, %v1646
        %v1659 = vpack.c.b16 %v1649, %v1648
        %v1660 = vpack.c.b16 %v1651, %v1650
        %v1661 = vpack.c.b16 %v1653, %v1652
        %v1664 = vunpack.c.l.b16 %v1636
        %v1665 = vunpack.c.l.b16 %v1637
        %v1666 = vpack.c.b16 %v1665, %v1664
        %v1669 = vsel %vm671, %v1654, 0
        %v1672 = vsel %vm671, %v1655, 0
        %v1675 = vsel %vm671, %v1656, 0
        %v1678 = vsel %vm671, %v1657, 0
        %v1681 = vsel %vm671, %v1658, 0
        %v1684 = vsel %vm671, %v1659, 0
        %v1687 = vsel %vm671, %v1660, 0
        %v1690 = vsel %vm671, %v1661, 0
        %1692 = vmatprep.subr.bf16.mxu0 0
        %1693 = vmatpush1.bf16.msra.mxu0 0
        %1694 = vmatprep.subr.bf16.mxu0 0
        %1695 = vmatpush1.bf16.msra.mxu0 0
        %1696 = vmatprep.subr.bf16.mxu0 0
        %1697 = vmatpush1.bf16.msra.mxu0 0
        %1698 = vmatprep.subr.bf16.mxu0 0
        %1699 = vmatpush1.bf16.msra.mxu0 0
        %1700 = vmatprep.subr.bf16.mxu0 0
        %1701 = vmatpush1.bf16.msra.mxu0 0
        %1702 = vmatprep.subr.bf16.mxu0 0
        %1703 = vmatpush1.bf16.msra.mxu0 0
        %1704 = vmatprep.subr.bf16.mxu0 0
        %1705 = vmatpush1.bf16.msra.mxu0 0
        %1706 = vmatprep.subr.bf16.mxu0 0
        %1707 = vmatpush1.bf16.msra.mxu0 %v1666
        %1708 = vmatprep.subr.bf16.mxu0 0
        %1709 = vmatpush2.bf16.msra.mxu0 0
        %1710 = vmatprep.subr.bf16.mxu0 0
        %1711 = vmatpush2.bf16.msra.mxu0 0
        %1712 = vmatprep.subr.bf16.mxu0 0
        %1713 = vmatpush2.bf16.msra.mxu0 0
        %1714 = vmatprep.subr.bf16.mxu0 0
        %1715 = vmatpush2.bf16.msra.mxu0 0
        %1716 = vmatprep.subr.bf16.mxu0 0
        %1717 = vmatpush2.bf16.msra.mxu0 0
        %1718 = vmatprep.subr.bf16.mxu0 0
        %1719 = vmatpush2.bf16.msra.mxu0 0
        %1720 = vmatprep.subr.bf16.mxu0 0
        %1721 = vmatpush2.bf16.msra.mxu0 0
        %1722 = vmatprep.subr.bf16.mxu0 0
        %1723 = vmatpush2.bf16.msra.mxu0 0
        %1724 = vmatprep.mubr.bf16.mxu0 0
        %1725 = vmatmul.mubr.bf16.gmra.mxu0 %v1669
        %v1726 = vpop.f32.mrf.mxu0
        %v1727 = vadd.f32 0.0, %v1726
        %v1728 = vpop.f32.mrf.mxu0
        %v1729 = vpop.f32.mrf.mxu0
        %v1730 = vadd.f32 0.0, %v1729
        %v1731 = vpop.f32.mrf.mxu0
        %1732 = vmatprep.mubr.bf16.mxu0 0
        %1733 = vmatmul.mubr.bf16.gmra.mxu0 %v1672
        %v1734 = vpop.f32.mrf.mxu0
        %v1735 = vadd.f32 0.0, %v1734
        %v1736 = vpop.f32.mrf.mxu0
        %v1737 = vpop.f32.mrf.mxu0
        %v1738 = vadd.f32 0.0, %v1737
        %v1739 = vpop.f32.mrf.mxu0
        %1740 = vmatprep.mubr.bf16.mxu0 0
        %1741 = vmatmul.mubr.bf16.gmra.mxu0 %v1675
        %v1742 = vpop.f32.mrf.mxu0
        %v1743 = vadd.f32 0.0, %v1742
        %v1744 = vpop.f32.mrf.mxu0
        %v1745 = vpop.f32.mrf.mxu0
        %v1746 = vadd.f32 0.0, %v1745
        %v1747 = vpop.f32.mrf.mxu0
        %1748 = vmatprep.mubr.bf16.mxu0 0
        %1749 = vmatmul.mubr.bf16.gmra.mxu0 %v1678
        %v1750 = vpop.f32.mrf.mxu0
        %v1751 = vadd.f32 0.0, %v1750
        %v1752 = vpop.f32.mrf.mxu0
        %v1753 = vpop.f32.mrf.mxu0
        %v1754 = vadd.f32 0.0, %v1753
        %v1755 = vpop.f32.mrf.mxu0
        %1756 = vmatprep.mubr.bf16.mxu0 0
        %1757 = vmatmul.mubr.bf16.gmra.mxu0 %v1681
        %v1758 = vpop.f32.mrf.mxu0
        %v1759 = vadd.f32 0.0, %v1758
        %v1760 = vpop.f32.mrf.mxu0
        %v1761 = vpop.f32.mrf.mxu0
        %v1762 = vadd.f32 0.0, %v1761
        %v1763 = vpop.f32.mrf.mxu0
        %1764 = vmatprep.mubr.bf16.mxu0 0
        %1765 = vmatmul.mubr.bf16.gmra.mxu0 %v1684
        %v1766 = vpop.f32.mrf.mxu0
        %v1767 = vadd.f32 0.0, %v1766
        %v1768 = vpop.f32.mrf.mxu0
        %v1769 = vpop.f32.mrf.mxu0
        %v1770 = vadd.f32 0.0, %v1769
        %v1771 = vpop.f32.mrf.mxu0
        %1772 = vmatprep.mubr.bf16.mxu0 0
        %1773 = vmatmul.mubr.bf16.gmra.mxu0 %v1687
        %v1774 = vpop.f32.mrf.mxu0
        %v1775 = vadd.f32 0.0, %v1774
        %v1776 = vpop.f32.mrf.mxu0
        %v1777 = vpop.f32.mrf.mxu0
        %v1778 = vadd.f32 0.0, %v1777
        %v1779 = vpop.f32.mrf.mxu0
        %1780 = vmatprep.mubr.bf16.mxu0 0
        %1781 = vmatmul.mubr.bf16.gmra.mxu0 %v1690
        %v1782 = vpop.f32.mrf.mxu0
        %v1783 = vadd.f32 0.0, %v1782
        %v1784 = vpop.f32.mrf.mxu0
        %v1785 = vpop.f32.mrf.mxu0
        %v1786 = vadd.f32 0.0, %v1785
        %v1787 = vpop.f32.mrf.mxu0
        %1788 = vdwg.mxu0
        %v1789 = vadd.f32 %v1403, %v1727
        %v1790 = vadd.f32 %v1404, %v1730
        %v1791 = vadd.f32 %v1405, %v1735
        %v1792 = vadd.f32 %v1406, %v1738
        %v1793 = vadd.f32 %v1407, %v1743
        %v1794 = vadd.f32 %v1408, %v1746
        %v1795 = vadd.f32 %v1409, %v1751
        %v1796 = vadd.f32 %v1410, %v1754
        %v1797 = vadd.f32 %v1411, %v1759
        %v1798 = vadd.f32 %v1412, %v1762
        %v1799 = vadd.f32 %v1413, %v1767
        %v1800 = vadd.f32 %v1414, %v1770
        %v1801 = vadd.f32 %v1415, %v1775
        %v1802 = vadd.f32 %v1416, %v1778
        %v1803 = vadd.f32 %v1417, %v1783
        %v1804 = vadd.f32 %v1418, %v1786
        %v1805 = vld [vmem:[%s1216] sm:$0xe]
        %v1806 = vld [vmem:[%s1216 + $0xc] sm:$0xe]
        %v1807 = vld [vmem:[%s1216 + $0x18] sm:$0xe]
        %v1808 = vld [vmem:[%s1216 + $0x24] sm:$0xe]
        %v1809 = vld [vmem:[%s1216 + $0x30] sm:$0xe]
        %v1810 = vld [vmem:[%s1216 + $0x3c] sm:$0xe]
        %v1811 = vld [vmem:[%s1216 + $0x48] sm:$0xe]
        %v1812 = vld [vmem:[%s1216 + $0x54] sm:$0xe]
        %v1837 = vrot.slane %v1805, 5
        %v1838 = vrot.slane %v1837, 4
        %v1839 = vrot.slane %v1420, 5
        %v1840 = vsel %vm986, %v1838, %v1839
        %v1841 = vrot.slane %v1839, 4
        %v1842 = vrot.slane %v1421, 5
        %v1843 = vsel %vm986, %v1841, %v1842
        %v1844 = vrot.slane %v1806, 5
        %v1845 = vrot.slane %v1844, 4
        %v1846 = vrot.slane %v1423, 5
        %v1847 = vsel %vm986, %v1845, %v1846
        %v1848 = vrot.slane %v1846, 4
        %v1849 = vrot.slane %v1424, 5
        %v1850 = vsel %vm986, %v1848, %v1849
        %v1851 = vrot.slane %v1807, 5
        %v1852 = vrot.slane %v1851, 4
        %v1853 = vrot.slane %v1426, 5
        %v1854 = vsel %vm986, %v1852, %v1853
        %v1855 = vrot.slane %v1853, 4
        %v1856 = vrot.slane %v1427, 5
        %v1857 = vsel %vm986, %v1855, %v1856
        %v1858 = vrot.slane %v1808, 5
        %v1859 = vrot.slane %v1858, 4
        %v1860 = vrot.slane %v1429, 5
        %v1861 = vsel %vm986, %v1859, %v1860
        %v1862 = vrot.slane %v1860, 4
        %v1863 = vrot.slane %v1430, 5
        %v1864 = vsel %vm986, %v1862, %v1863
        %v1865 = vrot.slane %v1809, 5
        %v1866 = vrot.slane %v1865, 4
        %v1867 = vrot.slane %v1432, 5
        %v1868 = vsel %vm986, %v1866, %v1867
        %v1869 = vrot.slane %v1867, 4
        %v1870 = vrot.slane %v1433, 5
        %v1871 = vsel %vm986, %v1869, %v1870
        %v1872 = vrot.slane %v1810, 5
        %v1873 = vrot.slane %v1872, 4
        %v1874 = vrot.slane %v1435, 5
        %v1875 = vsel %vm986, %v1873, %v1874
        %v1876 = vrot.slane %v1874, 4
        %v1877 = vrot.slane %v1436, 5
        %v1878 = vsel %vm986, %v1876, %v1877
        %v1879 = vrot.slane %v1811, 5
        %v1880 = vrot.slane %v1879, 4
        %v1881 = vrot.slane %v1438, 5
        %v1882 = vsel %vm986, %v1880, %v1881
        %v1883 = vrot.slane %v1881, 4
        %v1884 = vrot.slane %v1439, 5
        %v1885 = vsel %vm986, %v1883, %v1884
        %v1886 = vrot.slane %v1812, 5
        %v1887 = vrot.slane %v1886, 4
        %v1888 = vrot.slane %v1441, 5
        %v1889 = vsel %vm986, %v1887, %v1888
        %v1890 = vrot.slane %v1888, 4
        %v1891 = vrot.slane %v1442, 5
        %v1892 = vsel %vm986, %v1890, %v1891
        %s1893 = scalar_lea.vmem %s2, 40
        %v1894 = vld [vmem:[%s1893] sm:$0xf]
        %v1895 = vld [vmem:[%s1893 + $0x4] sm:$0xf]
        %v1896 = vunpack.c.l.b16 %v1840
        %v1897 = vunpack.c.l.b16 %v1843
        %v1898 = vunpack.c.l.b16 %v1847
        %v1899 = vunpack.c.l.b16 %v1850
        %v1900 = vunpack.c.l.b16 %v1854
        %v1901 = vunpack.c.l.b16 %v1857
        %v1902 = vunpack.c.l.b16 %v1861
        %v1903 = vunpack.c.l.b16 %v1864
        %v1904 = vunpack.c.l.b16 %v1868
        %v1905 = vunpack.c.l.b16 %v1871
        %v1906 = vunpack.c.l.b16 %v1875
        %v1907 = vunpack.c.l.b16 %v1878
        %v1908 = vunpack.c.l.b16 %v1882
        %v1909 = vunpack.c.l.b16 %v1885
        %v1910 = vunpack.c.l.b16 %v1889
        %v1911 = vunpack.c.l.b16 %v1892
        %v1912 = vpack.c.b16 %v1897, %v1896
        %v1913 = vpack.c.b16 %v1899, %v1898
        %v1914 = vpack.c.b16 %v1901, %v1900
        %v1915 = vpack.c.b16 %v1903, %v1902
        %v1916 = vpack.c.b16 %v1905, %v1904
        %v1917 = vpack.c.b16 %v1907, %v1906
        %v1918 = vpack.c.b16 %v1909, %v1908
        %v1919 = vpack.c.b16 %v1911, %v1910
        %v1922 = vunpack.c.l.b16 %v1894
        %v1923 = vunpack.c.l.b16 %v1895
        %v1924 = vpack.c.b16 %v1923, %v1922
        %v1927 = vsel %vm671, %v1912, 0
        %v1930 = vsel %vm671, %v1913, 0
        %v1933 = vsel %vm671, %v1914, 0
        %v1936 = vsel %vm671, %v1915, 0
        %v1939 = vsel %vm671, %v1916, 0
        %v1942 = vsel %vm671, %v1917, 0
        %v1945 = vsel %vm671, %v1918, 0
        %v1948 = vsel %vm671, %v1919, 0
        %1950 = vmatprep.subr.bf16.mxu0 0
        %1951 = vmatpush1.bf16.msra.mxu0 0
        %1952 = vmatprep.subr.bf16.mxu0 0
        %1953 = vmatpush1.bf16.msra.mxu0 0
        %1954 = vmatprep.subr.bf16.mxu0 0
        %1955 = vmatpush1.bf16.msra.mxu0 0
        %1956 = vmatprep.subr.bf16.mxu0 0
        %1957 = vmatpush1.bf16.msra.mxu0 0
        %1958 = vmatprep.subr.bf16.mxu0 0
        %1959 = vmatpush1.bf16.msra.mxu0 0
        %1960 = vmatprep.subr.bf16.mxu0 0
        %1961 = vmatpush1.bf16.msra.mxu0 0
        %1962 = vmatprep.subr.bf16.mxu0 0
        %1963 = vmatpush1.bf16.msra.mxu0 0
        %1964 = vmatprep.subr.bf16.mxu0 0
        %1965 = vmatpush1.bf16.msra.mxu0 %v1924
        %1966 = vmatprep.subr.bf16.mxu0 0
        %1967 = vmatpush2.bf16.msra.mxu0 0
        %1968 = vmatprep.subr.bf16.mxu0 0
        %1969 = vmatpush2.bf16.msra.mxu0 0
        %1970 = vmatprep.subr.bf16.mxu0 0
        %1971 = vmatpush2.bf16.msra.mxu0 0
        %1972 = vmatprep.subr.bf16.mxu0 0
        %1973 = vmatpush2.bf16.msra.mxu0 0
        %1974 = vmatprep.subr.bf16.mxu0 0
        %1975 = vmatpush2.bf16.msra.mxu0 0
        %1976 = vmatprep.subr.bf16.mxu0 0
        %1977 = vmatpush2.bf16.msra.mxu0 0
        %1978 = vmatprep.subr.bf16.mxu0 0
        %1979 = vmatpush2.bf16.msra.mxu0 0
        %1980 = vmatprep.subr.bf16.mxu0 0
        %1981 = vmatpush2.bf16.msra.mxu0 0
        %1982 = vmatprep.mubr.bf16.mxu0 0
        %1983 = vmatmul.mubr.bf16.gmra.mxu0 %v1927
        %v1984 = vpop.f32.mrf.mxu0
        %v1985 = vadd.f32 0.0, %v1984
        %v1986 = vpop.f32.mrf.mxu0
        %v1987 = vpop.f32.mrf.mxu0
        %v1988 = vadd.f32 0.0, %v1987
        %v1989 = vpop.f32.mrf.mxu0
        %1990 = vmatprep.mubr.bf16.mxu0 0
        %1991 = vmatmul.mubr.bf16.gmra.mxu0 %v1930
        %v1992 = vpop.f32.mrf.mxu0
        %v1993 = vadd.f32 0.0, %v1992
        %v1994 = vpop.f32.mrf.mxu0
        %v1995 = vpop.f32.mrf.mxu0
        %v1996 = vadd.f32 0.0, %v1995
        %v1997 = vpop.f32.mrf.mxu0
        %1998 = vmatprep.mubr.bf16.mxu0 0
        %1999 = vmatmul.mubr.bf16.gmra.mxu0 %v1933
        %v2000 = vpop.f32.mrf.mxu0
        %v2001 = vadd.f32 0.0, %v2000
        %v2002 = vpop.f32.mrf.mxu0
        %v2003 = vpop.f32.mrf.mxu0
        %v2004 = vadd.f32 0.0, %v2003
        %v2005 = vpop.f32.mrf.mxu0
        %2006 = vmatprep.mubr.bf16.mxu0 0
        %2007 = vmatmul.mubr.bf16.gmra.mxu0 %v1936
        %v2008 = vpop.f32.mrf.mxu0
        %v2009 = vadd.f32 0.0, %v2008
        %v2010 = vpop.f32.mrf.mxu0
        %v2011 = vpop.f32.mrf.mxu0
        %v2012 = vadd.f32 0.0, %v2011
        %v2013 = vpop.f32.mrf.mxu0
        %2014 = vmatprep.mubr.bf16.mxu0 0
        %2015 = vmatmul.mubr.bf16.gmra.mxu0 %v1939
        %v2016 = vpop.f32.mrf.mxu0
        %v2017 = vadd.f32 0.0, %v2016
        %v2018 = vpop.f32.mrf.mxu0
        %v2019 = vpop.f32.mrf.mxu0
        %v2020 = vadd.f32 0.0, %v2019
        %v2021 = vpop.f32.mrf.mxu0
        %2022 = vmatprep.mubr.bf16.mxu0 0
        %2023 = vmatmul.mubr.bf16.gmra.mxu0 %v1942
        %v2024 = vpop.f32.mrf.mxu0
        %v2025 = vadd.f32 0.0, %v2024
        %v2026 = vpop.f32.mrf.mxu0
        %v2027 = vpop.f32.mrf.mxu0
        %v2028 = vadd.f32 0.0, %v2027
        %v2029 = vpop.f32.mrf.mxu0
        %2030 = vmatprep.mubr.bf16.mxu0 0
        %2031 = vmatmul.mubr.bf16.gmra.mxu0 %v1945
        %v2032 = vpop.f32.mrf.mxu0
        %v2033 = vadd.f32 0.0, %v2032
        %v2034 = vpop.f32.mrf.mxu0
        %v2035 = vpop.f32.mrf.mxu0
        %v2036 = vadd.f32 0.0, %v2035
        %v2037 = vpop.f32.mrf.mxu0
        %2038 = vmatprep.mubr.bf16.mxu0 0
        %2039 = vmatmul.mubr.bf16.gmra.mxu0 %v1948
        %v2040 = vpop.f32.mrf.mxu0
        %v2041 = vadd.f32 0.0, %v2040
        %v2042 = vpop.f32.mrf.mxu0
        %v2043 = vpop.f32.mrf.mxu0
        %v2044 = vadd.f32 0.0, %v2043
        %v2045 = vpop.f32.mrf.mxu0
        %2046 = vdwg.mxu0
        %v2047 = vadd.f32 %v1789, %v1985
        %v2048 = vadd.f32 %v1790, %v1988
        %v2049 = vadd.f32 %v1791, %v1993
        %v2050 = vadd.f32 %v1792, %v1996
        %v2051 = vadd.f32 %v1793, %v2001
        %v2052 = vadd.f32 %v1794, %v2004
        %v2053 = vadd.f32 %v1795, %v2009
        %v2054 = vadd.f32 %v1796, %v2012
        %v2055 = vadd.f32 %v1797, %v2017
        %v2056 = vadd.f32 %v1798, %v2020
        %v2057 = vadd.f32 %v1799, %v2025
        %v2058 = vadd.f32 %v1800, %v2028
        %v2059 = vadd.f32 %v1801, %v2033
        %v2060 = vadd.f32 %v1802, %v2036
        %v2061 = vadd.f32 %v1803, %v2041
        %v2062 = vadd.f32 %v1804, %v2044
        %s2063 = sadd.s32 %s413, 2
        %s2064 = smul.u32 %s2063, 3
        %s2065 = smul.addr %s2064, 4
        %s2066 = scalar_lea.vmem %s399, %s2065
        %v2067 = vld [vmem:[%s2066] sm:$0xf]
        %v2068 = vld [vmem:[%s2066 + $0x4] sm:$0xf]
        %v2069 = vld [vmem:[%s2066 + $0xc] sm:$0xf]
        %v2070 = vld [vmem:[%s2066 + $0x10] sm:$0xf]
        %v2071 = vld [vmem:[%s2066 + $0x18] sm:$0xf]
        %v2072 = vld [vmem:[%s2066 + $0x1c] sm:$0xf]
        %v2073 = vld [vmem:[%s2066 + $0x24] sm:$0xf]
        %v2074 = vld [vmem:[%s2066 + $0x28] sm:$0xf]
        %v2075 = vld [vmem:[%s2066 + $0x30] sm:$0xf]
        %v2076 = vld [vmem:[%s2066 + $0x34] sm:$0xf]
        %v2077 = vld [vmem:[%s2066 + $0x3c] sm:$0xf]
        %v2078 = vld [vmem:[%s2066 + $0x40] sm:$0xf]
        %v2079 = vld [vmem:[%s2066 + $0x48] sm:$0xf]
        %v2080 = vld [vmem:[%s2066 + $0x4c] sm:$0xf]
        %v2081 = vld [vmem:[%s2066 + $0x54] sm:$0xf]
        %v2082 = vld [vmem:[%s2066 + $0x58] sm:$0xf]
        %s2083 = scalar_lea.vmem %s2, 48
        %v2084 = vld [vmem:[%s2083] sm:$0xf]
        %v2085 = vld [vmem:[%s2083 + $0x4] sm:$0xf]
        %v2102 = vunpack.c.l.b16 %v2067
        %v2103 = vunpack.c.l.b16 %v2068
        %v2104 = vunpack.c.l.b16 %v2069
        %v2105 = vunpack.c.l.b16 %v2070
        %v2106 = vunpack.c.l.b16 %v2071
        %v2107 = vunpack.c.l.b16 %v2072
        %v2108 = vunpack.c.l.b16 %v2073
        %v2109 = vunpack.c.l.b16 %v2074
        %v2110 = vunpack.c.l.b16 %v2075
        %v2111 = vunpack.c.l.b16 %v2076
        %v2112 = vunpack.c.l.b16 %v2077
        %v2113 = vunpack.c.l.b16 %v2078
        %v2114 = vunpack.c.l.b16 %v2079
        %v2115 = vunpack.c.l.b16 %v2080
        %v2116 = vunpack.c.l.b16 %v2081
        %v2117 = vunpack.c.l.b16 %v2082
        %v2118 = vpack.c.b16 %v2103, %v2102
        %v2119 = vpack.c.b16 %v2105, %v2104
        %v2120 = vpack.c.b16 %v2107, %v2106
        %v2121 = vpack.c.b16 %v2109, %v2108
        %v2122 = vpack.c.b16 %v2111, %v2110
        %v2123 = vpack.c.b16 %v2113, %v2112
        %v2124 = vpack.c.b16 %v2115, %v2114
        %v2125 = vpack.c.b16 %v2117, %v2116
        %v2128 = vunpack.c.l.b16 %v2084
        %v2129 = vunpack.c.l.b16 %v2085
        %v2130 = vpack.c.b16 %v2129, %v2128
        %v2133 = vsel %vm671, %v2118, 0
        %v2136 = vsel %vm671, %v2119, 0
        %v2139 = vsel %vm671, %v2120, 0
        %v2142 = vsel %vm671, %v2121, 0
        %v2145 = vsel %vm671, %v2122, 0
        %v2148 = vsel %vm671, %v2123, 0
        %v2151 = vsel %vm671, %v2124, 0
        %v2154 = vsel %vm671, %v2125, 0
        %2156 = vmatprep.subr.bf16.mxu0 0
        %2157 = vmatpush1.bf16.msra.mxu0 0
        %2158 = vmatprep.subr.bf16.mxu0 0
        %2159 = vmatpush1.bf16.msra.mxu0 0
        %2160 = vmatprep.subr.bf16.mxu0 0
        %2161 = vmatpush1.bf16.msra.mxu0 0
        %2162 = vmatprep.subr.bf16.mxu0 0
        %2163 = vmatpush1.bf16.msra.mxu0 0
        %2164 = vmatprep.subr.bf16.mxu0 0
        %2165 = vmatpush1.bf16.msra.mxu0 0
        %2166 = vmatprep.subr.bf16.mxu0 0
        %2167 = vmatpush1.bf16.msra.mxu0 0
        %2168 = vmatprep.subr.bf16.mxu0 0
        %2169 = vmatpush1.bf16.msra.mxu0 0
        %2170 = vmatprep.subr.bf16.mxu0 0
        %2171 = vmatpush1.bf16.msra.mxu0 %v2130
        %2172 = vmatprep.subr.bf16.mxu0 0
        %2173 = vmatpush2.bf16.msra.mxu0 0
        %2174 = vmatprep.subr.bf16.mxu0 0
        %2175 = vmatpush2.bf16.msra.mxu0 0
        %2176 = vmatprep.subr.bf16.mxu0 0
        %2177 = vmatpush2.bf16.msra.mxu0 0
        %2178 = vmatprep.subr.bf16.mxu0 0
        %2179 = vmatpush2.bf16.msra.mxu0 0
        %2180 = vmatprep.subr.bf16.mxu0 0
        %2181 = vmatpush2.bf16.msra.mxu0 0
        %2182 = vmatprep.subr.bf16.mxu0 0
        %2183 = vmatpush2.bf16.msra.mxu0 0
        %2184 = vmatprep.subr.bf16.mxu0 0
        %2185 = vmatpush2.bf16.msra.mxu0 0
        %2186 = vmatprep.subr.bf16.mxu0 0
        %2187 = vmatpush2.bf16.msra.mxu0 0
        %2188 = vmatprep.mubr.bf16.mxu0 0
        %2189 = vmatmul.mubr.bf16.gmra.mxu0 %v2133
        %v2190 = vpop.f32.mrf.mxu0
        %v2191 = vadd.f32 0.0, %v2190
        %v2192 = vpop.f32.mrf.mxu0
        %v2193 = vpop.f32.mrf.mxu0
        %v2194 = vadd.f32 0.0, %v2193
        %v2195 = vpop.f32.mrf.mxu0
        %2196 = vmatprep.mubr.bf16.mxu0 0
        %2197 = vmatmul.mubr.bf16.gmra.mxu0 %v2136
        %v2198 = vpop.f32.mrf.mxu0
        %v2199 = vadd.f32 0.0, %v2198
        %v2200 = vpop.f32.mrf.mxu0
        %v2201 = vpop.f32.mrf.mxu0
        %v2202 = vadd.f32 0.0, %v2201
        %v2203 = vpop.f32.mrf.mxu0
        %2204 = vmatprep.mubr.bf16.mxu0 0
        %2205 = vmatmul.mubr.bf16.gmra.mxu0 %v2139
        %v2206 = vpop.f32.mrf.mxu0
        %v2207 = vadd.f32 0.0, %v2206
        %v2208 = vpop.f32.mrf.mxu0
        %v2209 = vpop.f32.mrf.mxu0
        %v2210 = vadd.f32 0.0, %v2209
        %v2211 = vpop.f32.mrf.mxu0
        %2212 = vmatprep.mubr.bf16.mxu0 0
        %2213 = vmatmul.mubr.bf16.gmra.mxu0 %v2142
        %v2214 = vpop.f32.mrf.mxu0
        %v2215 = vadd.f32 0.0, %v2214
        %v2216 = vpop.f32.mrf.mxu0
        %v2217 = vpop.f32.mrf.mxu0
        %v2218 = vadd.f32 0.0, %v2217
        %v2219 = vpop.f32.mrf.mxu0
        %2220 = vmatprep.mubr.bf16.mxu0 0
        %2221 = vmatmul.mubr.bf16.gmra.mxu0 %v2145
        %v2222 = vpop.f32.mrf.mxu0
        %v2223 = vadd.f32 0.0, %v2222
        %v2224 = vpop.f32.mrf.mxu0
        %v2225 = vpop.f32.mrf.mxu0
        %v2226 = vadd.f32 0.0, %v2225
        %v2227 = vpop.f32.mrf.mxu0
        %2228 = vmatprep.mubr.bf16.mxu0 0
        %2229 = vmatmul.mubr.bf16.gmra.mxu0 %v2148
        %v2230 = vpop.f32.mrf.mxu0
        %v2231 = vadd.f32 0.0, %v2230
        %v2232 = vpop.f32.mrf.mxu0
        %v2233 = vpop.f32.mrf.mxu0
        %v2234 = vadd.f32 0.0, %v2233
        %v2235 = vpop.f32.mrf.mxu0
        %2236 = vmatprep.mubr.bf16.mxu0 0
        %2237 = vmatmul.mubr.bf16.gmra.mxu0 %v2151
        %v2238 = vpop.f32.mrf.mxu0
        %v2239 = vadd.f32 0.0, %v2238
        %v2240 = vpop.f32.mrf.mxu0
        %v2241 = vpop.f32.mrf.mxu0
        %v2242 = vadd.f32 0.0, %v2241
        %v2243 = vpop.f32.mrf.mxu0
        %2244 = vmatprep.mubr.bf16.mxu0 0
        %2245 = vmatmul.mubr.bf16.gmra.mxu0 %v2154
        %v2246 = vpop.f32.mrf.mxu0
        %v2247 = vadd.f32 0.0, %v2246
        %v2248 = vpop.f32.mrf.mxu0
        %v2249 = vpop.f32.mrf.mxu0
        %v2250 = vadd.f32 0.0, %v2249
        %v2251 = vpop.f32.mrf.mxu0
        %2252 = vdwg.mxu0
        %v2253 = vadd.f32 %v2047, %v2191
        %v2254 = vadd.f32 %v2048, %v2194
        %v2255 = vadd.f32 %v2049, %v2199
        %v2256 = vadd.f32 %v2050, %v2202
        %v2257 = vadd.f32 %v2051, %v2207
        %v2258 = vadd.f32 %v2052, %v2210
        %v2259 = vadd.f32 %v2053, %v2215
        %v2260 = vadd.f32 %v2054, %v2218
        %v2261 = vadd.f32 %v2055, %v2223
        %v2262 = vadd.f32 %v2056, %v2226
        %v2263 = vadd.f32 %v2057, %v2231
        %v2264 = vadd.f32 %v2058, %v2234
        %v2265 = vadd.f32 %v2059, %v2239
        %v2266 = vadd.f32 %v2060, %v2242
        %v2267 = vadd.f32 %v2061, %v2247
        %v2268 = vadd.f32 %v2062, %v2250
        %v2269 = vld [vmem:[%s2066] sm:$0xf]
        %v2270 = vld [vmem:[%s2066 + $0x4] sm:$0xf]
        %v2271 = vld [vmem:[%s2066 + $0x8] sm:$0x1]
        %v2272 = vld [vmem:[%s2066 + $0xc] sm:$0xf]
        %v2273 = vld [vmem:[%s2066 + $0x10] sm:$0xf]
        %v2274 = vld [vmem:[%s2066 + $0x14] sm:$0x1]
        %v2275 = vld [vmem:[%s2066 + $0x18] sm:$0xf]
        %v2276 = vld [vmem:[%s2066 + $0x1c] sm:$0xf]
        %v2277 = vld [vmem:[%s2066 + $0x20] sm:$0x1]
        %v2278 = vld [vmem:[%s2066 + $0x24] sm:$0xf]
        %v2279 = vld [vmem:[%s2066 + $0x28] sm:$0xf]
        %v2280 = vld [vmem:[%s2066 + $0x2c] sm:$0x1]
        %v2281 = vld [vmem:[%s2066 + $0x30] sm:$0xf]
        %v2282 = vld [vmem:[%s2066 + $0x34] sm:$0xf]
        %v2283 = vld [vmem:[%s2066 + $0x38] sm:$0x1]
        %v2284 = vld [vmem:[%s2066 + $0x3c] sm:$0xf]
        %v2285 = vld [vmem:[%s2066 + $0x40] sm:$0xf]
        %v2286 = vld [vmem:[%s2066 + $0x44] sm:$0x1]
        %v2287 = vld [vmem:[%s2066 + $0x48] sm:$0xf]
        %v2288 = vld [vmem:[%s2066 + $0x4c] sm:$0xf]
        %v2289 = vld [vmem:[%s2066 + $0x50] sm:$0x1]
        %v2290 = vld [vmem:[%s2066 + $0x54] sm:$0xf]
        %v2291 = vld [vmem:[%s2066 + $0x58] sm:$0xf]
        %v2292 = vld [vmem:[%s2066 + $0x5c] sm:$0x1]
        %v2294 = vshrl.u32 %v2269, 16
        %v2296 = vrot.slane %v2294, 4
        %v2297 = vshll.u32 %v2269, 16
        %v2299 = vrot.slane %v2297, 5
        %v2300 = vor.u32 %v2296, %v2299
        %v2301 = vrot.slane %v2300, 4
        %v2303 = vshll.u32 %v2270, 16
        %v2305 = vrot.slane %v2303, 5
        %v2306 = vsel %vm445, %v2301, %v2305
        %v2307 = vshrl.u32 %v2270, 16
        %v2309 = vrot.slane %v2307, 4
        %v2310 = vor.u32 %v2309, %v2305
        %v2311 = vrot.slane %v2310, 4
        %v2313 = vshll.u32 %v2271, 16
        %v2315 = vrot.slane %v2313, 5
        %v2316 = vsel %vm445, %v2311, %v2315
        %v2318 = vshrl.u32 %v2272, 16
        %v2320 = vrot.slane %v2318, 4
        %v2321 = vshll.u32 %v2272, 16
        %v2323 = vrot.slane %v2321, 5
        %v2324 = vor.u32 %v2320, %v2323
        %v2325 = vrot.slane %v2324, 4
        %v2327 = vshll.u32 %v2273, 16
        %v2329 = vrot.slane %v2327, 5
        %v2330 = vsel %vm445, %v2325, %v2329
        %v2331 = vshrl.u32 %v2273, 16
        %v2333 = vrot.slane %v2331, 4
        %v2334 = vor.u32 %v2333, %v2329
        %v2335 = vrot.slane %v2334, 4
        %v2337 = vshll.u32 %v2274, 16
        %v2339 = vrot.slane %v2337, 5
        %v2340 = vsel %vm445, %v2335, %v2339
        %v2342 = vshrl.u32 %v2275, 16
        %v2344 = vrot.slane %v2342, 4
        %v2345 = vshll.u32 %v2275, 16
        %v2347 = vrot.slane %v2345, 5
        %v2348 = vor.u32 %v2344, %v2347
        %v2349 = vrot.slane %v2348, 4
        %v2351 = vshll.u32 %v2276, 16
        %v2353 = vrot.slane %v2351, 5
        %v2354 = vsel %vm445, %v2349, %v2353
        %v2355 = vshrl.u32 %v2276, 16
        %v2357 = vrot.slane %v2355, 4
        %v2358 = vor.u32 %v2357, %v2353
        %v2359 = vrot.slane %v2358, 4
        %v2361 = vshll.u32 %v2277, 16
        %v2363 = vrot.slane %v2361, 5
        %v2364 = vsel %vm445, %v2359, %v2363
        %v2366 = vshrl.u32 %v2278, 16
        %v2368 = vrot.slane %v2366, 4
        %v2369 = vshll.u32 %v2278, 16
        %v2371 = vrot.slane %v2369, 5
        %v2372 = vor.u32 %v2368, %v2371
        %v2373 = vrot.slane %v2372, 4
        %v2375 = vshll.u32 %v2279, 16
        %v2377 = vrot.slane %v2375, 5
        %v2378 = vsel %vm445, %v2373, %v2377
        %v2379 = vshrl.u32 %v2279, 16
        %v2381 = vrot.slane %v2379, 4
        %v2382 = vor.u32 %v2381, %v2377
        %v2383 = vrot.slane %v2382, 4
        %v2385 = vshll.u32 %v2280, 16
        %v2387 = vrot.slane %v2385, 5
        %v2388 = vsel %vm445, %v2383, %v2387
        %v2390 = vshrl.u32 %v2281, 16
        %v2392 = vrot.slane %v2390, 4
        %v2393 = vshll.u32 %v2281, 16
        %v2395 = vrot.slane %v2393, 5
        %v2396 = vor.u32 %v2392, %v2395
        %v2397 = vrot.slane %v2396, 4
        %v2399 = vshll.u32 %v2282, 16
        %v2401 = vrot.slane %v2399, 5
        %v2402 = vsel %vm445, %v2397, %v2401
        %v2403 = vshrl.u32 %v2282, 16
        %v2405 = vrot.slane %v2403, 4
        %v2406 = vor.u32 %v2405, %v2401
        %v2407 = vrot.slane %v2406, 4
        %v2409 = vshll.u32 %v2283, 16
        %v2411 = vrot.slane %v2409, 5
        %v2412 = vsel %vm445, %v2407, %v2411
        %v2414 = vshrl.u32 %v2284, 16
        %v2416 = vrot.slane %v2414, 4
        %v2417 = vshll.u32 %v2284, 16
        %v2419 = vrot.slane %v2417, 5
        %v2420 = vor.u32 %v2416, %v2419
        %v2421 = vrot.slane %v2420, 4
        %v2423 = vshll.u32 %v2285, 16
        %v2425 = vrot.slane %v2423, 5
        %v2426 = vsel %vm445, %v2421, %v2425
        %v2427 = vshrl.u32 %v2285, 16
        %v2429 = vrot.slane %v2427, 4
        %v2430 = vor.u32 %v2429, %v2425
        %v2431 = vrot.slane %v2430, 4
        %v2433 = vshll.u32 %v2286, 16
        %v2435 = vrot.slane %v2433, 5
        %v2436 = vsel %vm445, %v2431, %v2435
        %v2438 = vshrl.u32 %v2287, 16
        %v2440 = vrot.slane %v2438, 4
        %v2441 = vshll.u32 %v2287, 16
        %v2443 = vrot.slane %v2441, 5
        %v2444 = vor.u32 %v2440, %v2443
        %v2445 = vrot.slane %v2444, 4
        %v2447 = vshll.u32 %v2288, 16
        %v2449 = vrot.slane %v2447, 5
        %v2450 = vsel %vm445, %v2445, %v2449
        %v2451 = vshrl.u32 %v2288, 16
        %v2453 = vrot.slane %v2451, 4
        %v2454 = vor.u32 %v2453, %v2449
        %v2455 = vrot.slane %v2454, 4
        %v2457 = vshll.u32 %v2289, 16
        %v2459 = vrot.slane %v2457, 5
        %v2460 = vsel %vm445, %v2455, %v2459
        %v2462 = vshrl.u32 %v2290, 16
        %v2464 = vrot.slane %v2462, 4
        %v2465 = vshll.u32 %v2290, 16
        %v2467 = vrot.slane %v2465, 5
        %v2468 = vor.u32 %v2464, %v2467
        %v2469 = vrot.slane %v2468, 4
        %v2471 = vshll.u32 %v2291, 16
        %v2473 = vrot.slane %v2471, 5
        %v2474 = vsel %vm445, %v2469, %v2473
        %v2475 = vshrl.u32 %v2291, 16
        %v2477 = vrot.slane %v2475, 4
        %v2478 = vor.u32 %v2477, %v2473
        %v2479 = vrot.slane %v2478, 4
        %v2481 = vshll.u32 %v2292, 16
        %v2483 = vrot.slane %v2481, 5
        %v2484 = vsel %vm445, %v2479, %v2483
        %s2485 = scalar_lea.vmem %s2, 56
        %v2486 = vld [vmem:[%s2485] sm:$0xf]
        %v2487 = vld [vmem:[%s2485 + $0x4] sm:$0xf]
        %v2488 = vunpack.c.l.b16 %v2306
        %v2489 = vunpack.c.l.b16 %v2316
        %v2490 = vunpack.c.l.b16 %v2330
        %v2491 = vunpack.c.l.b16 %v2340
        %v2492 = vunpack.c.l.b16 %v2354
        %v2493 = vunpack.c.l.b16 %v2364
        %v2494 = vunpack.c.l.b16 %v2378
        %v2495 = vunpack.c.l.b16 %v2388
        %v2496 = vunpack.c.l.b16 %v2402
        %v2497 = vunpack.c.l.b16 %v2412
        %v2498 = vunpack.c.l.b16 %v2426
        %v2499 = vunpack.c.l.b16 %v2436
        %v2500 = vunpack.c.l.b16 %v2450
        %v2501 = vunpack.c.l.b16 %v2460
        %v2502 = vunpack.c.l.b16 %v2474
        %v2503 = vunpack.c.l.b16 %v2484
        %v2504 = vpack.c.b16 %v2489, %v2488
        %v2505 = vpack.c.b16 %v2491, %v2490
        %v2506 = vpack.c.b16 %v2493, %v2492
        %v2507 = vpack.c.b16 %v2495, %v2494
        %v2508 = vpack.c.b16 %v2497, %v2496
        %v2509 = vpack.c.b16 %v2499, %v2498
        %v2510 = vpack.c.b16 %v2501, %v2500
        %v2511 = vpack.c.b16 %v2503, %v2502
        %v2514 = vunpack.c.l.b16 %v2486
        %v2515 = vunpack.c.l.b16 %v2487
        %v2516 = vpack.c.b16 %v2515, %v2514
        %v2519 = vsel %vm671, %v2504, 0
        %v2522 = vsel %vm671, %v2505, 0
        %v2525 = vsel %vm671, %v2506, 0
        %v2528 = vsel %vm671, %v2507, 0
        %v2531 = vsel %vm671, %v2508, 0
        %v2534 = vsel %vm671, %v2509, 0
        %v2537 = vsel %vm671, %v2510, 0
        %v2540 = vsel %vm671, %v2511, 0
        %2542 = vmatprep.subr.bf16.mxu0 0
        %2543 = vmatpush1.bf16.msra.mxu0 0
        %2544 = vmatprep.subr.bf16.mxu0 0
        %2545 = vmatpush1.bf16.msra.mxu0 0
        %2546 = vmatprep.subr.bf16.mxu0 0
        %2547 = vmatpush1.bf16.msra.mxu0 0
        %2548 = vmatprep.subr.bf16.mxu0 0
        %2549 = vmatpush1.bf16.msra.mxu0 0
        %2550 = vmatprep.subr.bf16.mxu0 0
        %2551 = vmatpush1.bf16.msra.mxu0 0
        %2552 = vmatprep.subr.bf16.mxu0 0
        %2553 = vmatpush1.bf16.msra.mxu0 0
        %2554 = vmatprep.subr.bf16.mxu0 0
        %2555 = vmatpush1.bf16.msra.mxu0 0
        %2556 = vmatprep.subr.bf16.mxu0 0
        %2557 = vmatpush1.bf16.msra.mxu0 %v2516
        %2558 = vmatprep.subr.bf16.mxu0 0
        %2559 = vmatpush2.bf16.msra.mxu0 0
        %2560 = vmatprep.subr.bf16.mxu0 0
        %2561 = vmatpush2.bf16.msra.mxu0 0
        %2562 = vmatprep.subr.bf16.mxu0 0
        %2563 = vmatpush2.bf16.msra.mxu0 0
        %2564 = vmatprep.subr.bf16.mxu0 0
        %2565 = vmatpush2.bf16.msra.mxu0 0
        %2566 = vmatprep.subr.bf16.mxu0 0
        %2567 = vmatpush2.bf16.msra.mxu0 0
        %2568 = vmatprep.subr.bf16.mxu0 0
        %2569 = vmatpush2.bf16.msra.mxu0 0
        %2570 = vmatprep.subr.bf16.mxu0 0
        %2571 = vmatpush2.bf16.msra.mxu0 0
        %2572 = vmatprep.subr.bf16.mxu0 0
        %2573 = vmatpush2.bf16.msra.mxu0 0
        %2574 = vmatprep.mubr.bf16.mxu0 0
        %2575 = vmatmul.mubr.bf16.gmra.mxu0 %v2519
        %v2576 = vpop.f32.mrf.mxu0
        %v2577 = vadd.f32 0.0, %v2576
        %v2578 = vpop.f32.mrf.mxu0
        %v2579 = vpop.f32.mrf.mxu0
        %v2580 = vadd.f32 0.0, %v2579
        %v2581 = vpop.f32.mrf.mxu0
        %2582 = vmatprep.mubr.bf16.mxu0 0
        %2583 = vmatmul.mubr.bf16.gmra.mxu0 %v2522
        %v2584 = vpop.f32.mrf.mxu0
        %v2585 = vadd.f32 0.0, %v2584
        %v2586 = vpop.f32.mrf.mxu0
        %v2587 = vpop.f32.mrf.mxu0
        %v2588 = vadd.f32 0.0, %v2587
        %v2589 = vpop.f32.mrf.mxu0
        %2590 = vmatprep.mubr.bf16.mxu0 0
        %2591 = vmatmul.mubr.bf16.gmra.mxu0 %v2525
        %v2592 = vpop.f32.mrf.mxu0
        %v2593 = vadd.f32 0.0, %v2592
        %v2594 = vpop.f32.mrf.mxu0
        %v2595 = vpop.f32.mrf.mxu0
        %v2596 = vadd.f32 0.0, %v2595
        %v2597 = vpop.f32.mrf.mxu0
        %2598 = vmatprep.mubr.bf16.mxu0 0
        %2599 = vmatmul.mubr.bf16.gmra.mxu0 %v2528
        %v2600 = vpop.f32.mrf.mxu0
        %v2601 = vadd.f32 0.0, %v2600
        %v2602 = vpop.f32.mrf.mxu0
        %v2603 = vpop.f32.mrf.mxu0
        %v2604 = vadd.f32 0.0, %v2603
        %v2605 = vpop.f32.mrf.mxu0
        %2606 = vmatprep.mubr.bf16.mxu0 0
        %2607 = vmatmul.mubr.bf16.gmra.mxu0 %v2531
        %v2608 = vpop.f32.mrf.mxu0
        %v2609 = vadd.f32 0.0, %v2608
        %v2610 = vpop.f32.mrf.mxu0
        %v2611 = vpop.f32.mrf.mxu0
        %v2612 = vadd.f32 0.0, %v2611
        %v2613 = vpop.f32.mrf.mxu0
        %2614 = vmatprep.mubr.bf16.mxu0 0
        %2615 = vmatmul.mubr.bf16.gmra.mxu0 %v2534
        %v2616 = vpop.f32.mrf.mxu0
        %v2617 = vadd.f32 0.0, %v2616
        %v2618 = vpop.f32.mrf.mxu0
        %v2619 = vpop.f32.mrf.mxu0
        %v2620 = vadd.f32 0.0, %v2619
        %v2621 = vpop.f32.mrf.mxu0
        %2622 = vmatprep.mubr.bf16.mxu0 0
        %2623 = vmatmul.mubr.bf16.gmra.mxu0 %v2537
        %v2624 = vpop.f32.mrf.mxu0
        %v2625 = vadd.f32 0.0, %v2624
        %v2626 = vpop.f32.mrf.mxu0
        %v2627 = vpop.f32.mrf.mxu0
        %v2628 = vadd.f32 0.0, %v2627
        %v2629 = vpop.f32.mrf.mxu0
        %2630 = vmatprep.mubr.bf16.mxu0 0
        %2631 = vmatmul.mubr.bf16.gmra.mxu0 %v2540
        %v2632 = vpop.f32.mrf.mxu0
        %v2633 = vadd.f32 0.0, %v2632
        %v2634 = vpop.f32.mrf.mxu0
        %v2635 = vpop.f32.mrf.mxu0
        %v2636 = vadd.f32 0.0, %v2635
        %v2637 = vpop.f32.mrf.mxu0
        %2638 = vdwg.mxu0
        %v2639 = vadd.f32 %v2253, %v2577
        %v2640 = vadd.f32 %v2254, %v2580
        %v2641 = vadd.f32 %v2255, %v2585
        %v2642 = vadd.f32 %v2256, %v2588
        %v2643 = vadd.f32 %v2257, %v2593
        %v2644 = vadd.f32 %v2258, %v2596
        %v2645 = vadd.f32 %v2259, %v2601
        %v2646 = vadd.f32 %v2260, %v2604
        %v2647 = vadd.f32 %v2261, %v2609
        %v2648 = vadd.f32 %v2262, %v2612
        %v2649 = vadd.f32 %v2263, %v2617
        %v2650 = vadd.f32 %v2264, %v2620
        %v2651 = vadd.f32 %v2265, %v2625
        %v2652 = vadd.f32 %v2266, %v2628
        %v2653 = vadd.f32 %v2267, %v2633
        %v2654 = vadd.f32 %v2268, %v2636
        %v2655 = vld [vmem:[%s2066] sm:$0xe]
        %v2656 = vld [vmem:[%s2066 + $0xc] sm:$0xe]
        %v2657 = vld [vmem:[%s2066 + $0x18] sm:$0xe]
        %v2658 = vld [vmem:[%s2066 + $0x24] sm:$0xe]
        %v2659 = vld [vmem:[%s2066 + $0x30] sm:$0xe]
        %v2660 = vld [vmem:[%s2066 + $0x3c] sm:$0xe]
        %v2661 = vld [vmem:[%s2066 + $0x48] sm:$0xe]
        %v2662 = vld [vmem:[%s2066 + $0x54] sm:$0xe]
        %v2687 = vrot.slane %v2655, 5
        %v2688 = vrot.slane %v2687, 4
        %v2689 = vrot.slane %v2270, 5
        %v2690 = vsel %vm986, %v2688, %v2689
        %v2691 = vrot.slane %v2689, 4
        %v2692 = vrot.slane %v2271, 5
        %v2693 = vsel %vm986, %v2691, %v2692
        %v2694 = vrot.slane %v2656, 5
        %v2695 = vrot.slane %v2694, 4
        %v2696 = vrot.slane %v2273, 5
        %v2697 = vsel %vm986, %v2695, %v2696
        %v2698 = vrot.slane %v2696, 4
        %v2699 = vrot.slane %v2274, 5
        %v2700 = vsel %vm986, %v2698, %v2699
        %v2701 = vrot.slane %v2657, 5
        %v2702 = vrot.slane %v2701, 4
        %v2703 = vrot.slane %v2276, 5
        %v2704 = vsel %vm986, %v2702, %v2703
        %v2705 = vrot.slane %v2703, 4
        %v2706 = vrot.slane %v2277, 5
        %v2707 = vsel %vm986, %v2705, %v2706
        %v2708 = vrot.slane %v2658, 5
        %v2709 = vrot.slane %v2708, 4
        %v2710 = vrot.slane %v2279, 5
        %v2711 = vsel %vm986, %v2709, %v2710
        %v2712 = vrot.slane %v2710, 4
        %v2713 = vrot.slane %v2280, 5
        %v2714 = vsel %vm986, %v2712, %v2713
        %v2715 = vrot.slane %v2659, 5
        %v2716 = vrot.slane %v2715, 4
        %v2717 = vrot.slane %v2282, 5
        %v2718 = vsel %vm986, %v2716, %v2717
        %v2719 = vrot.slane %v2717, 4
        %v2720 = vrot.slane %v2283, 5
        %v2721 = vsel %vm986, %v2719, %v2720
        %v2722 = vrot.slane %v2660, 5
        %v2723 = vrot.slane %v2722, 4
        %v2724 = vrot.slane %v2285, 5
        %v2725 = vsel %vm986, %v2723, %v2724
        %v2726 = vrot.slane %v2724, 4
        %v2727 = vrot.slane %v2286, 5
        %v2728 = vsel %vm986, %v2726, %v2727
        %v2729 = vrot.slane %v2661, 5
        %v2730 = vrot.slane %v2729, 4
        %v2731 = vrot.slane %v2288, 5
        %v2732 = vsel %vm986, %v2730, %v2731
        %v2733 = vrot.slane %v2731, 4
        %v2734 = vrot.slane %v2289, 5
        %v2735 = vsel %vm986, %v2733, %v2734
        %v2736 = vrot.slane %v2662, 5
        %v2737 = vrot.slane %v2736, 4
        %v2738 = vrot.slane %v2291, 5
        %v2739 = vsel %vm986, %v2737, %v2738
        %v2740 = vrot.slane %v2738, 4
        %v2741 = vrot.slane %v2292, 5
        %v2742 = vsel %vm986, %v2740, %v2741
        %s2743 = scalar_lea.vmem %s2, 64
        %v2744 = vld [vmem:[%s2743] sm:$0xf]
        %v2745 = vld [vmem:[%s2743 + $0x4] sm:$0xf]
        %v2746 = vunpack.c.l.b16 %v2690
        %v2747 = vunpack.c.l.b16 %v2693
        %v2748 = vunpack.c.l.b16 %v2697
        %v2749 = vunpack.c.l.b16 %v2700
        %v2750 = vunpack.c.l.b16 %v2704
        %v2751 = vunpack.c.l.b16 %v2707
        %v2752 = vunpack.c.l.b16 %v2711
        %v2753 = vunpack.c.l.b16 %v2714
        %v2754 = vunpack.c.l.b16 %v2718
        %v2755 = vunpack.c.l.b16 %v2721
        %v2756 = vunpack.c.l.b16 %v2725
        %v2757 = vunpack.c.l.b16 %v2728
        %v2758 = vunpack.c.l.b16 %v2732
        %v2759 = vunpack.c.l.b16 %v2735
        %v2760 = vunpack.c.l.b16 %v2739
        %v2761 = vunpack.c.l.b16 %v2742
        %v2762 = vpack.c.b16 %v2747, %v2746
        %v2763 = vpack.c.b16 %v2749, %v2748
        %v2764 = vpack.c.b16 %v2751, %v2750
        %v2765 = vpack.c.b16 %v2753, %v2752
        %v2766 = vpack.c.b16 %v2755, %v2754
        %v2767 = vpack.c.b16 %v2757, %v2756
        %v2768 = vpack.c.b16 %v2759, %v2758
        %v2769 = vpack.c.b16 %v2761, %v2760
        %v2772 = vunpack.c.l.b16 %v2744
        %v2773 = vunpack.c.l.b16 %v2745
        %v2774 = vpack.c.b16 %v2773, %v2772
        %v2777 = vsel %vm671, %v2762, 0
        %v2780 = vsel %vm671, %v2763, 0
        %v2783 = vsel %vm671, %v2764, 0
        %v2786 = vsel %vm671, %v2765, 0
        %v2789 = vsel %vm671, %v2766, 0
        %v2792 = vsel %vm671, %v2767, 0
        %v2795 = vsel %vm671, %v2768, 0
        %v2798 = vsel %vm671, %v2769, 0
        %2800 = vmatprep.subr.bf16.mxu0 0
        %2801 = vmatpush1.bf16.msra.mxu0 0
        %2802 = vmatprep.subr.bf16.mxu0 0
        %2803 = vmatpush1.bf16.msra.mxu0 0
        %2804 = vmatprep.subr.bf16.mxu0 0
        %2805 = vmatpush1.bf16.msra.mxu0 0
        %2806 = vmatprep.subr.bf16.mxu0 0
        %2807 = vmatpush1.bf16.msra.mxu0 0
        %2808 = vmatprep.subr.bf16.mxu0 0
        %2809 = vmatpush1.bf16.msra.mxu0 0
        %2810 = vmatprep.subr.bf16.mxu0 0
        %2811 = vmatpush1.bf16.msra.mxu0 0
        %2812 = vmatprep.subr.bf16.mxu0 0
        %2813 = vmatpush1.bf16.msra.mxu0 0
        %2814 = vmatprep.subr.bf16.mxu0 0
        %2815 = vmatpush1.bf16.msra.mxu0 %v2774
        %2816 = vmatprep.subr.bf16.mxu0 0
        %2817 = vmatpush2.bf16.msra.mxu0 0
        %2818 = vmatprep.subr.bf16.mxu0 0
        %2819 = vmatpush2.bf16.msra.mxu0 0
        %2820 = vmatprep.subr.bf16.mxu0 0
        %2821 = vmatpush2.bf16.msra.mxu0 0
        %2822 = vmatprep.subr.bf16.mxu0 0
        %2823 = vmatpush2.bf16.msra.mxu0 0
        %2824 = vmatprep.subr.bf16.mxu0 0
        %2825 = vmatpush2.bf16.msra.mxu0 0
        %2826 = vmatprep.subr.bf16.mxu0 0
        %2827 = vmatpush2.bf16.msra.mxu0 0
        %2828 = vmatprep.subr.bf16.mxu0 0
        %2829 = vmatpush2.bf16.msra.mxu0 0
        %2830 = vmatprep.subr.bf16.mxu0 0
        %2831 = vmatpush2.bf16.msra.mxu0 0
        %2832 = vmatprep.mubr.bf16.mxu0 0
        %2833 = vmatmul.mubr.bf16.gmra.mxu0 %v2777
        %v2834 = vpop.f32.mrf.mxu0
        %v2835 = vadd.f32 0.0, %v2834
        %v2836 = vpop.f32.mrf.mxu0
        %v2837 = vpop.f32.mrf.mxu0
        %v2838 = vadd.f32 0.0, %v2837
        %v2839 = vpop.f32.mrf.mxu0
        %2840 = vmatprep.mubr.bf16.mxu0 0
        %2841 = vmatmul.mubr.bf16.gmra.mxu0 %v2780
        %v2842 = vpop.f32.mrf.mxu0
        %v2843 = vadd.f32 0.0, %v2842
        %v2844 = vpop.f32.mrf.mxu0
        %v2845 = vpop.f32.mrf.mxu0
        %v2846 = vadd.f32 0.0, %v2845
        %v2847 = vpop.f32.mrf.mxu0
        %2848 = vmatprep.mubr.bf16.mxu0 0
        %2849 = vmatmul.mubr.bf16.gmra.mxu0 %v2783
        %v2850 = vpop.f32.mrf.mxu0
        %v2851 = vadd.f32 0.0, %v2850
        %v2852 = vpop.f32.mrf.mxu0
        %v2853 = vpop.f32.mrf.mxu0
        %v2854 = vadd.f32 0.0, %v2853
        %v2855 = vpop.f32.mrf.mxu0
        %2856 = vmatprep.mubr.bf16.mxu0 0
        %2857 = vmatmul.mubr.bf16.gmra.mxu0 %v2786
        %v2858 = vpop.f32.mrf.mxu0
        %v2859 = vadd.f32 0.0, %v2858
        %v2860 = vpop.f32.mrf.mxu0
        %v2861 = vpop.f32.mrf.mxu0
        %v2862 = vadd.f32 0.0, %v2861
        %v2863 = vpop.f32.mrf.mxu0
        %2864 = vmatprep.mubr.bf16.mxu0 0
        %2865 = vmatmul.mubr.bf16.gmra.mxu0 %v2789
        %v2866 = vpop.f32.mrf.mxu0
        %v2867 = vadd.f32 0.0, %v2866
        %v2868 = vpop.f32.mrf.mxu0
        %v2869 = vpop.f32.mrf.mxu0
        %v2870 = vadd.f32 0.0, %v2869
        %v2871 = vpop.f32.mrf.mxu0
        %2872 = vmatprep.mubr.bf16.mxu0 0
        %2873 = vmatmul.mubr.bf16.gmra.mxu0 %v2792
        %v2874 = vpop.f32.mrf.mxu0
        %v2875 = vadd.f32 0.0, %v2874
        %v2876 = vpop.f32.mrf.mxu0
        %v2877 = vpop.f32.mrf.mxu0
        %v2878 = vadd.f32 0.0, %v2877
        %v2879 = vpop.f32.mrf.mxu0
        %2880 = vmatprep.mubr.bf16.mxu0 0
        %2881 = vmatmul.mubr.bf16.gmra.mxu0 %v2795
        %v2882 = vpop.f32.mrf.mxu0
        %v2883 = vadd.f32 0.0, %v2882
        %v2884 = vpop.f32.mrf.mxu0
        %v2885 = vpop.f32.mrf.mxu0
        %v2886 = vadd.f32 0.0, %v2885
        %v2887 = vpop.f32.mrf.mxu0
        %2888 = vmatprep.mubr.bf16.mxu0 0
        %2889 = vmatmul.mubr.bf16.gmra.mxu0 %v2798
        %v2890 = vpop.f32.mrf.mxu0
        %v2891 = vadd.f32 0.0, %v2890
        %v2892 = vpop.f32.mrf.mxu0
        %v2893 = vpop.f32.mrf.mxu0
        %v2894 = vadd.f32 0.0, %v2893
        %v2895 = vpop.f32.mrf.mxu0
        %2896 = vdwg.mxu0
        %v2897 = vadd.f32 %v2639, %v2835
        %v2898 = vadd.f32 %v2640, %v2838
        %v2899 = vadd.f32 %v2641, %v2843
        %v2900 = vadd.f32 %v2642, %v2846
        %v2901 = vadd.f32 %v2643, %v2851
        %v2902 = vadd.f32 %v2644, %v2854
        %v2903 = vadd.f32 %v2645, %v2859
        %v2904 = vadd.f32 %v2646, %v2862
        %v2905 = vadd.f32 %v2647, %v2867
        %v2906 = vadd.f32 %v2648, %v2870
        %v2907 = vadd.f32 %v2649, %v2875
        %v2908 = vadd.f32 %v2650, %v2878
        %v2909 = vadd.f32 %v2651, %v2883
        %v2910 = vadd.f32 %v2652, %v2886
        %v2911 = vadd.f32 %v2653, %v2891
        %v2912 = vadd.f32 %v2654, %v2894
        %v2913 = vld [vmem:[%s3] sm:$0x1]
        %v2915 = vlaneseq
        %v2916 = vshrl.u32 %v2915, 7
        %v2917 = vsub.s32 0, %v2916
        %v2918 = vrot.slane %v2913, %v2917
        %v2920 = vadd.f32 %v2897, %v2918
        %v2921 = vadd.f32 %v2898, %v2918
        %v2922 = vadd.f32 %v2899, %v2918
        %v2923 = vadd.f32 %v2900, %v2918
        %v2924 = vadd.f32 %v2901, %v2918
        %v2925 = vadd.f32 %v2902, %v2918
        %v2926 = vadd.f32 %v2903, %v2918
        %v2927 = vadd.f32 %v2904, %v2918
        %v2928 = vadd.f32 %v2905, %v2918
        %v2929 = vadd.f32 %v2906, %v2918
        %v2930 = vadd.f32 %v2907, %v2918
        %v2931 = vadd.f32 %v2908, %v2918
        %v2932 = vadd.f32 %v2909, %v2918
        %v2933 = vadd.f32 %v2910, %v2918
        %v2934 = vadd.f32 %v2911, %v2918
        %v2935 = vadd.f32 %v2912, %v2918
        %v2936 = vld [vmem:[%s409] sm:$0xf]
        %v2937 = vld [vmem:[%s409 + $0x4] sm:$0xf]
        %v2938 = vld [vmem:[%s409 + $0x8] sm:$0xf]
        %v2939 = vld [vmem:[%s409 + $0xc] sm:$0xf]
        %v2940 = vld [vmem:[%s409 + $0x10] sm:$0xf]
        %v2941 = vld [vmem:[%s409 + $0x14] sm:$0xf]
        %v2942 = vld [vmem:[%s409 + $0x18] sm:$0xf]
        %v2943 = vld [vmem:[%s409 + $0x1c] sm:$0xf]
        %v2944 = vld [vmem:[%s409 + $0x20] sm:$0xf]
        %v2945 = vld [vmem:[%s409 + $0x24] sm:$0xf]
        %v2946 = vld [vmem:[%s409 + $0x28] sm:$0xf]
        %v2947 = vld [vmem:[%s409 + $0x2c] sm:$0xf]
        %v2948 = vld [vmem:[%s409 + $0x30] sm:$0xf]
        %v2949 = vld [vmem:[%s409 + $0x34] sm:$0xf]
        %v2950 = vld [vmem:[%s409 + $0x38] sm:$0xf]
        %v2951 = vld [vmem:[%s409 + $0x3c] sm:$0xf]
        %v2952 = vld [vmem:[%s4] sm:$0xf]
        %v2953 = vld [vmem:[%s4 + $0x4] sm:$0xf]
        %v2954 = vld [vmem:[%s4 + $0x8] sm:$0xf]
        %v2955 = vld [vmem:[%s4 + $0xc] sm:$0xf]
        %v2972 = vunpack.c.l.b16 %v2936
        %v2973 = vunpack.c.l.b16 %v2937
        %v2974 = vunpack.c.l.b16 %v2938
        %v2975 = vunpack.c.l.b16 %v2939
        %v2976 = vunpack.c.l.b16 %v2940
        %v2977 = vunpack.c.l.b16 %v2941
        %v2978 = vunpack.c.l.b16 %v2942
        %v2979 = vunpack.c.l.b16 %v2943
        %v2980 = vunpack.c.l.b16 %v2944
        %v2981 = vunpack.c.l.b16 %v2945
        %v2982 = vunpack.c.l.b16 %v2946
        %v2983 = vunpack.c.l.b16 %v2947
        %v2984 = vunpack.c.l.b16 %v2948
        %v2985 = vunpack.c.l.b16 %v2949
        %v2986 = vunpack.c.l.b16 %v2950
        %v2987 = vunpack.c.l.b16 %v2951
        %v2988 = vpack.c.b16 %v2973, %v2972
        %v2989 = vpack.c.b16 %v2975, %v2974
        %v2990 = vpack.c.b16 %v2977, %v2976
        %v2991 = vpack.c.b16 %v2979, %v2978
        %v2992 = vpack.c.b16 %v2981, %v2980
        %v2993 = vpack.c.b16 %v2983, %v2982
        %v2994 = vpack.c.b16 %v2985, %v2984
        %v2995 = vpack.c.b16 %v2987, %v2986
        %v3000 = vunpack.c.l.b16 %v2952
        %v3001 = vunpack.c.l.b16 %v2953
        %v3002 = vunpack.c.l.b16 %v2954
        %v3003 = vunpack.c.l.b16 %v2955
        %v3004 = vpack.c.b16 %v3001, %v3000
        %v3005 = vpack.c.b16 %v3003, %v3002
        %vm3008 = vcmask 261120
        %v3010 = vsel %vm3008, %v2988, 0
        %v3013 = vsel %vm3008, %v2989, 0
        %v3016 = vsel %vm3008, %v2990, 0
        %v3019 = vsel %vm3008, %v2991, 0
        %v3022 = vsel %vm3008, %v2992, 0
        %v3025 = vsel %vm3008, %v2993, 0
        %v3028 = vsel %vm3008, %v2994, 0
        %v3031 = vsel %vm3008, %v2995, 0
        %3033 = vmatprep.subr.bf16.mxu0 0
        %3034 = vmatpush1.bf16.msra.mxu0 0
        %3035 = vmatprep.subr.bf16.mxu0 0
        %3036 = vmatpush1.bf16.msra.mxu0 0
        %3037 = vmatprep.subr.bf16.mxu0 0
        %3038 = vmatpush1.bf16.msra.mxu0 0
        %3039 = vmatprep.subr.bf16.mxu0 0
        %3040 = vmatpush1.bf16.msra.mxu0 0
        %3041 = vmatprep.subr.bf16.mxu0 0
        %3042 = vmatpush1.bf16.msra.mxu0 0
        %3043 = vmatprep.subr.bf16.mxu0 0
        %3044 = vmatpush1.bf16.msra.mxu0 0
        %3045 = vmatprep.subr.bf16.mxu0 0
        %3046 = vmatpush1.bf16.msra.mxu0 %v3005
        %3047 = vmatprep.subr.bf16.mxu0 0
        %3048 = vmatpush1.bf16.msra.mxu0 %v3004
        %3049 = vmatprep.subr.bf16.mxu0 0
        %3050 = vmatpush2.bf16.msra.mxu0 0
        %3051 = vmatprep.subr.bf16.mxu0 0
        %3052 = vmatpush2.bf16.msra.mxu0 0
        %3053 = vmatprep.subr.bf16.mxu0 0
        %3054 = vmatpush2.bf16.msra.mxu0 0
        %3055 = vmatprep.subr.bf16.mxu0 0
        %3056 = vmatpush2.bf16.msra.mxu0 0
        %3057 = vmatprep.subr.bf16.mxu0 0
        %3058 = vmatpush2.bf16.msra.mxu0 0
        %3059 = vmatprep.subr.bf16.mxu0 0
        %3060 = vmatpush2.bf16.msra.mxu0 0
        %3061 = vmatprep.subr.bf16.mxu0 0
        %3062 = vmatpush2.bf16.msra.mxu0 0
        %3063 = vmatprep.subr.bf16.mxu0 0
        %3064 = vmatpush2.bf16.msra.mxu0 0
        %3065 = vmatprep.mubr.bf16.mxu0 0
        %3066 = vmatmul.mubr.bf16.gmra.mxu0 %v3010
        %v3067 = vpop.f32.mrf.mxu0
        %v3068 = vadd.f32 0.0, %v3067
        %v3069 = vpop.f32.mrf.mxu0
        %v3070 = vpop.f32.mrf.mxu0
        %v3071 = vadd.f32 0.0, %v3070
        %v3072 = vpop.f32.mrf.mxu0
        %3073 = vmatprep.mubr.bf16.mxu0 0
        %3074 = vmatmul.mubr.bf16.gmra.mxu0 %v3013
        %v3075 = vpop.f32.mrf.mxu0
        %v3076 = vadd.f32 0.0, %v3075
        %v3077 = vpop.f32.mrf.mxu0
        %v3078 = vpop.f32.mrf.mxu0
        %v3079 = vadd.f32 0.0, %v3078
        %v3080 = vpop.f32.mrf.mxu0
        %3081 = vmatprep.mubr.bf16.mxu0 0
        %3082 = vmatmul.mubr.bf16.gmra.mxu0 %v3016
        %v3083 = vpop.f32.mrf.mxu0
        %v3084 = vadd.f32 0.0, %v3083
        %v3085 = vpop.f32.mrf.mxu0
        %v3086 = vpop.f32.mrf.mxu0
        %v3087 = vadd.f32 0.0, %v3086
        %v3088 = vpop.f32.mrf.mxu0
        %3089 = vmatprep.mubr.bf16.mxu0 0
        %3090 = vmatmul.mubr.bf16.gmra.mxu0 %v3019
        %v3091 = vpop.f32.mrf.mxu0
        %v3092 = vadd.f32 0.0, %v3091
        %v3093 = vpop.f32.mrf.mxu0
        %v3094 = vpop.f32.mrf.mxu0
        %v3095 = vadd.f32 0.0, %v3094
        %v3096 = vpop.f32.mrf.mxu0
        %3097 = vmatprep.mubr.bf16.mxu0 0
        %3098 = vmatmul.mubr.bf16.gmra.mxu0 %v3022
        %v3099 = vpop.f32.mrf.mxu0
        %v3100 = vadd.f32 0.0, %v3099
        %v3101 = vpop.f32.mrf.mxu0
        %v3102 = vpop.f32.mrf.mxu0
        %v3103 = vadd.f32 0.0, %v3102
        %v3104 = vpop.f32.mrf.mxu0
        %3105 = vmatprep.mubr.bf16.mxu0 0
        %3106 = vmatmul.mubr.bf16.gmra.mxu0 %v3025
        %v3107 = vpop.f32.mrf.mxu0
        %v3108 = vadd.f32 0.0, %v3107
        %v3109 = vpop.f32.mrf.mxu0
        %v3110 = vpop.f32.mrf.mxu0
        %v3111 = vadd.f32 0.0, %v3110
        %v3112 = vpop.f32.mrf.mxu0
        %3113 = vmatprep.mubr.bf16.mxu0 0
        %3114 = vmatmul.mubr.bf16.gmra.mxu0 %v3028
        %v3115 = vpop.f32.mrf.mxu0
        %v3116 = vadd.f32 0.0, %v3115
        %v3117 = vpop.f32.mrf.mxu0
        %v3118 = vpop.f32.mrf.mxu0
        %v3119 = vadd.f32 0.0, %v3118
        %v3120 = vpop.f32.mrf.mxu0
        %3121 = vmatprep.mubr.bf16.mxu0 0
        %3122 = vmatmul.mubr.bf16.gmra.mxu0 %v3031
        %v3123 = vpop.f32.mrf.mxu0
        %v3124 = vadd.f32 0.0, %v3123
        %v3125 = vpop.f32.mrf.mxu0
        %v3126 = vpop.f32.mrf.mxu0
        %v3127 = vadd.f32 0.0, %v3126
        %v3128 = vpop.f32.mrf.mxu0
        %3129 = vdwg.mxu0
        %v3130 = vld [vmem:[%s6] sm:$0x1]
        %v3132 = vlaneseq
        %v3133 = vshrl.u32 %v3132, 7
        %v3134 = vsub.s32 0, %v3133
        %v3135 = vrot.slane %v3130, %v3134
        %v3137 = vmul.f32 %v3068, %v3135
        %v3138 = vmul.f32 %v3071, %v3135
        %v3139 = vmul.f32 %v3076, %v3135
        %v3140 = vmul.f32 %v3079, %v3135
        %v3141 = vmul.f32 %v3084, %v3135
        %v3142 = vmul.f32 %v3087, %v3135
        %v3143 = vmul.f32 %v3092, %v3135
        %v3144 = vmul.f32 %v3095, %v3135
        %v3145 = vmul.f32 %v3100, %v3135
        %v3146 = vmul.f32 %v3103, %v3135
        %v3147 = vmul.f32 %v3108, %v3135
        %v3148 = vmul.f32 %v3111, %v3135
        %v3149 = vmul.f32 %v3116, %v3135
        %v3150 = vmul.f32 %v3119, %v3135
        %v3151 = vmul.f32 %v3124, %v3135
        %v3152 = vmul.f32 %v3127, %v3135
        %v3153 = vld [vmem:[%s7] sm:$0x1]
        %v3155 = vlaneseq
        %v3156 = vshrl.u32 %v3155, 7
        %v3157 = vsub.s32 0, %v3156
        %v3158 = vrot.slane %v3153, %v3157
        %v3160 = vadd.f32 %v3137, %v3158
        %v3161 = vadd.f32 %v3138, %v3158
        %v3162 = vadd.f32 %v3139, %v3158
        %v3163 = vadd.f32 %v3140, %v3158
        %v3164 = vadd.f32 %v3141, %v3158
        %v3165 = vadd.f32 %v3142, %v3158
        %v3166 = vadd.f32 %v3143, %v3158
        %v3167 = vadd.f32 %v3144, %v3158
        %v3168 = vadd.f32 %v3145, %v3158
        %v3169 = vadd.f32 %v3146, %v3158
        %v3170 = vadd.f32 %v3147, %v3158
        %v3171 = vadd.f32 %v3148, %v3158
        %v3172 = vadd.f32 %v3149, %v3158
        %v3173 = vadd.f32 %v3150, %v3158
        %v3174 = vadd.f32 %v3151, %v3158
        %v3175 = vadd.f32 %v3152, %v3158
        %v3176 = vmax.f32 %v3160, 0.0
        %v3177 = vmax.f32 %v3161, 0.0
        %v3178 = vmax.f32 %v3162, 0.0
        %v3179 = vmax.f32 %v3163, 0.0
        %v3180 = vmax.f32 %v3164, 0.0
        %v3181 = vmax.f32 %v3165, 0.0
        %v3182 = vmax.f32 %v3166, 0.0
        %v3183 = vmax.f32 %v3167, 0.0
        %v3184 = vmax.f32 %v3168, 0.0
        %v3185 = vmax.f32 %v3169, 0.0
        %v3186 = vmax.f32 %v3170, 0.0
        %v3187 = vmax.f32 %v3171, 0.0
        %v3188 = vmax.f32 %v3172, 0.0
        %v3189 = vmax.f32 %v3173, 0.0
        %v3190 = vmax.f32 %v3174, 0.0
        %v3191 = vmax.f32 %v3175, 0.0
        %v3192 = vpack.c.bf16 %v3177, %v3176
        %v3193 = vpack.c.bf16 %v3179, %v3178
        %v3194 = vpack.c.bf16 %v3181, %v3180
        %v3195 = vpack.c.bf16 %v3183, %v3182
        %v3196 = vpack.c.bf16 %v3185, %v3184
        %v3197 = vpack.c.bf16 %v3187, %v3186
        %v3198 = vpack.c.bf16 %v3189, %v3188
        %v3199 = vpack.c.bf16 %v3191, %v3190
        %v3200 = vld [vmem:[%s5] sm:$0xf]
        %v3201 = vld [vmem:[%s5 + $0x4] sm:$0xf]
        %v3202 = vld [vmem:[%s5 + $0x8] sm:$0xf]
        %v3203 = vld [vmem:[%s5 + $0xc] sm:$0xf]
        %v3204 = vld [vmem:[%s5 + $0x10] sm:$0xf]
        %v3205 = vld [vmem:[%s5 + $0x14] sm:$0xf]
        %v3206 = vld [vmem:[%s5 + $0x18] sm:$0xf]
        %v3207 = vld [vmem:[%s5 + $0x1c] sm:$0xf]
        %v3208 = vld [vmem:[%s5 + $0x20] sm:$0xf]
        %v3209 = vld [vmem:[%s5 + $0x24] sm:$0xf]
        %v3210 = vld [vmem:[%s5 + $0x28] sm:$0xf]
        %v3211 = vld [vmem:[%s5 + $0x2c] sm:$0xf]
        %v3224 = vunpack.c.l.b16 %v3200
        %v3225 = vunpack.c.l.b16 %v3201
        %v3226 = vunpack.c.l.b16 %v3202
        %v3227 = vunpack.c.l.b16 %v3203
        %v3228 = vunpack.c.l.b16 %v3204
        %v3229 = vunpack.c.l.b16 %v3205
        %v3230 = vunpack.c.l.b16 %v3206
        %v3231 = vunpack.c.l.b16 %v3207
        %v3232 = vunpack.c.l.b16 %v3208
        %v3233 = vunpack.c.l.b16 %v3209
        %v3234 = vunpack.c.l.b16 %v3210
        %v3235 = vunpack.c.l.b16 %v3211
        %v3236 = vpack.c.b16 %v3225, %v3224
        %v3237 = vpack.c.b16 %v3227, %v3226
        %v3238 = vpack.c.b16 %v3229, %v3228
        %v3239 = vpack.c.b16 %v3231, %v3230
        %v3240 = vpack.c.b16 %v3233, %v3232
        %v3241 = vpack.c.b16 %v3235, %v3234
        %vm3248 = vcmask 785408
        %v3250 = vsel %vm3248, %v3192, 0
        %v3253 = vsel %vm3248, %v3193, 0
        %v3256 = vsel %vm3248, %v3194, 0
        %v3259 = vsel %vm3248, %v3195, 0
        %v3262 = vsel %vm3248, %v3196, 0
        %v3265 = vsel %vm3248, %v3197, 0
        %v3268 = vsel %vm3248, %v3198, 0
        %v3271 = vsel %vm3248, %v3199, 0
        %3273 = vmatprep.subr.bf16.mxu0 0
        %3274 = vmatpush1.bf16.msra.mxu0 0
        %3275 = vmatprep.subr.bf16.mxu0 0
        %3276 = vmatpush1.bf16.msra.mxu0 0
        %3277 = vmatprep.subr.bf16.mxu0 0
        %3278 = vmatpush1.bf16.msra.mxu0 %v3241
        %3279 = vmatprep.subr.bf16.mxu0 0
        %3280 = vmatpush1.bf16.msra.mxu0 %v3240
        %3281 = vmatprep.subr.bf16.mxu0 0
        %3282 = vmatpush1.bf16.msra.mxu0 %v3239
        %3283 = vmatprep.subr.bf16.mxu0 0
        %3284 = vmatpush1.bf16.msra.mxu0 %v3238
        %3285 = vmatprep.subr.bf16.mxu0 0
        %3286 = vmatpush1.bf16.msra.mxu0 %v3237
        %3287 = vmatprep.subr.bf16.mxu0 0
        %3288 = vmatpush1.bf16.msra.mxu0 %v3236
        %3289 = vmatprep.subr.bf16.mxu0 0
        %3290 = vmatpush2.bf16.msra.mxu0 0
        %3291 = vmatprep.subr.bf16.mxu0 0
        %3292 = vmatpush2.bf16.msra.mxu0 0
        %3293 = vmatprep.subr.bf16.mxu0 0
        %3294 = vmatpush2.bf16.msra.mxu0 0
        %3295 = vmatprep.subr.bf16.mxu0 0
        %3296 = vmatpush2.bf16.msra.mxu0 0
        %3297 = vmatprep.subr.bf16.mxu0 0
        %3298 = vmatpush2.bf16.msra.mxu0 0
        %3299 = vmatprep.subr.bf16.mxu0 0
        %3300 = vmatpush2.bf16.msra.mxu0 0
        %3301 = vmatprep.subr.bf16.mxu0 0
        %3302 = vmatpush2.bf16.msra.mxu0 0
        %3303 = vmatprep.subr.bf16.mxu0 0
        %3304 = vmatpush2.bf16.msra.mxu0 0
        %3305 = vmatprep.mubr.bf16.mxu0 0
        %3306 = vmatmul.mubr.bf16.gmra.mxu0 %v3250
        %v3307 = vpop.f32.mrf.mxu0
        %v3308 = vadd.f32 0.0, %v3307
        %v3309 = vpop.f32.mrf.mxu0
        %v3310 = vpop.f32.mrf.mxu0
        %v3311 = vadd.f32 0.0, %v3310
        %v3312 = vpop.f32.mrf.mxu0
        %3313 = vmatprep.mubr.bf16.mxu0 0
        %3314 = vmatmul.mubr.bf16.gmra.mxu0 %v3253
        %v3315 = vpop.f32.mrf.mxu0
        %v3316 = vadd.f32 0.0, %v3315
        %v3317 = vpop.f32.mrf.mxu0
        %v3318 = vpop.f32.mrf.mxu0
        %v3319 = vadd.f32 0.0, %v3318
        %v3320 = vpop.f32.mrf.mxu0
        %3321 = vmatprep.mubr.bf16.mxu0 0
        %3322 = vmatmul.mubr.bf16.gmra.mxu0 %v3256
        %v3323 = vpop.f32.mrf.mxu0
        %v3324 = vadd.f32 0.0, %v3323
        %v3325 = vpop.f32.mrf.mxu0
        %v3326 = vpop.f32.mrf.mxu0
        %v3327 = vadd.f32 0.0, %v3326
        %v3328 = vpop.f32.mrf.mxu0
        %3329 = vmatprep.mubr.bf16.mxu0 0
        %3330 = vmatmul.mubr.bf16.gmra.mxu0 %v3259
        %v3331 = vpop.f32.mrf.mxu0
        %v3332 = vadd.f32 0.0, %v3331
        %v3333 = vpop.f32.mrf.mxu0
        %v3334 = vpop.f32.mrf.mxu0
        %v3335 = vadd.f32 0.0, %v3334
        %v3336 = vpop.f32.mrf.mxu0
        %3337 = vmatprep.mubr.bf16.mxu0 0
        %3338 = vmatmul.mubr.bf16.gmra.mxu0 %v3262
        %v3339 = vpop.f32.mrf.mxu0
        %v3340 = vadd.f32 0.0, %v3339
        %v3341 = vpop.f32.mrf.mxu0
        %v3342 = vpop.f32.mrf.mxu0
        %v3343 = vadd.f32 0.0, %v3342
        %v3344 = vpop.f32.mrf.mxu0
        %3345 = vmatprep.mubr.bf16.mxu0 0
        %3346 = vmatmul.mubr.bf16.gmra.mxu0 %v3265
        %v3347 = vpop.f32.mrf.mxu0
        %v3348 = vadd.f32 0.0, %v3347
        %v3349 = vpop.f32.mrf.mxu0
        %v3350 = vpop.f32.mrf.mxu0
        %v3351 = vadd.f32 0.0, %v3350
        %v3352 = vpop.f32.mrf.mxu0
        %3353 = vmatprep.mubr.bf16.mxu0 0
        %3354 = vmatmul.mubr.bf16.gmra.mxu0 %v3268
        %v3355 = vpop.f32.mrf.mxu0
        %v3356 = vadd.f32 0.0, %v3355
        %v3357 = vpop.f32.mrf.mxu0
        %v3358 = vpop.f32.mrf.mxu0
        %v3359 = vadd.f32 0.0, %v3358
        %v3360 = vpop.f32.mrf.mxu0
        %3361 = vmatprep.mubr.bf16.mxu0 0
        %3362 = vmatmul.mubr.bf16.gmra.mxu0 %v3271
        %v3363 = vpop.f32.mrf.mxu0
        %v3364 = vadd.f32 0.0, %v3363
        %v3365 = vpop.f32.mrf.mxu0
        %v3366 = vpop.f32.mrf.mxu0
        %v3367 = vadd.f32 0.0, %v3366
        %v3368 = vpop.f32.mrf.mxu0
        %3369 = vdwg.mxu0
        %v3370 = vld [vmem:[%s8] sm:$0x1]
        %v3372 = vlaneseq
        %v3373 = vshrl.u32 %v3372, 7
        %v3374 = vsub.s32 0, %v3373
        %v3375 = vrot.slane %v3370, %v3374
        %v3377 = vmul.f32 %v3308, %v3375
        %v3378 = vmul.f32 %v3311, %v3375
        %v3379 = vmul.f32 %v3316, %v3375
        %v3380 = vmul.f32 %v3319, %v3375
        %v3381 = vmul.f32 %v3324, %v3375
        %v3382 = vmul.f32 %v3327, %v3375
        %v3383 = vmul.f32 %v3332, %v3375
        %v3384 = vmul.f32 %v3335, %v3375
        %v3385 = vmul.f32 %v3340, %v3375
        %v3386 = vmul.f32 %v3343, %v3375
        %v3387 = vmul.f32 %v3348, %v3375
        %v3388 = vmul.f32 %v3351, %v3375
        %v3389 = vmul.f32 %v3356, %v3375
        %v3390 = vmul.f32 %v3359, %v3375
        %v3391 = vmul.f32 %v3364, %v3375
        %v3392 = vmul.f32 %v3367, %v3375
        %v3393 = vld [vmem:[%s9] sm:$0x1]
        %v3395 = vlaneseq
        %v3396 = vshrl.u32 %v3395, 7
        %v3397 = vsub.s32 0, %v3396
        %v3398 = vrot.slane %v3393, %v3397
        %v3400 = vadd.f32 %v3377, %v3398
        %v3401 = vadd.f32 %v3378, %v3398
        %v3402 = vadd.f32 %v3379, %v3398
        %v3403 = vadd.f32 %v3380, %v3398
        %v3404 = vadd.f32 %v3381, %v3398
        %v3405 = vadd.f32 %v3382, %v3398
        %v3406 = vadd.f32 %v3383, %v3398
        %v3407 = vadd.f32 %v3384, %v3398
        %v3408 = vadd.f32 %v3385, %v3398
        %v3409 = vadd.f32 %v3386, %v3398
        %v3410 = vadd.f32 %v3387, %v3398
        %v3411 = vadd.f32 %v3388, %v3398
        %v3412 = vadd.f32 %v3389, %v3398
        %v3413 = vadd.f32 %v3390, %v3398
        %v3414 = vadd.f32 %v3391, %v3398
        %v3415 = vadd.f32 %v3392, %v3398
        %v3416 = vxor.u32 %v3400, 2147483648
        %v3417 = vxor.u32 %v3401, 2147483648
        %v3418 = vxor.u32 %v3402, 2147483648
        %v3419 = vxor.u32 %v3403, 2147483648
        %v3420 = vxor.u32 %v3404, 2147483648
        %v3421 = vxor.u32 %v3405, 2147483648
        %v3422 = vxor.u32 %v3406, 2147483648
        %v3423 = vxor.u32 %v3407, 2147483648
        %v3424 = vxor.u32 %v3408, 2147483648
        %v3425 = vxor.u32 %v3409, 2147483648
        %v3426 = vxor.u32 %v3410, 2147483648
        %v3427 = vxor.u32 %v3411, 2147483648
        %v3428 = vxor.u32 %v3412, 2147483648
        %v3429 = vxor.u32 %v3413, 2147483648
        %v3430 = vxor.u32 %v3414, 2147483648
        %v3431 = vxor.u32 %v3415, 2147483648
        %v3432 = vmul.f32 %v3416, 1.442695
        %v3433 = vpow.pop %v3432
        %v3434 = vmul.f32 %v3417, 1.442695
        %v3435 = vpow.pop %v3434
        %v3436 = vmul.f32 %v3418, 1.442695
        %v3437 = vpow.pop %v3436
        %v3438 = vmul.f32 %v3419, 1.442695
        %v3439 = vpow.pop %v3438
        %v3440 = vmul.f32 %v3420, 1.442695
        %v3441 = vpow.pop %v3440
        %v3442 = vmul.f32 %v3421, 1.442695
        %v3443 = vpow.pop %v3442
        %v3444 = vmul.f32 %v3422, 1.442695
        %v3445 = vpow.pop %v3444
        %v3446 = vmul.f32 %v3423, 1.442695
        %v3447 = vpow.pop %v3446
        %v3448 = vmul.f32 %v3424, 1.442695
        %v3449 = vpow.pop %v3448
        %v3450 = vmul.f32 %v3425, 1.442695
        %v3451 = vpow.pop %v3450
        %v3452 = vmul.f32 %v3426, 1.442695
        %v3453 = vpow.pop %v3452
        %v3454 = vmul.f32 %v3427, 1.442695
        %v3455 = vpow.pop %v3454
        %v3456 = vmul.f32 %v3428, 1.442695
        %v3457 = vpow.pop %v3456
        %v3458 = vmul.f32 %v3429, 1.442695
        %v3459 = vpow.pop %v3458
        %v3460 = vmul.f32 %v3430, 1.442695
        %v3461 = vpow.pop %v3460
        %v3462 = vmul.f32 %v3431, 1.442695
        %v3463 = vpow.pop %v3462
        %v3464 = vadd.f32 %v3433, 1.0
        %v3465 = vadd.f32 %v3435, 1.0
        %v3466 = vadd.f32 %v3437, 1.0
        %v3467 = vadd.f32 %v3439, 1.0
        %v3468 = vadd.f32 %v3441, 1.0
        %v3469 = vadd.f32 %v3443, 1.0
        %v3470 = vadd.f32 %v3445, 1.0
        %v3471 = vadd.f32 %v3447, 1.0
        %v3472 = vadd.f32 %v3449, 1.0
        %v3473 = vadd.f32 %v3451, 1.0
        %v3474 = vadd.f32 %v3453, 1.0
        %v3475 = vadd.f32 %v3455, 1.0
        %v3476 = vadd.f32 %v3457, 1.0
        %v3477 = vadd.f32 %v3459, 1.0
        %v3478 = vadd.f32 %v3461, 1.0
        %v3479 = vadd.f32 %v3463, 1.0
        %v3480 = vrcp.pop %v3464
        %v3481 = vmul.f32 1.0, %v3480
        %v3482 = vrcp.pop %v3465
        %v3483 = vmul.f32 1.0, %v3482
        %v3484 = vrcp.pop %v3466
        %v3485 = vmul.f32 1.0, %v3484
        %v3486 = vrcp.pop %v3467
        %v3487 = vmul.f32 1.0, %v3486
        %v3488 = vrcp.pop %v3468
        %v3489 = vmul.f32 1.0, %v3488
        %v3490 = vrcp.pop %v3469
        %v3491 = vmul.f32 1.0, %v3490
        %v3492 = vrcp.pop %v3470
        %v3493 = vmul.f32 1.0, %v3492
        %v3494 = vrcp.pop %v3471
        %v3495 = vmul.f32 1.0, %v3494
        %v3496 = vrcp.pop %v3472
        %v3497 = vmul.f32 1.0, %v3496
        %v3498 = vrcp.pop %v3473
        %v3499 = vmul.f32 1.0, %v3498
        %v3500 = vrcp.pop %v3474
        %v3501 = vmul.f32 1.0, %v3500
        %v3502 = vrcp.pop %v3475
        %v3503 = vmul.f32 1.0, %v3502
        %v3504 = vrcp.pop %v3476
        %v3505 = vmul.f32 1.0, %v3504
        %v3506 = vrcp.pop %v3477
        %v3507 = vmul.f32 1.0, %v3506
        %v3508 = vrcp.pop %v3478
        %v3509 = vmul.f32 1.0, %v3508
        %v3510 = vrcp.pop %v3479
        %v3511 = vmul.f32 1.0, %v3510
        %3528 = vrot.lane.b32.xlu0 %v2920, 96
        %v3529 = vpop.permute.xlu0 %3528
        %3530 = vrot.lane.b32.xlu0 %v2921, 96
        %v3531 = vpop.permute.xlu0 %3530
        %3532 = vrot.lane.b32.xlu0 %v2922, 96
        %v3533 = vpop.permute.xlu0 %3532
        %3534 = vrot.lane.b32.xlu0 %v2923, 96
        %v3535 = vpop.permute.xlu0 %3534
        %3536 = vrot.lane.b32.xlu0 %v2924, 96
        %v3537 = vpop.permute.xlu0 %3536
        %3538 = vrot.lane.b32.xlu0 %v2925, 96
        %v3539 = vpop.permute.xlu0 %3538
        %3540 = vrot.lane.b32.xlu0 %v2926, 96
        %v3541 = vpop.permute.xlu0 %3540
        %3542 = vrot.lane.b32.xlu0 %v2927, 96
        %v3543 = vpop.permute.xlu0 %3542
        %3544 = vrot.lane.b32.xlu0 %v2928, 96
        %v3545 = vpop.permute.xlu0 %3544
        %3546 = vrot.lane.b32.xlu0 %v2929, 96
        %v3547 = vpop.permute.xlu0 %3546
        %3548 = vrot.lane.b32.xlu0 %v2930, 96
        %v3549 = vpop.permute.xlu0 %3548
        %3550 = vrot.lane.b32.xlu0 %v2931, 96
        %v3551 = vpop.permute.xlu0 %3550
        %3552 = vrot.lane.b32.xlu0 %v2932, 96
        %v3553 = vpop.permute.xlu0 %3552
        %3554 = vrot.lane.b32.xlu0 %v2933, 96
        %v3555 = vpop.permute.xlu0 %3554
        %3556 = vrot.lane.b32.xlu0 %v2934, 96
        %v3557 = vpop.permute.xlu0 %3556
        %3558 = vrot.lane.b32.xlu0 %v2935, 96
        %v3559 = vpop.permute.xlu0 %3558
        %v3576 = vmul.f32 %v3481, %v3529
        %v3577 = vmul.f32 %v3483, %v3531
        %v3578 = vmul.f32 %v3485, %v3533
        %v3579 = vmul.f32 %v3487, %v3535
        %v3580 = vmul.f32 %v3489, %v3537
        %v3581 = vmul.f32 %v3491, %v3539
        %v3582 = vmul.f32 %v3493, %v3541
        %v3583 = vmul.f32 %v3495, %v3543
        %v3584 = vmul.f32 %v3497, %v3545
        %v3585 = vmul.f32 %v3499, %v3547
        %v3586 = vmul.f32 %v3501, %v3549
        %v3587 = vmul.f32 %v3503, %v3551
        %v3588 = vmul.f32 %v3505, %v3553
        %v3589 = vmul.f32 %v3507, %v3555
        %v3590 = vmul.f32 %v3509, %v3557
        %v3591 = vmul.f32 %v3511, %v3559
        %v3592 = vadd.f32 %v2920, %v3576
        %v3593 = vadd.f32 %v2921, %v3577
        %v3594 = vadd.f32 %v2922, %v3578
        %v3595 = vadd.f32 %v2923, %v3579
        %v3596 = vadd.f32 %v2924, %v3580
        %v3597 = vadd.f32 %v2925, %v3581
        %v3598 = vadd.f32 %v2926, %v3582
        %v3599 = vadd.f32 %v2927, %v3583
        %v3600 = vadd.f32 %v2928, %v3584
        %v3601 = vadd.f32 %v2929, %v3585
        %v3602 = vadd.f32 %v2930, %v3586
        %v3603 = vadd.f32 %v2931, %v3587
        %v3604 = vadd.f32 %v2932, %v3588
        %v3605 = vadd.f32 %v2933, %v3589
        %v3606 = vadd.f32 %v2934, %v3590
        %v3607 = vadd.f32 %v2935, %v3591
        %3624 = vrot.lane.b32.xlu0 %v3576, 96
        %v3625 = vpop.permute.xlu0 %3624
        %3626 = vrot.lane.b32.xlu0 %v3577, 96
        %v3627 = vpop.permute.xlu0 %3626
        %3628 = vrot.lane.b32.xlu0 %v3578, 96
        %v3629 = vpop.permute.xlu0 %3628
        %3630 = vrot.lane.b32.xlu0 %v3579, 96
        %v3631 = vpop.permute.xlu0 %3630
        %3632 = vrot.lane.b32.xlu0 %v3580, 96
        %v3633 = vpop.permute.xlu0 %3632
        %3634 = vrot.lane.b32.xlu0 %v3581, 96
        %v3635 = vpop.permute.xlu0 %3634
        %3636 = vrot.lane.b32.xlu0 %v3582, 96
        %v3637 = vpop.permute.xlu0 %3636
        %3638 = vrot.lane.b32.xlu0 %v3583, 96
        %v3639 = vpop.permute.xlu0 %3638
        %3640 = vrot.lane.b32.xlu0 %v3584, 96
        %v3641 = vpop.permute.xlu0 %3640
        %3642 = vrot.lane.b32.xlu0 %v3585, 96
        %v3643 = vpop.permute.xlu0 %3642
        %3644 = vrot.lane.b32.xlu0 %v3586, 96
        %v3645 = vpop.permute.xlu0 %3644
        %3646 = vrot.lane.b32.xlu0 %v3587, 96
        %v3647 = vpop.permute.xlu0 %3646
        %3648 = vrot.lane.b32.xlu0 %v3588, 96
        %v3649 = vpop.permute.xlu0 %3648
        %3650 = vrot.lane.b32.xlu0 %v3589, 96
        %v3651 = vpop.permute.xlu0 %3650
        %3652 = vrot.lane.b32.xlu0 %v3590, 96
        %v3653 = vpop.permute.xlu0 %3652
        %3654 = vrot.lane.b32.xlu0 %v3591, 96
        %v3655 = vpop.permute.xlu0 %3654
        %v3672 = vadd.f32 %v3592, %v3625
        %v3673 = vadd.f32 %v3593, %v3627
        %v3674 = vadd.f32 %v3594, %v3629
        %v3675 = vadd.f32 %v3595, %v3631
        %v3676 = vadd.f32 %v3596, %v3633
        %v3677 = vadd.f32 %v3597, %v3635
        %v3678 = vadd.f32 %v3598, %v3637
        %v3679 = vadd.f32 %v3599, %v3639
        %v3680 = vadd.f32 %v3600, %v3641
        %v3681 = vadd.f32 %v3601, %v3643
        %v3682 = vadd.f32 %v3602, %v3645
        %v3683 = vadd.f32 %v3603, %v3647
        %v3684 = vadd.f32 %v3604, %v3649
        %v3685 = vadd.f32 %v3605, %v3651
        %v3686 = vadd.f32 %v3606, %v3653
        %v3687 = vadd.f32 %v3607, %v3655
        %3688 = vrot.lane.b32.xlu0 %v3576, 64
        %v3689 = vpop.permute.xlu0 %3688
        %3690 = vrot.lane.b32.xlu0 %v3577, 64
        %v3691 = vpop.permute.xlu0 %3690
        %3692 = vrot.lane.b32.xlu0 %v3578, 64
        %v3693 = vpop.permute.xlu0 %3692
        %3694 = vrot.lane.b32.xlu0 %v3579, 64
        %v3695 = vpop.permute.xlu0 %3694
        %3696 = vrot.lane.b32.xlu0 %v3580, 64
        %v3697 = vpop.permute.xlu0 %3696
        %3698 = vrot.lane.b32.xlu0 %v3581, 64
        %v3699 = vpop.permute.xlu0 %3698
        %3700 = vrot.lane.b32.xlu0 %v3582, 64
        %v3701 = vpop.permute.xlu0 %3700
        %3702 = vrot.lane.b32.xlu0 %v3583, 64
        %v3703 = vpop.permute.xlu0 %3702
        %3704 = vrot.lane.b32.xlu0 %v3584, 64
        %v3705 = vpop.permute.xlu0 %3704
        %3706 = vrot.lane.b32.xlu0 %v3585, 64
        %v3707 = vpop.permute.xlu0 %3706
        %3708 = vrot.lane.b32.xlu0 %v3586, 64
        %v3709 = vpop.permute.xlu0 %3708
        %3710 = vrot.lane.b32.xlu0 %v3587, 64
        %v3711 = vpop.permute.xlu0 %3710
        %3712 = vrot.lane.b32.xlu0 %v3588, 64
        %v3713 = vpop.permute.xlu0 %3712
        %3714 = vrot.lane.b32.xlu0 %v3589, 64
        %v3715 = vpop.permute.xlu0 %3714
        %3716 = vrot.lane.b32.xlu0 %v3590, 64
        %v3717 = vpop.permute.xlu0 %3716
        %3718 = vrot.lane.b32.xlu0 %v3591, 64
        %v3719 = vpop.permute.xlu0 %3718
        %v3736 = vadd.f32 %v3672, %v3689
        %v3737 = vadd.f32 %v3673, %v3691
        %v3738 = vadd.f32 %v3674, %v3693
        %v3739 = vadd.f32 %v3675, %v3695
        %v3740 = vadd.f32 %v3676, %v3697
        %v3741 = vadd.f32 %v3677, %v3699
        %v3742 = vadd.f32 %v3678, %v3701
        %v3743 = vadd.f32 %v3679, %v3703
        %v3744 = vadd.f32 %v3680, %v3705
        %v3745 = vadd.f32 %v3681, %v3707
        %v3746 = vadd.f32 %v3682, %v3709
        %v3747 = vadd.f32 %v3683, %v3711
        %v3748 = vadd.f32 %v3684, %v3713
        %v3749 = vadd.f32 %v3685, %v3715
        %v3750 = vadd.f32 %v3686, %v3717
        %v3751 = vadd.f32 %v3687, %v3719
        %3752 = vst.msk [vmem:[%s394] sm:$0xff] %vm3008, %v3736
        %3753 = vst.msk [vmem:[%s394 + $0x8] sm:$0xff] %vm3008, %v3737
        %3754 = vst.msk [vmem:[%s394 + $0x10] sm:$0xff] %vm3008, %v3738
        %3755 = vst.msk [vmem:[%s394 + $0x18] sm:$0xff] %vm3008, %v3739
        %3756 = vst.msk [vmem:[%s394 + $0x20] sm:$0xff] %vm3008, %v3740
        %3757 = vst.msk [vmem:[%s394 + $0x28] sm:$0xff] %vm3008, %v3741
        %3758 = vst.msk [vmem:[%s394 + $0x30] sm:$0xff] %vm3008, %v3742
        %3759 = vst.msk [vmem:[%s394 + $0x38] sm:$0xff] %vm3008, %v3743
        %3760 = vst.msk [vmem:[%s394 + $0x40] sm:$0xff] %vm3008, %v3744
        %3761 = vst.msk [vmem:[%s394 + $0x48] sm:$0xff] %vm3008, %v3745
        %3762 = vst.msk [vmem:[%s394 + $0x50] sm:$0xff] %vm3008, %v3746
        %3763 = vst.msk [vmem:[%s394 + $0x58] sm:$0xff] %vm3008, %v3747
        %3764 = vst.msk [vmem:[%s394 + $0x60] sm:$0xff] %vm3008, %v3748
        %3765 = vst.msk [vmem:[%s394 + $0x68] sm:$0xff] %vm3008, %v3749
        %3766 = vst.msk [vmem:[%s394 + $0x70] sm:$0xff] %vm3008, %v3750
        %3767 = vst.msk [vmem:[%s394 + $0x78] sm:$0xff] %vm3008, %v3751
        %s3768 = sand.u32 %s268, 1
        %s3769 = scalar_lea.sflag [#allocation3], %s3768
        %s3770 = sand.u32 %s268, 1
        %s3771 = smul.addr %s3770, 128
        %s3772 = scalar_lea.vmem [#allocation2], %s3771
        // Predicated region
        $region61: #{tpu_custom_call.1} parent=59 // pred_check
          %p3773 = pneg %p278
        $region62: #{tpu_custom_call.1} parent=59 // pred_check_branch
          %3775 = sbr.rel (%p3773) target = $region64
        $region63: #{tpu_custom_call.1} parent=59 // pred_region
          %s3776 = smul.u32 8, %s29
          %s3778 = ssub.s32 2048, 2048
          %3779 = vsyncadd %s3769, %s3778
          %s3780 = smul.addr %s3776, 2
          %s3781 = smul.addr %s28, 32
          %s3782 = sadd.s32 %s3780, %s3781
          %s3783 = smul.addr %s3782, 128
          %s3784 = scalar_lea.hbm %s10, %s3783
          %s3785 = sshll.u32 %s3772, 4
          %s3786 = int_to_ptr.vmem [resolvable:$true] %s3785
          %3791 = dma.vmem_to_hbm [thread:$0]  %s3786, 2048, %s3784, %s3769, 128, 128, 8
        $region64: #{tpu_custom_call.1} parent=59 // pred_fallthru
          _
      $region60: #{tpu_custom_call.1} parent=5 // pred_fallthru
        _
      %p3792 = scmp.le.s32.totalorder 2, %s19
      // Predicated region
      $region65: #{tpu_custom_call.1} parent=5 // pred_check
        %p3793 = pneg %p3792
      $region66: #{tpu_custom_call.1} parent=5 // pred_check_branch
        %3795 = sbr.rel (%p3793) target = $region68
      $region67: #{tpu_custom_call.1} parent=5 // pred_region
        %s3796 = ssub.s32 %s19, 2
        // Predicated region
        $region69: #{tpu_custom_call.1} parent=67 // pred_check
          %p3797 = pneg %p284
        $region70: #{tpu_custom_call.1} parent=67 // pred_check_branch
          %3799 = sbr.rel (%p3797) target = $region72
        $region71: #{tpu_custom_call.1} parent=67 // pred_region
          %s3800 = sand.u32 %s269, 1
          %s3801 = scalar_lea.sflag [#allocation3], %s3800
          %s3802 = sand.u32 %s269, 1
          %s3803 = smul.addr %s3802, 128
          %s3804 = scalar_lea.vmem [#allocation2], %s3803
          %3805 = dma.done %s3801, 2048
        $region72: #{tpu_custom_call.1} parent=67 // pred_fallthru
          _
      $region68: #{tpu_custom_call.1} parent=5 // pred_fallthru
        _
    $region6: #{tpu_custom_call.1} parent=1 // loop_footer
      %s23 = sadd.s32 1, %s19
    $region7: #{tpu_custom_call.1} parent=1 // loop_footer_branch
      %18 = sbr.rel target = $region3
    $region8: #{tpu_custom_call.1} parent=1 // loop_exit
      _
    %3806 = vsyncpa [#allocation3], 1
    %s3807 = scalar_lea.sflag [#allocation3], 1
    %3808 = vsyncpa %s3807, 1

</llo_original>
